<compile_context>
chip_gen: v5e
topology: v5e:2x2
jax: 0.10.0
libtpu: 0.0.40
codegen_flags: <defaults>
</compile_context>

<pallas_src>
import numpy as np

import jax
import jax.numpy as jnp
from jax.experimental import pallas as pl
from jax.experimental.pallas import tpu as pltpu


_VMEM = pl.BlockSpec(memory_space=pltpu.MemorySpace.VMEM)


def _dot(a, b):
    return jnp.dot(a, b, preferred_element_type=jnp.float32)


# ----------------------------------------------------------------------------
# Fused kernel: whole CNN_aux forward for a (2N)-image batch in one invocation.
# Activation layouts (rows, lanes):
#   x  : (B*14, 14)            image rows               (B = 2N, branch-major)
#   c1 : (B*12, 12*32 = 384)   conv1, col = j*32 + ch
#   h1 : (B*6,   6*32 = 192)   pool1+relu
#   c2 : (B*4,   4*64 = 256)   conv2, col = j*64 + ch
#   h2 : (B*2,   2*64 = 128)   pool2+relu
#   fc activations: (B, 128/256) zero-padded to 128 lanes.
# ----------------------------------------------------------------------------
def _cnn_aux_fused_kernel(
    x_ref,                      # (B*14, 14)
    r1_ref, a1_ref, b1_ref,     # (3,B*12,B*14), (3,14,384), (1,384)
    s1_ref, t1_ref,             # (2,B*6,B*12), (2,384,192)
    r2_ref, a2_ref, b2_ref,     # (3,B*4,B*6), (3,192,256), (1,256)
    s2_ref, t2_ref,             # (2,B*2,B*4), (2,256,128)
    s3_ref,                     # (2,B,B*2)
    fc1w_ref, fc1b_ref,         # (256,128), (1,128)
    fc2w_ref, fc2b_ref,         # (128,128), (1,128)
    fc3w_ref, fc3b_ref,         # (128,128), (1,128)
    lin4w_ref, lin4b_ref,       # (256,128), (1,128)
    lin5w_ref, lin5b_ref,       # (128,128), (1,128)
    y_ref,                      # out (B,128): fc3 logits in cols 0..9
    y2_ref,                     # out (N,128): lin5 logits in cols 0..1
):
    x = x_ref[...]

    # conv1 (3x3 valid, 1->32 ch) as structured matmuls.
    c1 = b1_ref[...]
    for kh in range(3):
        rows = _dot(r1_ref[kh], x)                 # (B*12, 14): rows i+kh per image
        c1 = c1 + _dot(rows, a1_ref[kh])           # (B*12, 384)

    # 2x2 max-pool + ReLU (even/odd row pairs, then even/odd column blocks).
    v1 = jnp.maximum(_dot(s1_ref[0], c1), _dot(s1_ref[1], c1))   # (B*6, 384)
    h1 = jnp.maximum(_dot(v1, t1_ref[0]), _dot(v1, t1_ref[1]))   # (B*6, 192)
    h1 = jnp.maximum(h1, 0.0)
    # TODO(synk): F.dropout2d(0.3) is identity at inference; omitted.

    # conv2 (3x3 valid, 32->64 ch).
    c2 = b2_ref[...]
    for kh in range(3):
        rows = _dot(r2_ref[kh], h1)                # (B*4, 192)
        c2 = c2 + _dot(rows, a2_ref[kh])           # (B*4, 256)

    v2 = jnp.maximum(_dot(s2_ref[0], c2), _dot(s2_ref[1], c2))   # (B*2, 256)
    h2 = jnp.maximum(_dot(v2, t2_ref[0]), _dot(v2, t2_ref[1]))   # (B*2, 128)
    h2 = jnp.maximum(h2, 0.0)
    # TODO(synk): F.dropout2d(0.3) is identity at inference; omitted.

    # Flatten each image's 2 spatial rows into 256 lanes; the NCHW ordering of
    # torch's .view(-1, 256) is folded into fc1's weight row permutation.
    flat = jnp.concatenate([_dot(s3_ref[0], h2), _dot(s3_ref[1], h2)],
                           axis=-1)                # (B, 256)

    h3 = jnp.maximum(_dot(flat, fc1w_ref[...]) + fc1b_ref[...], 0.0)   # (B,128)
    # TODO(synk): F.dropout(0.3) is identity at inference; omitted.
    h4 = jnp.maximum(_dot(h3, fc2w_ref[...]) + fc2b_ref[...], 0.0)     # (B,128)
    # TODO(synk): F.dropout(0.3) is identity at inference; omitted.
    y_ref[...] = _dot(h4, fc3w_ref[...]) + fc3b_ref[...]               # (B,128)

    # Aux head: concatenate branch-0 / branch-1 fc2 features of each sample.
    n = y2_ref.shape[0]
    zcat = jnp.concatenate([h4[:n, :], h4[n:, :]], axis=-1)            # (N,256)
    y1 = jnp.maximum(_dot(zcat, lin4w_ref[...]) + lin4b_ref[...], 0.0)
    y2_ref[...] = _dot(y1, lin5w_ref[...]) + lin5b_ref[...]


# ----------------------------------------------------------------------------
# Wrapper
# ----------------------------------------------------------------------------
def cnn_aux_forward(x, kp):
    """x: (N, 2, 14, 14) float32. Returns [y2 (N,2), y0 (N,10), y1 (N,10)]."""
    n = x.shape[0]
    b = 2 * n
    # Stack the two channel branches on the batch axis (branch-major), each
    # image laid out as 14 rows x 14 cols.
    x_rows = jnp.concatenate([x[:, 0], x[:, 1]], axis=0).reshape(b * 14, 14)

    out_y, out_y2 = pl.pallas_call(
        _cnn_aux_fused_kernel,
        out_shape=(jax.ShapeDtypeStruct((b, 128), jnp.float32),
                   jax.ShapeDtypeStruct((n, 128), jnp.float32)),
        in_specs=[_VMEM] * 22,
        out_specs=(_VMEM, _VMEM),
    )(x_rows,
      kp["r1"], kp["a1"], kp["b1row"],
      kp["s1"], kp["t1"],
      kp["r2"], kp["a2"], kp["b2row"],
      kp["s2"], kp["t2"], kp["s3"],
      kp["fc1w"], kp["fc1b"], kp["fc2w"], kp["fc2b"], kp["fc3w"], kp["fc3b"],
      kp["lin4w"], kp["lin4b"], kp["lin5w"], kp["lin5b"])

    return [out_y2[:, :2], out_y[:n, :10], out_y[n:, :10]]


# ----------------------------------------------------------------------------
# Parameters (deterministic, synthetic) in the PyTorch layout.
# ----------------------------------------------------------------------------
def init_torch_params(key):
    def dense(k, fan_in, shape):
        return (jax.random.normal(k, shape, dtype=jnp.float32)
                / jnp.sqrt(jnp.float32(fan_in)))

    ks = jax.random.split(key, 14)
    return {
        "w1": dense(ks[0], 9, (32, 1, 3, 3)),       "b1": dense(ks[1], 9, (32,)),
        "w2": dense(ks[2], 288, (64, 32, 3, 3)),    "b2": dense(ks[3], 288, (64,)),
        "fc1w": dense(ks[4], 256, (120, 256)),      "fc1b": dense(ks[5], 256, (120,)),
        "fc2w": dense(ks[6], 120, (84, 120)),       "fc2b": dense(ks[7], 120, (84,)),
        "fc3w": dense(ks[8], 84, (10, 84)),         "fc3b": dense(ks[9], 84, (10,)),
        "lin4w": dense(ks[10], 168, (20, 168)),     "lin4b": dense(ks[11], 168, (20,)),
        "lin5w": dense(ks[12], 20, (2, 20)),        "lin5b": dense(ks[13], 20, (2,)),
    }


# ----------------------------------------------------------------------------
# One-time packing of torch-layout params into the fused kernel operand layout.
# ----------------------------------------------------------------------------
def _row_select(n_out, n_in, batch, offset, stride):
    s = np.zeros((batch * n_out, batch * n_in), np.float32)
    for b in range(batch):
        for r in range(n_out):
            s[b * n_out + r, b * n_in + stride * r + offset] = 1.0
    return s


def _col_pair_select(n_groups, group, parity):
    t = np.zeros((2 * n_groups * group, n_groups * group), np.float32)
    for g in range(n_groups):
        t[(2 * g + parity) * group:(2 * g + parity + 1) * group,
          g * group:(g + 1) * group] = np.eye(group, dtype=np.float32)
    return t


def _pad2(m, rows, cols):
    out = np.zeros((rows, cols), np.float32)
    out[:m.shape[0], :m.shape[1]] = m
    return out


def pack_params(tp, n_batch):
    b = 2 * n_batch
    w1 = np.asarray(tp["w1"])
    w2 = np.asarray(tp["w2"])

    # conv1 structured weights: A1[kh][m, j*32 + co] = w1[co, 0, kh, m - j]
    a1 = np.zeros((3, 14, 12 * 32), np.float32)
    for kh in range(3):
        for kw in range(3):
            for j in range(12):
                a1[kh, j + kw, j * 32:(j + 1) * 32] = w1[:, 0, kh, kw]

    # conv2 structured weights: A2[kh][jin*32 + ci, jo*64 + co] = w2[co, ci, kh, jin - jo]
    a2 = np.zeros((3, 6 * 32, 4 * 64), np.float32)
    for kh in range(3):
        for kw in range(3):
            for jo in range(4):
                jin = jo + kw
                a2[kh, jin * 32:(jin + 1) * 32,
                   jo * 64:(jo + 1) * 64] = w2[:, :, kh, kw].T

    # fc1: fold torch's NCHW flatten order (f = c*4 + i*2 + j) into a row
    # permutation of fc1.weight^T so the kernel's flatten order
    # (g = i*128 + j*64 + c) is consumed directly.
    fc1_t = np.asarray(tp["fc1w"]).T                       # (256, 120)
    perm = np.empty(256, np.int64)
    for g in range(256):
        i3, j3, c = g // 128, (g % 128) // 64, g % 64
        perm[g] = c * 4 + i3 * 2 + j3
    fc1_perm = fc1_t[perm, :]

    # lin4 consumes [branch0 (84) | pad | branch1 (84) | pad] = 256 lanes.
    lin4_t = np.asarray(tp["lin4w"]).T                     # (168, 20)
    lin4_p = np.zeros((256, 128), np.float32)
    lin4_p[0:84, 0:20] = lin4_t[0:84]
    lin4_p[128:212, 0:20] = lin4_t[84:168]

    kp = {
        "r1": np.stack([_row_select(12, 14, b, kh, 1) for kh in range(3)]),
        "a1": a1,
        "b1row": np.tile(np.asarray(tp["b1"]), 12).reshape(1, 384),
        "s1": np.stack([_row_select(6, 12, b, p, 2) for p in range(2)]),
        "t1": np.stack([_col_pair_select(6, 32, p) for p in range(2)]),
        "r2": np.stack([_row_select(4, 6, b, kh, 1) for kh in range(3)]),
        "a2": a2,
        "b2row": np.tile(np.asarray(tp["b2"]), 4).reshape(1, 256),
        "s2": np.stack([_row_select(2, 4, b, p, 2) for p in range(2)]),
        "t2": np.stack([_col_pair_select(2, 64, p) for p in range(2)]),
        "s3": np.stack([_row_select(1, 2, b, p, 1) for p in range(2)]),
        "fc1w": _pad2(fc1_perm, 256, 128),
        "fc1b": _pad2(np.asarray(tp["fc1b"]).reshape(1, -1), 1, 128),
        "fc2w": _pad2(np.asarray(tp["fc2w"]).T, 128, 128),
        "fc2b": _pad2(np.asarray(tp["fc2b"]).reshape(1, -1), 1, 128),
        "fc3w": _pad2(np.asarray(tp["fc3w"]).T, 128, 128),
        "fc3b": _pad2(np.asarray(tp["fc3b"]).reshape(1, -1), 1, 128),
        "lin4w": lin4_p,
        "lin4b": _pad2(np.asarray(tp["lin4b"]).reshape(1, -1), 1, 128),
        "lin5w": _pad2(np.asarray(tp["lin5w"]).T, 128, 128),
        "lin5b": _pad2(np.asarray(tp["lin5b"]).reshape(1, -1), 1, 128),
    }
    return {k: jnp.asarray(v) for k, v in kp.items()}


# ----------------------------------------------------------------------------
# Plain-JAX reference of the PyTorch graph (inference mode) for verification.
# ----------------------------------------------------------------------------
def reference_forward(x, tp):
    n = x.shape[0]
    hp = jax.lax.Precision.HIGHEST

    def conv3x3(t, w, bias):
        out = jax.lax.conv_general_dilated(
            t, w, window_strides=(1, 1), padding="VALID",
            dimension_numbers=("NCHW", "OIHW", "NCHW"), precision=hp)
        return out + bias[None, :, None, None]

    def pool2(t):
        nn_, c, h, w = t.shape
        return t.reshape(nn_, c, h // 2, 2, w // 2, 2).max(axis=(3, 5))

    ys, zs = [], []
    for i in range(2):
        xi = x[:, i:i + 1, :, :]
        h1 = jax.nn.relu(pool2(conv3x3(xi, tp["w1"], tp["b1"])))
        h2 = jax.nn.relu(pool2(conv3x3(h1, tp["w2"], tp["b2"])))
        h3 = jax.nn.relu(jnp.dot(h2.reshape(n, 256), tp["fc1w"].T,
                                 precision=hp) + tp["fc1b"])
        h4 = jax.nn.relu(jnp.dot(h3, tp["fc2w"].T, precision=hp) + tp["fc2b"])
        zs.append(h4)
        ys.append(jnp.dot(h4, tp["fc3w"].T, precision=hp) + tp["fc3b"])
    zcat = jnp.concatenate(zs, axis=1)
    y1 = jax.nn.relu(jnp.dot(zcat, tp["lin4w"].T, precision=hp) + tp["lin4b"])
    y2 = jnp.dot(y1, tp["lin5w"].T, precision=hp) + tp["lin5b"]
    return [y2, ys[0], ys[1]]


# ----------------------------------------------------------------------------
if __name__ == "__main__":
    key = jax.random.PRNGKey(0)
    k_x, k_p = jax.random.split(key)
    n_batch = 2
    x = jax.random.normal(k_x, (n_batch, 2, 14, 14), dtype=jnp.float32)

    tp = init_torch_params(k_p)
    kp = pack_params(tp, n_batch)

    fwd = jax.jit(cnn_aux_forward)
    outs = jax.block_until_ready(fwd(x, kp))

    assert outs[0].shape == (n_batch, 2)
    assert outs[1].shape == (n_batch, 10)
    assert outs[2].shape == (n_batch, 10)

    # Numerical check against the plain-JAX reference (tolerance is generous to
    # accommodate possible MXU low-precision pass rounding; structural bugs
    # would produce O(0.1..1) errors).
    refs = reference_forward(x, tp)
    for got, want in zip(outs, refs):
        err = float(jnp.max(jnp.abs(got - want)))
        assert err < 2e-2, f"kernel/reference mismatch: max abs err {err}"

    print("KERNEL_OK")
</pallas_src>

<mosaic_0001>
module attributes {stable_mosaic.version = 11 : i64} {
  func.func @_cnn_aux_fused_kernel(%arg0: memref<56x14xf32, #tpu.memory_space<vmem>>, %arg1: memref<3x48x56xf32, #tpu.memory_space<vmem>>, %arg2: memref<3x14x384xf32, #tpu.memory_space<vmem>>, %arg3: memref<1x384xf32, #tpu.memory_space<vmem>>, %arg4: memref<2x24x48xf32, #tpu.memory_space<vmem>>, %arg5: memref<2x384x192xf32, #tpu.memory_space<vmem>>, %arg6: memref<3x16x24xf32, #tpu.memory_space<vmem>>, %arg7: memref<3x192x256xf32, #tpu.memory_space<vmem>>, %arg8: memref<1x256xf32, #tpu.memory_space<vmem>>, %arg9: memref<2x8x16xf32, #tpu.memory_space<vmem>>, %arg10: memref<2x256x128xf32, #tpu.memory_space<vmem>>, %arg11: memref<2x4x8xf32, #tpu.memory_space<vmem>>, %arg12: memref<256x128xf32, #tpu.memory_space<vmem>>, %arg13: memref<1x128xf32, #tpu.memory_space<vmem>>, %arg14: memref<128x128xf32, #tpu.memory_space<vmem>>, %arg15: memref<1x128xf32, #tpu.memory_space<vmem>>, %arg16: memref<128x128xf32, #tpu.memory_space<vmem>>, %arg17: memref<1x128xf32, #tpu.memory_space<vmem>>, %arg18: memref<256x128xf32, #tpu.memory_space<vmem>>, %arg19: memref<1x128xf32, #tpu.memory_space<vmem>>, %arg20: memref<128x128xf32, #tpu.memory_space<vmem>>, %arg21: memref<1x128xf32, #tpu.memory_space<vmem>>, %arg22: memref<4x128xf32, #tpu.memory_space<vmem>>, %arg23: memref<2x128xf32, #tpu.memory_space<vmem>>) attributes {dimension_semantics = [], scalar_prefetch = 0 : i64, scratch_operands = 0 : i64, tpu.core_type = #tpu.core_type<tc>} {
    %c0 = arith.constant 0 : index
    %c0_0 = arith.constant 0 : index
    %0 = vector.load %arg0[%c0, %c0_0] : memref<56x14xf32, #tpu.memory_space<vmem>>, vector<56x14xf32>
    %c0_1 = arith.constant 0 : index
    %c0_2 = arith.constant 0 : index
    %1 = vector.load %arg3[%c0_1, %c0_2] : memref<1x384xf32, #tpu.memory_space<vmem>>, vector<1x384xf32>
    %c0_3 = arith.constant 0 : index
    %c0_4 = arith.constant 0 : index
    %c0_5 = arith.constant 0 : index
    %2 = vector.load %arg1[%c0_3, %c0_4, %c0_5] : memref<3x48x56xf32, #tpu.memory_space<vmem>>, vector<1x48x56xf32>
    %3 = vector.shape_cast %2 : vector<1x48x56xf32> to vector<48x56xf32>
    %cst = arith.constant dense<0.000000e+00> : vector<48x14xf32>
    %4 = tpu.matmul %3, %0, %cst {dimension_numbers = #tpu.dot_dimension_numbers<[1], [0], [0], [1], [0, 0, 1, 1], [], []>} : vector<48x56xf32>, vector<56x14xf32>, vector<48x14xf32> -> vector<48x14xf32>
    %c0_6 = arith.constant 0 : index
    %c0_7 = arith.constant 0 : index
    %c0_8 = arith.constant 0 : index
    %5 = vector.load %arg2[%c0_6, %c0_7, %c0_8] : memref<3x14x384xf32, #tpu.memory_space<vmem>>, vector<1x14x384xf32>
    %6 = vector.shape_cast %5 : vector<1x14x384xf32> to vector<14x384xf32>
    %cst_9 = arith.constant dense<0.000000e+00> : vector<48x384xf32>
    %7 = tpu.matmul %4, %6, %cst_9 {dimension_numbers = #tpu.dot_dimension_numbers<[1], [0], [0], [1], [0, 0, 1, 1], [], []>} : vector<48x14xf32>, vector<14x384xf32>, vector<48x384xf32> -> vector<48x384xf32>
    %8 = vector.broadcast %1 : vector<1x384xf32> to vector<48x384xf32>
    %9 = arith.addf %8, %7 : vector<48x384xf32>
    %c1 = arith.constant 1 : index
    %c0_10 = arith.constant 0 : index
    %c0_11 = arith.constant 0 : index
    %10 = vector.load %arg1[%c1, %c0_10, %c0_11] : memref<3x48x56xf32, #tpu.memory_space<vmem>>, vector<1x48x56xf32>
    %11 = vector.shape_cast %10 : vector<1x48x56xf32> to vector<48x56xf32>
    %cst_12 = arith.constant dense<0.000000e+00> : vector<48x14xf32>
    %12 = tpu.matmul %11, %0, %cst_12 {dimension_numbers = #tpu.dot_dimension_numbers<[1], [0], [0], [1], [0, 0, 1, 1], [], []>} : vector<48x56xf32>, vector<56x14xf32>, vector<48x14xf32> -> vector<48x14xf32>
    %c1_13 = arith.constant 1 : index
    %c0_14 = arith.constant 0 : index
    %c0_15 = arith.constant 0 : index
    %13 = vector.load %arg2[%c1_13, %c0_14, %c0_15] : memref<3x14x384xf32, #tpu.memory_space<vmem>>, vector<1x14x384xf32>
    %14 = vector.shape_cast %13 : vector<1x14x384xf32> to vector<14x384xf32>
    %cst_16 = arith.constant dense<0.000000e+00> : vector<48x384xf32>
    %15 = tpu.matmul %12, %14, %cst_16 {dimension_numbers = #tpu.dot_dimension_numbers<[1], [0], [0], [1], [0, 0, 1, 1], [], []>} : vector<48x14xf32>, vector<14x384xf32>, vector<48x384xf32> -> vector<48x384xf32>
    %16 = arith.addf %9, %15 : vector<48x384xf32>
    %c2 = arith.constant 2 : index
    %c0_17 = arith.constant 0 : index
    %c0_18 = arith.constant 0 : index
    %17 = vector.load %arg1[%c2, %c0_17, %c0_18] : memref<3x48x56xf32, #tpu.memory_space<vmem>>, vector<1x48x56xf32>
    %18 = vector.shape_cast %17 : vector<1x48x56xf32> to vector<48x56xf32>
    %cst_19 = arith.constant dense<0.000000e+00> : vector<48x14xf32>
    %19 = tpu.matmul %18, %0, %cst_19 {dimension_numbers = #tpu.dot_dimension_numbers<[1], [0], [0], [1], [0, 0, 1, 1], [], []>} : vector<48x56xf32>, vector<56x14xf32>, vector<48x14xf32> -> vector<48x14xf32>
    %c2_20 = arith.constant 2 : index
    %c0_21 = arith.constant 0 : index
    %c0_22 = arith.constant 0 : index
    %20 = vector.load %arg2[%c2_20, %c0_21, %c0_22] : memref<3x14x384xf32, #tpu.memory_space<vmem>>, vector<1x14x384xf32>
    %21 = vector.shape_cast %20 : vector<1x14x384xf32> to vector<14x384xf32>
    %cst_23 = arith.constant dense<0.000000e+00> : vector<48x384xf32>
    %22 = tpu.matmul %19, %21, %cst_23 {dimension_numbers = #tpu.dot_dimension_numbers<[1], [0], [0], [1], [0, 0, 1, 1], [], []>} : vector<48x14xf32>, vector<14x384xf32>, vector<48x384xf32> -> vector<48x384xf32>
    %23 = arith.addf %16, %22 : vector<48x384xf32>
    %c0_24 = arith.constant 0 : index
    %c0_25 = arith.constant 0 : index
    %c0_26 = arith.constant 0 : index
    %24 = vector.load %arg4[%c0_24, %c0_25, %c0_26] : memref<2x24x48xf32, #tpu.memory_space<vmem>>, vector<1x24x48xf32>
    %25 = vector.shape_cast %24 : vector<1x24x48xf32> to vector<24x48xf32>
    %cst_27 = arith.constant dense<0.000000e+00> : vector<24x384xf32>
    %26 = tpu.matmul %25, %23, %cst_27 {dimension_numbers = #tpu.dot_dimension_numbers<[1], [0], [0], [1], [0, 0, 1, 1], [], []>} : vector<24x48xf32>, vector<48x384xf32>, vector<24x384xf32> -> vector<24x384xf32>
    %c1_28 = arith.constant 1 : index
    %c0_29 = arith.constant 0 : index
    %c0_30 = arith.constant 0 : index
    %27 = vector.load %arg4[%c1_28, %c0_29, %c0_30] : memref<2x24x48xf32, #tpu.memory_space<vmem>>, vector<1x24x48xf32>
    %28 = vector.shape_cast %27 : vector<1x24x48xf32> to vector<24x48xf32>
    %cst_31 = arith.constant dense<0.000000e+00> : vector<24x384xf32>
    %29 = tpu.matmul %28, %23, %cst_31 {dimension_numbers = #tpu.dot_dimension_numbers<[1], [0], [0], [1], [0, 0, 1, 1], [], []>} : vector<24x48xf32>, vector<48x384xf32>, vector<24x384xf32> -> vector<24x384xf32>
    %30 = arith.maximumf %26, %29 : vector<24x384xf32>
    %c0_32 = arith.constant 0 : index
    %c0_33 = arith.constant 0 : index
    %c0_34 = arith.constant 0 : index
    %31 = vector.load %arg5[%c0_32, %c0_33, %c0_34] : memref<2x384x192xf32, #tpu.memory_space<vmem>>, vector<1x384x192xf32>
    %32 = vector.shape_cast %31 : vector<1x384x192xf32> to vector<384x192xf32>
    %cst_35 = arith.constant dense<0.000000e+00> : vector<24x192xf32>
    %33 = tpu.matmul %30, %32, %cst_35 {dimension_numbers = #tpu.dot_dimension_numbers<[1], [0], [0], [1], [0, 0, 1, 1], [], []>} : vector<24x384xf32>, vector<384x192xf32>, vector<24x192xf32> -> vector<24x192xf32>
    %c1_36 = arith.constant 1 : index
    %c0_37 = arith.constant 0 : index
    %c0_38 = arith.constant 0 : index
    %34 = vector.load %arg5[%c1_36, %c0_37, %c0_38] : memref<2x384x192xf32, #tpu.memory_space<vmem>>, vector<1x384x192xf32>
    %35 = vector.shape_cast %34 : vector<1x384x192xf32> to vector<384x192xf32>
    %cst_39 = arith.constant dense<0.000000e+00> : vector<24x192xf32>
    %36 = tpu.matmul %30, %35, %cst_39 {dimension_numbers = #tpu.dot_dimension_numbers<[1], [0], [0], [1], [0, 0, 1, 1], [], []>} : vector<24x384xf32>, vector<384x192xf32>, vector<24x192xf32> -> vector<24x192xf32>
    %37 = arith.maximumf %33, %36 : vector<24x192xf32>
    %cst_40 = arith.constant 0.000000e+00 : f32
    %38 = vector.broadcast %cst_40 : f32 to vector<24x192xf32>
    %39 = arith.maximumf %37, %38 : vector<24x192xf32>
    %c0_41 = arith.constant 0 : index
    %c0_42 = arith.constant 0 : index
    %40 = vector.load %arg8[%c0_41, %c0_42] : memref<1x256xf32, #tpu.memory_space<vmem>>, vector<1x256xf32>
    %c0_43 = arith.constant 0 : index
    %c0_44 = arith.constant 0 : index
    %c0_45 = arith.constant 0 : index
    %41 = vector.load %arg6[%c0_43, %c0_44, %c0_45] : memref<3x16x24xf32, #tpu.memory_space<vmem>>, vector<1x16x24xf32>
    %42 = vector.shape_cast %41 : vector<1x16x24xf32> to vector<16x24xf32>
    %cst_46 = arith.constant dense<0.000000e+00> : vector<16x192xf32>
    %43 = tpu.matmul %42, %39, %cst_46 {dimension_numbers = #tpu.dot_dimension_numbers<[1], [0], [0], [1], [0, 0, 1, 1], [], []>} : vector<16x24xf32>, vector<24x192xf32>, vector<16x192xf32> -> vector<16x192xf32>
    %c0_47 = arith.constant 0 : index
    %c0_48 = arith.constant 0 : index
    %c0_49 = arith.constant 0 : index
    %44 = vector.load %arg7[%c0_47, %c0_48, %c0_49] : memref<3x192x256xf32, #tpu.memory_space<vmem>>, vector<1x192x256xf32>
    %45 = vector.shape_cast %44 : vector<1x192x256xf32> to vector<192x256xf32>
    %cst_50 = arith.constant dense<0.000000e+00> : vector<16x256xf32>
    %46 = tpu.matmul %43, %45, %cst_50 {dimension_numbers = #tpu.dot_dimension_numbers<[1], [0], [0], [1], [0, 0, 1, 1], [], []>} : vector<16x192xf32>, vector<192x256xf32>, vector<16x256xf32> -> vector<16x256xf32>
    %47 = vector.broadcast %40 : vector<1x256xf32> to vector<16x256xf32>
    %48 = arith.addf %47, %46 : vector<16x256xf32>
    %c1_51 = arith.constant 1 : index
    %c0_52 = arith.constant 0 : index
    %c0_53 = arith.constant 0 : index
    %49 = vector.load %arg6[%c1_51, %c0_52, %c0_53] : memref<3x16x24xf32, #tpu.memory_space<vmem>>, vector<1x16x24xf32>
    %50 = vector.shape_cast %49 : vector<1x16x24xf32> to vector<16x24xf32>
    %cst_54 = arith.constant dense<0.000000e+00> : vector<16x192xf32>
    %51 = tpu.matmul %50, %39, %cst_54 {dimension_numbers = #tpu.dot_dimension_numbers<[1], [0], [0], [1], [0, 0, 1, 1], [], []>} : vector<16x24xf32>, vector<24x192xf32>, vector<16x192xf32> -> vector<16x192xf32>
    %c1_55 = arith.constant 1 : index
    %c0_56 = arith.constant 0 : index
    %c0_57 = arith.constant 0 : index
    %52 = vector.load %arg7[%c1_55, %c0_56, %c0_57] : memref<3x192x256xf32, #tpu.memory_space<vmem>>, vector<1x192x256xf32>
    %53 = vector.shape_cast %52 : vector<1x192x256xf32> to vector<192x256xf32>
    %cst_58 = arith.constant dense<0.000000e+00> : vector<16x256xf32>
    %54 = tpu.matmul %51, %53, %cst_58 {dimension_numbers = #tpu.dot_dimension_numbers<[1], [0], [0], [1], [0, 0, 1, 1], [], []>} : vector<16x192xf32>, vector<192x256xf32>, vector<16x256xf32> -> vector<16x256xf32>
    %55 = arith.addf %48, %54 : vector<16x256xf32>
    %c2_59 = arith.constant 2 : index
    %c0_60 = arith.constant 0 : index
    %c0_61 = arith.constant 0 : index
    %56 = vector.load %arg6[%c2_59, %c0_60, %c0_61] : memref<3x16x24xf32, #tpu.memory_space<vmem>>, vector<1x16x24xf32>
    %57 = vector.shape_cast %56 : vector<1x16x24xf32> to vector<16x24xf32>
    %cst_62 = arith.constant dense<0.000000e+00> : vector<16x192xf32>
    %58 = tpu.matmul %57, %39, %cst_62 {dimension_numbers = #tpu.dot_dimension_numbers<[1], [0], [0], [1], [0, 0, 1, 1], [], []>} : vector<16x24xf32>, vector<24x192xf32>, vector<16x192xf32> -> vector<16x192xf32>
    %c2_63 = arith.constant 2 : index
    %c0_64 = arith.constant 0 : index
    %c0_65 = arith.constant 0 : index
    %59 = vector.load %arg7[%c2_63, %c0_64, %c0_65] : memref<3x192x256xf32, #tpu.memory_space<vmem>>, vector<1x192x256xf32>
    %60 = vector.shape_cast %59 : vector<1x192x256xf32> to vector<192x256xf32>
    %cst_66 = arith.constant dense<0.000000e+00> : vector<16x256xf32>
    %61 = tpu.matmul %58, %60, %cst_66 {dimension_numbers = #tpu.dot_dimension_numbers<[1], [0], [0], [1], [0, 0, 1, 1], [], []>} : vector<16x192xf32>, vector<192x256xf32>, vector<16x256xf32> -> vector<16x256xf32>
    %62 = arith.addf %55, %61 : vector<16x256xf32>
    %c0_67 = arith.constant 0 : index
    %c0_68 = arith.constant 0 : index
    %c0_69 = arith.constant 0 : index
    %63 = vector.load %arg9[%c0_67, %c0_68, %c0_69] : memref<2x8x16xf32, #tpu.memory_space<vmem>>, vector<1x8x16xf32>
    %64 = vector.shape_cast %63 : vector<1x8x16xf32> to vector<8x16xf32>
    %cst_70 = arith.constant dense<0.000000e+00> : vector<8x256xf32>
    %65 = tpu.matmul %64, %62, %cst_70 {dimension_numbers = #tpu.dot_dimension_numbers<[1], [0], [0], [1], [0, 0, 1, 1], [], []>} : vector<8x16xf32>, vector<16x256xf32>, vector<8x256xf32> -> vector<8x256xf32>
    %c1_71 = arith.constant 1 : index
    %c0_72 = arith.constant 0 : index
    %c0_73 = arith.constant 0 : index
    %66 = vector.load %arg9[%c1_71, %c0_72, %c0_73] : memref<2x8x16xf32, #tpu.memory_space<vmem>>, vector<1x8x16xf32>
    %67 = vector.shape_cast %66 : vector<1x8x16xf32> to vector<8x16xf32>
    %cst_74 = arith.constant dense<0.000000e+00> : vector<8x256xf32>
    %68 = tpu.matmul %67, %62, %cst_74 {dimension_numbers = #tpu.dot_dimension_numbers<[1], [0], [0], [1], [0, 0, 1, 1], [], []>} : vector<8x16xf32>, vector<16x256xf32>, vector<8x256xf32> -> vector<8x256xf32>
    %69 = arith.maximumf %65, %68 : vector<8x256xf32>
    %c0_75 = arith.constant 0 : index
    %c0_76 = arith.constant 0 : index
    %c0_77 = arith.constant 0 : index
    %70 = vector.load %arg10[%c0_75, %c0_76, %c0_77] : memref<2x256x128xf32, #tpu.memory_space<vmem>>, vector<1x256x128xf32>
    %71 = vector.shape_cast %70 : vector<1x256x128xf32> to vector<256x128xf32>
    %cst_78 = arith.constant dense<0.000000e+00> : vector<8x128xf32>
    %72 = tpu.matmul %69, %71, %cst_78 {dimension_numbers = #tpu.dot_dimension_numbers<[1], [0], [0], [1], [0, 0, 1, 1], [], []>} : vector<8x256xf32>, vector<256x128xf32>, vector<8x128xf32> -> vector<8x128xf32>
    %c1_79 = arith.constant 1 : index
    %c0_80 = arith.constant 0 : index
    %c0_81 = arith.constant 0 : index
    %73 = vector.load %arg10[%c1_79, %c0_80, %c0_81] : memref<2x256x128xf32, #tpu.memory_space<vmem>>, vector<1x256x128xf32>
    %74 = vector.shape_cast %73 : vector<1x256x128xf32> to vector<256x128xf32>
    %cst_82 = arith.constant dense<0.000000e+00> : vector<8x128xf32>
    %75 = tpu.matmul %69, %74, %cst_82 {dimension_numbers = #tpu.dot_dimension_numbers<[1], [0], [0], [1], [0, 0, 1, 1], [], []>} : vector<8x256xf32>, vector<256x128xf32>, vector<8x128xf32> -> vector<8x128xf32>
    %76 = arith.maximumf %72, %75 : vector<8x128xf32>
    %cst_83 = arith.constant 0.000000e+00 : f32
    %77 = vector.broadcast %cst_83 : f32 to vector<8x128xf32>
    %78 = arith.maximumf %76, %77 : vector<8x128xf32>
    %c0_84 = arith.constant 0 : index
    %c0_85 = arith.constant 0 : index
    %c0_86 = arith.constant 0 : index
    %79 = vector.load %arg11[%c0_84, %c0_85, %c0_86] : memref<2x4x8xf32, #tpu.memory_space<vmem>>, vector<1x4x8xf32>
    %80 = vector.shape_cast %79 : vector<1x4x8xf32> to vector<4x8xf32>
    %cst_87 = arith.constant dense<0.000000e+00> : vector<4x128xf32>
    %81 = tpu.matmul %80, %78, %cst_87 {dimension_numbers = #tpu.dot_dimension_numbers<[1], [0], [0], [1], [0, 0, 1, 1], [], []>} : vector<4x8xf32>, vector<8x128xf32>, vector<4x128xf32> -> vector<4x128xf32>
    %c1_88 = arith.constant 1 : index
    %c0_89 = arith.constant 0 : index
    %c0_90 = arith.constant 0 : index
    %82 = vector.load %arg11[%c1_88, %c0_89, %c0_90] : memref<2x4x8xf32, #tpu.memory_space<vmem>>, vector<1x4x8xf32>
    %83 = vector.shape_cast %82 : vector<1x4x8xf32> to vector<4x8xf32>
    %cst_91 = arith.constant dense<0.000000e+00> : vector<4x128xf32>
    %84 = tpu.matmul %83, %78, %cst_91 {dimension_numbers = #tpu.dot_dimension_numbers<[1], [0], [0], [1], [0, 0, 1, 1], [], []>} : vector<4x8xf32>, vector<8x128xf32>, vector<4x128xf32> -> vector<4x128xf32>
    %85 = tpu.concatenate %81, %84 in 1 : vector<4x128xf32>, vector<4x128xf32> -> vector<4x256xf32>
    %c0_92 = arith.constant 0 : index
    %c0_93 = arith.constant 0 : index
    %86 = vector.load %arg12[%c0_92, %c0_93] : memref<256x128xf32, #tpu.memory_space<vmem>>, vector<256x128xf32>
    %cst_94 = arith.constant dense<0.000000e+00> : vector<4x128xf32>
    %87 = tpu.matmul %85, %86, %cst_94 {dimension_numbers = #tpu.dot_dimension_numbers<[1], [0], [0], [1], [0, 0, 1, 1], [], []>} : vector<4x256xf32>, vector<256x128xf32>, vector<4x128xf32> -> vector<4x128xf32>
    %c0_95 = arith.constant 0 : index
    %c0_96 = arith.constant 0 : index
    %88 = vector.load %arg13[%c0_95, %c0_96] : memref<1x128xf32, #tpu.memory_space<vmem>>, vector<1x128xf32>
    %89 = vector.broadcast %88 : vector<1x128xf32> to vector<4x128xf32>
    %90 = arith.addf %87, %89 : vector<4x128xf32>
    %cst_97 = arith.constant 0.000000e+00 : f32
    %91 = vector.broadcast %cst_97 : f32 to vector<4x128xf32>
    %92 = arith.maximumf %90, %91 : vector<4x128xf32>
    %c0_98 = arith.constant 0 : index
    %c0_99 = arith.constant 0 : index
    %93 = vector.load %arg14[%c0_98, %c0_99] : memref<128x128xf32, #tpu.memory_space<vmem>>, vector<128x128xf32>
    %cst_100 = arith.constant dense<0.000000e+00> : vector<4x128xf32>
    %94 = tpu.matmul %92, %93, %cst_100 {dimension_numbers = #tpu.dot_dimension_numbers<[1], [0], [0], [1], [0, 0, 1, 1], [], []>} : vector<4x128xf32>, vector<128x128xf32>, vector<4x128xf32> -> vector<4x128xf32>
    %c0_101 = arith.constant 0 : index
    %c0_102 = arith.constant 0 : index
    %95 = vector.load %arg15[%c0_101, %c0_102] : memref<1x128xf32, #tpu.memory_space<vmem>>, vector<1x128xf32>
    %96 = vector.broadcast %95 : vector<1x128xf32> to vector<4x128xf32>
    %97 = arith.addf %94, %96 : vector<4x128xf32>
    %cst_103 = arith.constant 0.000000e+00 : f32
    %98 = vector.broadcast %cst_103 : f32 to vector<4x128xf32>
    %99 = arith.maximumf %97, %98 : vector<4x128xf32>
    %c0_104 = arith.constant 0 : index
    %c0_105 = arith.constant 0 : index
    %100 = vector.load %arg16[%c0_104, %c0_105] : memref<128x128xf32, #tpu.memory_space<vmem>>, vector<128x128xf32>
    %cst_106 = arith.constant dense<0.000000e+00> : vector<4x128xf32>
    %101 = tpu.matmul %99, %100, %cst_106 {dimension_numbers = #tpu.dot_dimension_numbers<[1], [0], [0], [1], [0, 0, 1, 1], [], []>} : vector<4x128xf32>, vector<128x128xf32>, vector<4x128xf32> -> vector<4x128xf32>
    %c0_107 = arith.constant 0 : index
    %c0_108 = arith.constant 0 : index
    %102 = vector.load %arg17[%c0_107, %c0_108] : memref<1x128xf32, #tpu.memory_space<vmem>>, vector<1x128xf32>
    %103 = vector.broadcast %102 : vector<1x128xf32> to vector<4x128xf32>
    %104 = arith.addf %101, %103 : vector<4x128xf32>
    %c0_109 = arith.constant 0 : index
    %c0_110 = arith.constant 0 : index
    %105 = vector.load %arg22[%c0_109, %c0_110] : memref<4x128xf32, #tpu.memory_space<vmem>>, vector<4x128xf32>
    tpu.vector_store %arg22[%c0_109, %c0_110], %104 {strides = array<i32>} : memref<4x128xf32, #tpu.memory_space<vmem>>, vector<4x128xf32>,
    %106 = vector.extract_strided_slice %99 {offsets = [0, 0], sizes = [2, 128], strides = [1, 1]} : vector<4x128xf32> to vector<2x128xf32>
    %107 = vector.extract_strided_slice %99 {offsets = [2, 0], sizes = [2, 128], strides = [1, 1]} : vector<4x128xf32> to vector<2x128xf32>
    %108 = tpu.concatenate %106, %107 in 1 : vector<2x128xf32>, vector<2x128xf32> -> vector<2x256xf32>
    %c0_111 = arith.constant 0 : index
    %c0_112 = arith.constant 0 : index
    %109 = vector.load %arg18[%c0_111, %c0_112] : memref<256x128xf32, #tpu.memory_space<vmem>>, vector<256x128xf32>
    %cst_113 = arith.constant dense<0.000000e+00> : vector<2x128xf32>
    %110 = tpu.matmul %108, %109, %cst_113 {dimension_numbers = #tpu.dot_dimension_numbers<[1], [0], [0], [1], [0, 0, 1, 1], [], []>} : vector<2x256xf32>, vector<256x128xf32>, vector<2x128xf32> -> vector<2x128xf32>
    %c0_114 = arith.constant 0 : index
    %c0_115 = arith.constant 0 : index
    %111 = vector.load %arg19[%c0_114, %c0_115] : memref<1x128xf32, #tpu.memory_space<vmem>>, vector<1x128xf32>
    %112 = vector.broadcast %111 : vector<1x128xf32> to vector<2x128xf32>
    %113 = arith.addf %110, %112 : vector<2x128xf32>
    %cst_116 = arith.constant 0.000000e+00 : f32
    %114 = vector.broadcast %cst_116 : f32 to vector<2x128xf32>
    %115 = arith.maximumf %113, %114 : vector<2x128xf32>
    %c0_117 = arith.constant 0 : index
    %c0_118 = arith.constant 0 : index
    %116 = vector.load %arg20[%c0_117, %c0_118] : memref<128x128xf32, #tpu.memory_space<vmem>>, vector<128x128xf32>
    %cst_119 = arith.constant dense<0.000000e+00> : vector<2x128xf32>
    %117 = tpu.matmul %115, %116, %cst_119 {dimension_numbers = #tpu.dot_dimension_numbers<[1], [0], [0], [1], [0, 0, 1, 1], [], []>} : vector<2x128xf32>, vector<128x128xf32>, vector<2x128xf32> -> vector<2x128xf32>
    %c0_120 = arith.constant 0 : index
    %c0_121 = arith.constant 0 : index
    %118 = vector.load %arg21[%c0_120, %c0_121] : memref<1x128xf32, #tpu.memory_space<vmem>>, vector<1x128xf32>
    %119 = vector.broadcast %118 : vector<1x128xf32> to vector<2x128xf32>
    %120 = arith.addf %117, %119 : vector<2x128xf32>
    %c0_122 = arith.constant 0 : index
    %c0_123 = arith.constant 0 : index
    %121 = vector.load %arg23[%c0_122, %c0_123] : memref<2x128xf32, #tpu.memory_space<vmem>>, vector<2x128xf32>
    tpu.vector_store %arg23[%c0_122, %c0_123], %120 {strides = array<i32>} : memref<2x128xf32, #tpu.memory_space<vmem>>, vector<2x128xf32>,
    return
  }
}

</mosaic_0001>

<llo_original>
// kernel: cnn_aux_forward.1
$region0: #{cnn_aux_forward.1}
  #allocation0 [shape = 'u32[]', space=smem, size = 0x4, offset = 0x4, fixed_abs, tag = 'smem constant byte address 0x4 - core index']
  #allocation1 [shape = 'u32[72,128]{1,0:T(1,128)}', space=vmem, size = 0x9000, scoped, tag = 'internal scratch']
  %s0 = inlined_call_operand.vmem [shape: f32[56,14], index: 0, kind: input, shape index: {}]
  %s1 = inlined_call_operand.vmem [shape: f32[3,48,56], index: 1, kind: input, shape index: {}]
  %s2 = inlined_call_operand.vmem [shape: f32[3,14,384], index: 2, kind: input, shape index: {}]
  %s3 = inlined_call_operand.vmem [shape: f32[1,384], index: 3, kind: input, shape index: {}]
  %s4 = inlined_call_operand.vmem [shape: f32[2,24,48], index: 4, kind: input, shape index: {}]
  %s5 = inlined_call_operand.vmem [shape: f32[2,384,192], index: 5, kind: input, shape index: {}]
  %s6 = inlined_call_operand.vmem [shape: f32[3,16,24], index: 6, kind: input, shape index: {}]
  %s7 = inlined_call_operand.vmem [shape: f32[3,192,256], index: 7, kind: input, shape index: {}]
  %s8 = inlined_call_operand.vmem [shape: f32[1,256], index: 8, kind: input, shape index: {}]
  %s9 = inlined_call_operand.vmem [shape: f32[2,8,16], index: 9, kind: input, shape index: {}]
  %s10 = inlined_call_operand.vmem [shape: f32[2,256,128], index: 10, kind: input, shape index: {}]
  %s11 = inlined_call_operand.vmem [shape: f32[2,4,8], index: 11, kind: input, shape index: {}]
  %s12 = inlined_call_operand.vmem [shape: f32[256,128], index: 12, kind: input, shape index: {}]
  %s13 = inlined_call_operand.vmem [shape: f32[1,128], index: 13, kind: input, shape index: {}]
  %s14 = inlined_call_operand.vmem [shape: f32[128,128], index: 14, kind: input, shape index: {}]
  %s15 = inlined_call_operand.vmem [shape: f32[1,128], index: 15, kind: input, shape index: {}]
  %s16 = inlined_call_operand.vmem [shape: f32[128,128], index: 16, kind: input, shape index: {}]
  %s17 = inlined_call_operand.vmem [shape: f32[1,128], index: 17, kind: input, shape index: {}]
  %s18 = inlined_call_operand.vmem [shape: f32[256,128], index: 18, kind: input, shape index: {}]
  %s19 = inlined_call_operand.vmem [shape: f32[1,128], index: 19, kind: input, shape index: {}]
  %s20 = inlined_call_operand.vmem [shape: f32[128,128], index: 20, kind: input, shape index: {}]
  %s21 = inlined_call_operand.vmem [shape: f32[1,128], index: 21, kind: input, shape index: {}]
  %s22 = inlined_call_operand.vmem [shape: f32[4,128], index: 22, kind: output, shape index: {0}]
  %s23 = inlined_call_operand.hbm [shape: f32[2,128], index: 23, kind: output, shape index: {1}]
  %24 = xla_tuple %s22, %s23
  %s25 = sld [smem:[#allocation0]]
  $region106: #{cnn_aux_forward.1} parent=0
    _
  %s27 = ssub.s32 1, %s25
  %s28 = scalar_select 0, %s27, %s25
  $region1: #{cnn_aux_forward.1} parent=0
    #allocation2 [shape = 'u8[1024]{0}', space=vmem, size = 0x400, scoped, tag = 'output window, operand 1, single buffered']
    #allocation3 [shape = 's32[1]{0}', space=sflag, size = 0x4, scoped, tag = 'scoped memory for cnn_aux_forward.1']
    %29 = vsyncpa [#allocation3], 0
    // Predicated region
    $region2: #{cnn_aux_forward.1} parent=1 // pred_check
      _
    $region3: #{cnn_aux_forward.1} parent=1 // pred_check_branch
      %31 = sbr.rel (0) target = $region5
    $region4: #{cnn_aux_forward.1} parent=1 // pred_region
      _
    $region5: #{cnn_aux_forward.1} parent=1 // pred_fallthru
      _
    // Predicated region
    $region6: #{cnn_aux_forward.1} parent=1 // pred_check
      _
    $region7: #{cnn_aux_forward.1} parent=1 // pred_check_branch
      %33 = sbr.rel (0) target = $region9
    $region8: #{cnn_aux_forward.1} parent=1 // pred_region
      _
    $region9: #{cnn_aux_forward.1} parent=1 // pred_fallthru
      _
    // Predicated region
    $region10: #{cnn_aux_forward.1} parent=1 // pred_check
      _
    $region11: #{cnn_aux_forward.1} parent=1 // pred_check_branch
      %35 = sbr.rel (0) target = $region13
    $region12: #{cnn_aux_forward.1} parent=1 // pred_region
      _
    $region13: #{cnn_aux_forward.1} parent=1 // pred_fallthru
      _
    // Predicated region
    $region14: #{cnn_aux_forward.1} parent=1 // pred_check
      _
    $region15: #{cnn_aux_forward.1} parent=1 // pred_check_branch
      %37 = sbr.rel (0) target = $region17
    $region16: #{cnn_aux_forward.1} parent=1 // pred_region
      _
    $region17: #{cnn_aux_forward.1} parent=1 // pred_fallthru
      _
    // Predicated region
    $region18: #{cnn_aux_forward.1} parent=1 // pred_check
      _
    $region19: #{cnn_aux_forward.1} parent=1 // pred_check_branch
      %39 = sbr.rel (0) target = $region21
    $region20: #{cnn_aux_forward.1} parent=1 // pred_region
      _
    $region21: #{cnn_aux_forward.1} parent=1 // pred_fallthru
      _
    // Predicated region
    $region22: #{cnn_aux_forward.1} parent=1 // pred_check
      _
    $region23: #{cnn_aux_forward.1} parent=1 // pred_check_branch
      %41 = sbr.rel (0) target = $region25
    $region24: #{cnn_aux_forward.1} parent=1 // pred_region
      _
    $region25: #{cnn_aux_forward.1} parent=1 // pred_fallthru
      _
    // Predicated region
    $region26: #{cnn_aux_forward.1} parent=1 // pred_check
      _
    $region27: #{cnn_aux_forward.1} parent=1 // pred_check_branch
      %43 = sbr.rel (0) target = $region29
    $region28: #{cnn_aux_forward.1} parent=1 // pred_region
      _
    $region29: #{cnn_aux_forward.1} parent=1 // pred_fallthru
      _
    // Predicated region
    $region30: #{cnn_aux_forward.1} parent=1 // pred_check
      _
    $region31: #{cnn_aux_forward.1} parent=1 // pred_check_branch
      %45 = sbr.rel (0) target = $region33
    $region32: #{cnn_aux_forward.1} parent=1 // pred_region
      _
    $region33: #{cnn_aux_forward.1} parent=1 // pred_fallthru
      _
    // Predicated region
    $region34: #{cnn_aux_forward.1} parent=1 // pred_check
      _
    $region35: #{cnn_aux_forward.1} parent=1 // pred_check_branch
      %47 = sbr.rel (0) target = $region37
    $region36: #{cnn_aux_forward.1} parent=1 // pred_region
      _
    $region37: #{cnn_aux_forward.1} parent=1 // pred_fallthru
      _
    // Predicated region
    $region38: #{cnn_aux_forward.1} parent=1 // pred_check
      _
    $region39: #{cnn_aux_forward.1} parent=1 // pred_check_branch
      %49 = sbr.rel (0) target = $region41
    $region40: #{cnn_aux_forward.1} parent=1 // pred_region
      _
    $region41: #{cnn_aux_forward.1} parent=1 // pred_fallthru
      _
    // Predicated region
    $region42: #{cnn_aux_forward.1} parent=1 // pred_check
      _
    $region43: #{cnn_aux_forward.1} parent=1 // pred_check_branch
      %51 = sbr.rel (0) target = $region45
    $region44: #{cnn_aux_forward.1} parent=1 // pred_region
      _
    $region45: #{cnn_aux_forward.1} parent=1 // pred_fallthru
      _
    // Predicated region
    $region46: #{cnn_aux_forward.1} parent=1 // pred_check
      _
    $region47: #{cnn_aux_forward.1} parent=1 // pred_check_branch
      %53 = sbr.rel (0) target = $region49
    $region48: #{cnn_aux_forward.1} parent=1 // pred_region
      _
    $region49: #{cnn_aux_forward.1} parent=1 // pred_fallthru
      _
    // Predicated region
    $region50: #{cnn_aux_forward.1} parent=1 // pred_check
      _
    $region51: #{cnn_aux_forward.1} parent=1 // pred_check_branch
      %55 = sbr.rel (0) target = $region53
    $region52: #{cnn_aux_forward.1} parent=1 // pred_region
      _
    $region53: #{cnn_aux_forward.1} parent=1 // pred_fallthru
      _
    // Predicated region
    $region54: #{cnn_aux_forward.1} parent=1 // pred_check
      _
    $region55: #{cnn_aux_forward.1} parent=1 // pred_check_branch
      %57 = sbr.rel (0) target = $region57
    $region56: #{cnn_aux_forward.1} parent=1 // pred_region
      _
    $region57: #{cnn_aux_forward.1} parent=1 // pred_fallthru
      _
    // Predicated region
    $region58: #{cnn_aux_forward.1} parent=1 // pred_check
      _
    $region59: #{cnn_aux_forward.1} parent=1 // pred_check_branch
      %59 = sbr.rel (0) target = $region61
    $region60: #{cnn_aux_forward.1} parent=1 // pred_region
      _
    $region61: #{cnn_aux_forward.1} parent=1 // pred_fallthru
      _
    // Predicated region
    $region62: #{cnn_aux_forward.1} parent=1 // pred_check
      _
    $region63: #{cnn_aux_forward.1} parent=1 // pred_check_branch
      %61 = sbr.rel (0) target = $region65
    $region64: #{cnn_aux_forward.1} parent=1 // pred_region
      _
    $region65: #{cnn_aux_forward.1} parent=1 // pred_fallthru
      _
    // Predicated region
    $region66: #{cnn_aux_forward.1} parent=1 // pred_check
      _
    $region67: #{cnn_aux_forward.1} parent=1 // pred_check_branch
      %63 = sbr.rel (0) target = $region69
    $region68: #{cnn_aux_forward.1} parent=1 // pred_region
      _
    $region69: #{cnn_aux_forward.1} parent=1 // pred_fallthru
      _
    // Predicated region
    $region70: #{cnn_aux_forward.1} parent=1 // pred_check
      _
    $region71: #{cnn_aux_forward.1} parent=1 // pred_check_branch
      %65 = sbr.rel (0) target = $region73
    $region72: #{cnn_aux_forward.1} parent=1 // pred_region
      _
    $region73: #{cnn_aux_forward.1} parent=1 // pred_fallthru
      _
    // Predicated region
    $region74: #{cnn_aux_forward.1} parent=1 // pred_check
      _
    $region75: #{cnn_aux_forward.1} parent=1 // pred_check_branch
      %67 = sbr.rel (0) target = $region77
    $region76: #{cnn_aux_forward.1} parent=1 // pred_region
      _
    $region77: #{cnn_aux_forward.1} parent=1 // pred_fallthru
      _
    // Predicated region
    $region78: #{cnn_aux_forward.1} parent=1 // pred_check
      _
    $region79: #{cnn_aux_forward.1} parent=1 // pred_check_branch
      %69 = sbr.rel (0) target = $region81
    $region80: #{cnn_aux_forward.1} parent=1 // pred_region
      _
    $region81: #{cnn_aux_forward.1} parent=1 // pred_fallthru
      _
    // Predicated region
    $region82: #{cnn_aux_forward.1} parent=1 // pred_check
      _
    $region83: #{cnn_aux_forward.1} parent=1 // pred_check_branch
      %71 = sbr.rel (0) target = $region85
    $region84: #{cnn_aux_forward.1} parent=1 // pred_region
      _
    $region85: #{cnn_aux_forward.1} parent=1 // pred_fallthru
      _
    // Predicated region
    $region86: #{cnn_aux_forward.1} parent=1 // pred_check
      _
    $region87: #{cnn_aux_forward.1} parent=1 // pred_check_branch
      %73 = sbr.rel (0) target = $region89
    $region88: #{cnn_aux_forward.1} parent=1 // pred_region
      _
    $region89: #{cnn_aux_forward.1} parent=1 // pred_fallthru
      _
    %v74 = vld [vmem:[%s0] sm:$0xff]
    %v75 = vld [vmem:[%s0 + $0x8] sm:$0xff]
    %v76 = vld [vmem:[%s0 + $0x10] sm:$0xff]
    %v77 = vld [vmem:[%s0 + $0x18] sm:$0xff]
    %v78 = vld [vmem:[%s0 + $0x20] sm:$0xff]
    %v79 = vld [vmem:[%s0 + $0x28] sm:$0xff]
    %v80 = vld [vmem:[%s0 + $0x30] sm:$0xff]
    %v81 = vld [vmem:[%s3] sm:$0x7]
    %v82 = vld [vmem:[%s1] sm:$0xff]
    %v83 = vld [vmem:[%s1 + $0x8] sm:$0xff]
    %v84 = vld [vmem:[%s1 + $0x10] sm:$0xff]
    %v85 = vld [vmem:[%s1 + $0x18] sm:$0xff]
    %v86 = vld [vmem:[%s1 + $0x20] sm:$0xff]
    %v87 = vld [vmem:[%s1 + $0x28] sm:$0xff]
    %vm88 = vcmask 457728
    %v90 = vsel %vm88, %v82, 0
    %v93 = vsel %vm88, %v83, 0
    %v96 = vsel %vm88, %v84, 0
    %v99 = vsel %vm88, %v85, 0
    %v102 = vsel %vm88, %v86, 0
    %v105 = vsel %vm88, %v87, 0
    %107 = vmatpush.msra.mxu0 0.0
    %108 = vmatpush.msra.mxu0 0.0
    %109 = vmatpush.msra.mxu0 0.0
    %110 = vmatpush.msra.mxu0 0.0
    %111 = vmatpush.msra.mxu0 0.0
    %112 = vmatpush.msra.mxu0 0.0
    %113 = vmatpush.msra.mxu0 0.0
    %114 = vmatpush.msra.mxu0 0.0
    %115 = vmatpush.msra.mxu0 0.0
    %116 = vmatpush.msra.mxu0 %v80
    %117 = vmatpush.msra.mxu0 %v79
    %118 = vmatpush.msra.mxu0 %v78
    %119 = vmatpush.msra.mxu0 %v77
    %120 = vmatpush.msra.mxu0 %v76
    %121 = vmatpush.msra.mxu0 %v75
    %122 = vmatpush.msra.mxu0 %v74
    %123 = vmatmul.f32.gmra.mxu0 %v90
    %v124 = vpop.f32.mrf.mxu0
    %v125 = vadd.f32 0.0, %v124
    %126 = vmatmul.f32.gmra.mxu0 %v93
    %v127 = vpop.f32.mrf.mxu0
    %v128 = vadd.f32 0.0, %v127
    %129 = vmatmul.f32.gmra.mxu0 %v96
    %v130 = vpop.f32.mrf.mxu0
    %v131 = vadd.f32 0.0, %v130
    %132 = vmatmul.f32.gmra.mxu0 %v99
    %v133 = vpop.f32.mrf.mxu0
    %v134 = vadd.f32 0.0, %v133
    %135 = vmatmul.f32.gmra.mxu0 %v102
    %v136 = vpop.f32.mrf.mxu0
    %v137 = vadd.f32 0.0, %v136
    %138 = vmatmul.f32.gmra.mxu0 %v105
    %v139 = vpop.f32.mrf.mxu0
    %v140 = vadd.f32 0.0, %v139
    %141 = vdwg.mxu0
    %v142 = vld [vmem:[%s2] sm:$0xff]
    %v143 = vld [vmem:[%s2 + $0x8] sm:$0xff]
    %v144 = vld [vmem:[%s2 + $0x10] sm:$0xff]
    %v145 = vld [vmem:[%s2 + $0x18] sm:$0x3f]
    %v146 = vld [vmem:[%s2 + $0x20] sm:$0x3f]
    %v147 = vld [vmem:[%s2 + $0x28] sm:$0x3f]
    %vm148 = vcmask 113664
    %v150 = vsel %vm148, %v125, 0
    %v153 = vsel %vm148, %v128, 0
    %v156 = vsel %vm148, %v131, 0
    %v159 = vsel %vm148, %v134, 0
    %v162 = vsel %vm148, %v137, 0
    %v165 = vsel %vm148, %v140, 0
    %vm167 = vcmask 1045504
    %v169 = vsel %vm167, %v145, 0
    %v172 = vsel %vm167, %v146, 0
    %v175 = vsel %vm167, %v147, 0
    %177 = vmatpush.msra.mxu0 0.0
    %178 = vmatpush.msra.mxu0 0.0
    %179 = vmatpush.msra.mxu0 0.0
    %180 = vmatpush.msra.mxu0 0.0
    %181 = vmatpush.msra.mxu0 0.0
    %182 = vmatpush.msra.mxu0 0.0
    %183 = vmatpush.msra.mxu0 0.0
    %184 = vmatpush.msra.mxu0 0.0
    %185 = vmatpush.msra.mxu0 0.0
    %186 = vmatpush.msra.mxu0 0.0
    %187 = vmatpush.msra.mxu0 0.0
    %188 = vmatpush.msra.mxu0 0.0
    %189 = vmatpush.msra.mxu0 0.0
    %190 = vmatpush.msra.mxu0 0.0
    %191 = vmatpush.msra.mxu0 %v169
    %192 = vmatpush.msra.mxu0 %v142
    %193 = vmatmul.f32.gmra.mxu0 %v150
    %v194 = vpop.f32.mrf.mxu0
    %v195 = vadd.f32 0.0, %v194
    %196 = vmatmul.f32.gmra.mxu0 %v153
    %v197 = vpop.f32.mrf.mxu0
    %v198 = vadd.f32 0.0, %v197
    %199 = vmatmul.f32.gmra.mxu0 %v156
    %v200 = vpop.f32.mrf.mxu0
    %v201 = vadd.f32 0.0, %v200
    %202 = vmatmul.f32.gmra.mxu0 %v159
    %v203 = vpop.f32.mrf.mxu0
    %v204 = vadd.f32 0.0, %v203
    %205 = vmatmul.f32.gmra.mxu0 %v162
    %v206 = vpop.f32.mrf.mxu0
    %v207 = vadd.f32 0.0, %v206
    %208 = vmatmul.f32.gmra.mxu0 %v165
    %v209 = vpop.f32.mrf.mxu0
    %v210 = vadd.f32 0.0, %v209
    %211 = vdwg.mxu0
    %212 = vmatpush.msra.mxu0 0.0
    %213 = vmatpush.msra.mxu0 0.0
    %214 = vmatpush.msra.mxu0 0.0
    %215 = vmatpush.msra.mxu0 0.0
    %216 = vmatpush.msra.mxu0 0.0
    %217 = vmatpush.msra.mxu0 0.0
    %218 = vmatpush.msra.mxu0 0.0
    %219 = vmatpush.msra.mxu0 0.0
    %220 = vmatpush.msra.mxu0 0.0
    %221 = vmatpush.msra.mxu0 0.0
    %222 = vmatpush.msra.mxu0 0.0
    %223 = vmatpush.msra.mxu0 0.0
    %224 = vmatpush.msra.mxu0 0.0
    %225 = vmatpush.msra.mxu0 0.0
    %226 = vmatpush.msra.mxu0 %v172
    %227 = vmatpush.msra.mxu0 %v143
    %228 = vmatmul.f32.gmra.mxu0 %v150
    %v229 = vpop.f32.mrf.mxu0
    %v230 = vadd.f32 0.0, %v229
    %231 = vmatmul.f32.gmra.mxu0 %v153
    %v232 = vpop.f32.mrf.mxu0
    %v233 = vadd.f32 0.0, %v232
    %234 = vmatmul.f32.gmra.mxu0 %v156
    %v235 = vpop.f32.mrf.mxu0
    %v236 = vadd.f32 0.0, %v235
    %237 = vmatmul.f32.gmra.mxu0 %v159
    %v238 = vpop.f32.mrf.mxu0
    %v239 = vadd.f32 0.0, %v238
    %240 = vmatmul.f32.gmra.mxu0 %v162
    %v241 = vpop.f32.mrf.mxu0
    %v242 = vadd.f32 0.0, %v241
    %243 = vmatmul.f32.gmra.mxu0 %v165
    %v244 = vpop.f32.mrf.mxu0
    %v245 = vadd.f32 0.0, %v244
    %246 = vdwg.mxu0
    %247 = vmatpush.msra.mxu0 0.0
    %248 = vmatpush.msra.mxu0 0.0
    %249 = vmatpush.msra.mxu0 0.0
    %250 = vmatpush.msra.mxu0 0.0
    %251 = vmatpush.msra.mxu0 0.0
    %252 = vmatpush.msra.mxu0 0.0
    %253 = vmatpush.msra.mxu0 0.0
    %254 = vmatpush.msra.mxu0 0.0
    %255 = vmatpush.msra.mxu0 0.0
    %256 = vmatpush.msra.mxu0 0.0
    %257 = vmatpush.msra.mxu0 0.0
    %258 = vmatpush.msra.mxu0 0.0
    %259 = vmatpush.msra.mxu0 0.0
    %260 = vmatpush.msra.mxu0 0.0
    %261 = vmatpush.msra.mxu0 %v175
    %262 = vmatpush.msra.mxu0 %v144
    %263 = vmatmul.f32.gmra.mxu0 %v150
    %v264 = vpop.f32.mrf.mxu0
    %v265 = vadd.f32 0.0, %v264
    %266 = vmatmul.f32.gmra.mxu0 %v153
    %v267 = vpop.f32.mrf.mxu0
    %v268 = vadd.f32 0.0, %v267
    %269 = vmatmul.f32.gmra.mxu0 %v156
    %v270 = vpop.f32.mrf.mxu0
    %v271 = vadd.f32 0.0, %v270
    %272 = vmatmul.f32.gmra.mxu0 %v159
    %v273 = vpop.f32.mrf.mxu0
    %v274 = vadd.f32 0.0, %v273
    %275 = vmatmul.f32.gmra.mxu0 %v162
    %v276 = vpop.f32.mrf.mxu0
    %v277 = vadd.f32 0.0, %v276
    %278 = vmatmul.f32.gmra.mxu0 %v165
    %v279 = vpop.f32.mrf.mxu0
    %v280 = vadd.f32 0.0, %v279
    %281 = vdwg.mxu0
    %v283 = vperm.slane %v81, 0
    %v284 = vperm.slane %v81, 1
    %v285 = vperm.slane %v81, 2
    %v289 = vadd.f32 %v283, %v195
    %v290 = vadd.f32 %v284, %v230
    %v291 = vadd.f32 %v285, %v265
    %v292 = vadd.f32 %v283, %v198
    %v293 = vadd.f32 %v284, %v233
    %v294 = vadd.f32 %v285, %v268
    %v295 = vadd.f32 %v283, %v201
    %v296 = vadd.f32 %v284, %v236
    %v297 = vadd.f32 %v285, %v271
    %v298 = vadd.f32 %v283, %v204
    %v299 = vadd.f32 %v284, %v239
    %v300 = vadd.f32 %v285, %v274
    %v301 = vadd.f32 %v283, %v207
    %v302 = vadd.f32 %v284, %v242
    %v303 = vadd.f32 %v285, %v277
    %v304 = vadd.f32 %v283, %v210
    %v305 = vadd.f32 %v284, %v245
    %v306 = vadd.f32 %v285, %v280
    %s307 = scalar_lea.vmem %s1, 48
    %v308 = vld [vmem:[%s307] sm:$0xff]
    %v309 = vld [vmem:[%s307 + $0x8] sm:$0xff]
    %v310 = vld [vmem:[%s307 + $0x10] sm:$0xff]
    %v311 = vld [vmem:[%s307 + $0x18] sm:$0xff]
    %v312 = vld [vmem:[%s307 + $0x20] sm:$0xff]
    %v313 = vld [vmem:[%s307 + $0x28] sm:$0xff]
    %v315 = vsel %vm88, %v308, 0
    %v318 = vsel %vm88, %v309, 0
    %v321 = vsel %vm88, %v310, 0
    %v324 = vsel %vm88, %v311, 0
    %v327 = vsel %vm88, %v312, 0
    %v330 = vsel %vm88, %v313, 0
    %332 = vmatpush.msra.mxu0 0.0
    %333 = vmatpush.msra.mxu0 0.0
    %334 = vmatpush.msra.mxu0 0.0
    %335 = vmatpush.msra.mxu0 0.0
    %336 = vmatpush.msra.mxu0 0.0
    %337 = vmatpush.msra.mxu0 0.0
    %338 = vmatpush.msra.mxu0 0.0
    %339 = vmatpush.msra.mxu0 0.0
    %340 = vmatpush.msra.mxu0 0.0
    %341 = vmatpush.msra.mxu0 %v80
    %342 = vmatpush.msra.mxu0 %v79
    %343 = vmatpush.msra.mxu0 %v78
    %344 = vmatpush.msra.mxu0 %v77
    %345 = vmatpush.msra.mxu0 %v76
    %346 = vmatpush.msra.mxu0 %v75
    %347 = vmatpush.msra.mxu0 %v74
    %348 = vmatmul.f32.gmra.mxu0 %v315
    %v349 = vpop.f32.mrf.mxu0
    %v350 = vadd.f32 0.0, %v349
    %351 = vmatmul.f32.gmra.mxu0 %v318
    %v352 = vpop.f32.mrf.mxu0
    %v353 = vadd.f32 0.0, %v352
    %354 = vmatmul.f32.gmra.mxu0 %v321
    %v355 = vpop.f32.mrf.mxu0
    %v356 = vadd.f32 0.0, %v355
    %357 = vmatmul.f32.gmra.mxu0 %v324
    %v358 = vpop.f32.mrf.mxu0
    %v359 = vadd.f32 0.0, %v358
    %360 = vmatmul.f32.gmra.mxu0 %v327
    %v361 = vpop.f32.mrf.mxu0
    %v362 = vadd.f32 0.0, %v361
    %363 = vmatmul.f32.gmra.mxu0 %v330
    %v364 = vpop.f32.mrf.mxu0
    %v365 = vadd.f32 0.0, %v364
    %366 = vdwg.mxu0
    %s367 = scalar_lea.vmem %s2, 48
    %v368 = vld [vmem:[%s367] sm:$0xff]
    %v369 = vld [vmem:[%s367 + $0x8] sm:$0xff]
    %v370 = vld [vmem:[%s367 + $0x10] sm:$0xff]
    %v371 = vld [vmem:[%s367 + $0x18] sm:$0x3f]
    %v372 = vld [vmem:[%s367 + $0x20] sm:$0x3f]
    %v373 = vld [vmem:[%s367 + $0x28] sm:$0x3f]
    %v375 = vsel %vm148, %v350, 0
    %v378 = vsel %vm148, %v353, 0
    %v381 = vsel %vm148, %v356, 0
    %v384 = vsel %vm148, %v359, 0
    %v387 = vsel %vm148, %v362, 0
    %v390 = vsel %vm148, %v365, 0
    %v393 = vsel %vm167, %v371, 0
    %v396 = vsel %vm167, %v372, 0
    %v399 = vsel %vm167, %v373, 0
    %401 = vmatpush.msra.mxu0 0.0
    %402 = vmatpush.msra.mxu0 0.0
    %403 = vmatpush.msra.mxu0 0.0
    %404 = vmatpush.msra.mxu0 0.0
    %405 = vmatpush.msra.mxu0 0.0
    %406 = vmatpush.msra.mxu0 0.0
    %407 = vmatpush.msra.mxu0 0.0
    %408 = vmatpush.msra.mxu0 0.0
    %409 = vmatpush.msra.mxu0 0.0
    %410 = vmatpush.msra.mxu0 0.0
    %411 = vmatpush.msra.mxu0 0.0
    %412 = vmatpush.msra.mxu0 0.0
    %413 = vmatpush.msra.mxu0 0.0
    %414 = vmatpush.msra.mxu0 0.0
    %415 = vmatpush.msra.mxu0 %v393
    %416 = vmatpush.msra.mxu0 %v368
    %417 = vmatmul.f32.gmra.mxu0 %v375
    %v418 = vpop.f32.mrf.mxu0
    %v419 = vadd.f32 0.0, %v418
    %420 = vmatmul.f32.gmra.mxu0 %v378
    %v421 = vpop.f32.mrf.mxu0
    %v422 = vadd.f32 0.0, %v421
    %423 = vmatmul.f32.gmra.mxu0 %v381
    %v424 = vpop.f32.mrf.mxu0
    %v425 = vadd.f32 0.0, %v424
    %426 = vmatmul.f32.gmra.mxu0 %v384
    %v427 = vpop.f32.mrf.mxu0
    %v428 = vadd.f32 0.0, %v427
    %429 = vmatmul.f32.gmra.mxu0 %v387
    %v430 = vpop.f32.mrf.mxu0
    %v431 = vadd.f32 0.0, %v430
    %432 = vmatmul.f32.gmra.mxu0 %v390
    %v433 = vpop.f32.mrf.mxu0
    %v434 = vadd.f32 0.0, %v433
    %435 = vdwg.mxu0
    %436 = vmatpush.msra.mxu0 0.0
    %437 = vmatpush.msra.mxu0 0.0
    %438 = vmatpush.msra.mxu0 0.0
    %439 = vmatpush.msra.mxu0 0.0
    %440 = vmatpush.msra.mxu0 0.0
    %441 = vmatpush.msra.mxu0 0.0
    %442 = vmatpush.msra.mxu0 0.0
    %443 = vmatpush.msra.mxu0 0.0
    %444 = vmatpush.msra.mxu0 0.0
    %445 = vmatpush.msra.mxu0 0.0
    %446 = vmatpush.msra.mxu0 0.0
    %447 = vmatpush.msra.mxu0 0.0
    %448 = vmatpush.msra.mxu0 0.0
    %449 = vmatpush.msra.mxu0 0.0
    %450 = vmatpush.msra.mxu0 %v396
    %451 = vmatpush.msra.mxu0 %v369
    %452 = vmatmul.f32.gmra.mxu0 %v375
    %v453 = vpop.f32.mrf.mxu0
    %v454 = vadd.f32 0.0, %v453
    %455 = vmatmul.f32.gmra.mxu0 %v378
    %v456 = vpop.f32.mrf.mxu0
    %v457 = vadd.f32 0.0, %v456
    %458 = vmatmul.f32.gmra.mxu0 %v381
    %v459 = vpop.f32.mrf.mxu0
    %v460 = vadd.f32 0.0, %v459
    %461 = vmatmul.f32.gmra.mxu0 %v384
    %v462 = vpop.f32.mrf.mxu0
    %v463 = vadd.f32 0.0, %v462
    %464 = vmatmul.f32.gmra.mxu0 %v387
    %v465 = vpop.f32.mrf.mxu0
    %v466 = vadd.f32 0.0, %v465
    %467 = vmatmul.f32.gmra.mxu0 %v390
    %v468 = vpop.f32.mrf.mxu0
    %v469 = vadd.f32 0.0, %v468
    %470 = vdwg.mxu0
    %471 = vmatpush.msra.mxu0 0.0
    %472 = vmatpush.msra.mxu0 0.0
    %473 = vmatpush.msra.mxu0 0.0
    %474 = vmatpush.msra.mxu0 0.0
    %475 = vmatpush.msra.mxu0 0.0
    %476 = vmatpush.msra.mxu0 0.0
    %477 = vmatpush.msra.mxu0 0.0
    %478 = vmatpush.msra.mxu0 0.0
    %479 = vmatpush.msra.mxu0 0.0
    %480 = vmatpush.msra.mxu0 0.0
    %481 = vmatpush.msra.mxu0 0.0
    %482 = vmatpush.msra.mxu0 0.0
    %483 = vmatpush.msra.mxu0 0.0
    %484 = vmatpush.msra.mxu0 0.0
    %485 = vmatpush.msra.mxu0 %v399
    %486 = vmatpush.msra.mxu0 %v370
    %487 = vmatmul.f32.gmra.mxu0 %v375
    %v488 = vpop.f32.mrf.mxu0
    %v489 = vadd.f32 0.0, %v488
    %490 = vmatmul.f32.gmra.mxu0 %v378
    %v491 = vpop.f32.mrf.mxu0
    %v492 = vadd.f32 0.0, %v491
    %493 = vmatmul.f32.gmra.mxu0 %v381
    %v494 = vpop.f32.mrf.mxu0
    %v495 = vadd.f32 0.0, %v494
    %496 = vmatmul.f32.gmra.mxu0 %v384
    %v497 = vpop.f32.mrf.mxu0
    %v498 = vadd.f32 0.0, %v497
    %499 = vmatmul.f32.gmra.mxu0 %v387
    %v500 = vpop.f32.mrf.mxu0
    %v501 = vadd.f32 0.0, %v500
    %502 = vmatmul.f32.gmra.mxu0 %v390
    %v503 = vpop.f32.mrf.mxu0
    %v504 = vadd.f32 0.0, %v503
    %505 = vdwg.mxu0
    %v506 = vadd.f32 %v289, %v419
    %v507 = vadd.f32 %v290, %v454
    %v508 = vadd.f32 %v291, %v489
    %v509 = vadd.f32 %v292, %v422
    %v510 = vadd.f32 %v293, %v457
    %v511 = vadd.f32 %v294, %v492
    %v512 = vadd.f32 %v295, %v425
    %v513 = vadd.f32 %v296, %v460
    %v514 = vadd.f32 %v297, %v495
    %v515 = vadd.f32 %v298, %v428
    %v516 = vadd.f32 %v299, %v463
    %v517 = vadd.f32 %v300, %v498
    %v518 = vadd.f32 %v301, %v431
    %v519 = vadd.f32 %v302, %v466
    %v520 = vadd.f32 %v303, %v501
    %v521 = vadd.f32 %v304, %v434
    %v522 = vadd.f32 %v305, %v469
    %v523 = vadd.f32 %v306, %v504
    %s524 = scalar_lea.vmem %s1, 96
    %v525 = vld [vmem:[%s524] sm:$0xff]
    %v526 = vld [vmem:[%s524 + $0x8] sm:$0xff]
    %v527 = vld [vmem:[%s524 + $0x10] sm:$0xff]
    %v528 = vld [vmem:[%s524 + $0x18] sm:$0xff]
    %v529 = vld [vmem:[%s524 + $0x20] sm:$0xff]
    %v530 = vld [vmem:[%s524 + $0x28] sm:$0xff]
    %v532 = vsel %vm88, %v525, 0
    %v535 = vsel %vm88, %v526, 0
    %v538 = vsel %vm88, %v527, 0
    %v541 = vsel %vm88, %v528, 0
    %v544 = vsel %vm88, %v529, 0
    %v547 = vsel %vm88, %v530, 0
    %549 = vmatpush.msra.mxu0 0.0
    %550 = vmatpush.msra.mxu0 0.0
    %551 = vmatpush.msra.mxu0 0.0
    %552 = vmatpush.msra.mxu0 0.0
    %553 = vmatpush.msra.mxu0 0.0
    %554 = vmatpush.msra.mxu0 0.0
    %555 = vmatpush.msra.mxu0 0.0
    %556 = vmatpush.msra.mxu0 0.0
    %557 = vmatpush.msra.mxu0 0.0
    %558 = vmatpush.msra.mxu0 %v80
    %559 = vmatpush.msra.mxu0 %v79
    %560 = vmatpush.msra.mxu0 %v78
    %561 = vmatpush.msra.mxu0 %v77
    %562 = vmatpush.msra.mxu0 %v76
    %563 = vmatpush.msra.mxu0 %v75
    %564 = vmatpush.msra.mxu0 %v74
    %565 = vmatmul.f32.gmra.mxu0 %v532
    %v566 = vpop.f32.mrf.mxu0
    %v567 = vadd.f32 0.0, %v566
    %568 = vmatmul.f32.gmra.mxu0 %v535
    %v569 = vpop.f32.mrf.mxu0
    %v570 = vadd.f32 0.0, %v569
    %571 = vmatmul.f32.gmra.mxu0 %v538
    %v572 = vpop.f32.mrf.mxu0
    %v573 = vadd.f32 0.0, %v572
    %574 = vmatmul.f32.gmra.mxu0 %v541
    %v575 = vpop.f32.mrf.mxu0
    %v576 = vadd.f32 0.0, %v575
    %577 = vmatmul.f32.gmra.mxu0 %v544
    %v578 = vpop.f32.mrf.mxu0
    %v579 = vadd.f32 0.0, %v578
    %580 = vmatmul.f32.gmra.mxu0 %v547
    %v581 = vpop.f32.mrf.mxu0
    %v582 = vadd.f32 0.0, %v581
    %583 = vdwg.mxu0
    %s584 = scalar_lea.vmem %s2, 96
    %v585 = vld [vmem:[%s584] sm:$0xff]
    %v586 = vld [vmem:[%s584 + $0x8] sm:$0xff]
    %v587 = vld [vmem:[%s584 + $0x10] sm:$0xff]
    %v588 = vld [vmem:[%s584 + $0x18] sm:$0x3f]
    %v589 = vld [vmem:[%s584 + $0x20] sm:$0x3f]
    %v590 = vld [vmem:[%s584 + $0x28] sm:$0x3f]
    %v592 = vsel %vm148, %v567, 0
    %v595 = vsel %vm148, %v570, 0
    %v598 = vsel %vm148, %v573, 0
    %v601 = vsel %vm148, %v576, 0
    %v604 = vsel %vm148, %v579, 0
    %v607 = vsel %vm148, %v582, 0
    %v610 = vsel %vm167, %v588, 0
    %v613 = vsel %vm167, %v589, 0
    %v616 = vsel %vm167, %v590, 0
    %618 = vmatpush.msra.mxu0 0.0
    %619 = vmatpush.msra.mxu0 0.0
    %620 = vmatpush.msra.mxu0 0.0
    %621 = vmatpush.msra.mxu0 0.0
    %622 = vmatpush.msra.mxu0 0.0
    %623 = vmatpush.msra.mxu0 0.0
    %624 = vmatpush.msra.mxu0 0.0
    %625 = vmatpush.msra.mxu0 0.0
    %626 = vmatpush.msra.mxu0 0.0
    %627 = vmatpush.msra.mxu0 0.0
    %628 = vmatpush.msra.mxu0 0.0
    %629 = vmatpush.msra.mxu0 0.0
    %630 = vmatpush.msra.mxu0 0.0
    %631 = vmatpush.msra.mxu0 0.0
    %632 = vmatpush.msra.mxu0 %v610
    %633 = vmatpush.msra.mxu0 %v585
    %634 = vmatmul.f32.gmra.mxu0 %v592
    %v635 = vpop.f32.mrf.mxu0
    %v636 = vadd.f32 0.0, %v635
    %637 = vmatmul.f32.gmra.mxu0 %v595
    %v638 = vpop.f32.mrf.mxu0
    %v639 = vadd.f32 0.0, %v638
    %640 = vmatmul.f32.gmra.mxu0 %v598
    %v641 = vpop.f32.mrf.mxu0
    %v642 = vadd.f32 0.0, %v641
    %643 = vmatmul.f32.gmra.mxu0 %v601
    %v644 = vpop.f32.mrf.mxu0
    %v645 = vadd.f32 0.0, %v644
    %646 = vmatmul.f32.gmra.mxu0 %v604
    %v647 = vpop.f32.mrf.mxu0
    %v648 = vadd.f32 0.0, %v647
    %649 = vmatmul.f32.gmra.mxu0 %v607
    %v650 = vpop.f32.mrf.mxu0
    %v651 = vadd.f32 0.0, %v650
    %652 = vdwg.mxu0
    %653 = vmatpush.msra.mxu0 0.0
    %654 = vmatpush.msra.mxu0 0.0
    %655 = vmatpush.msra.mxu0 0.0
    %656 = vmatpush.msra.mxu0 0.0
    %657 = vmatpush.msra.mxu0 0.0
    %658 = vmatpush.msra.mxu0 0.0
    %659 = vmatpush.msra.mxu0 0.0
    %660 = vmatpush.msra.mxu0 0.0
    %661 = vmatpush.msra.mxu0 0.0
    %662 = vmatpush.msra.mxu0 0.0
    %663 = vmatpush.msra.mxu0 0.0
    %664 = vmatpush.msra.mxu0 0.0
    %665 = vmatpush.msra.mxu0 0.0
    %666 = vmatpush.msra.mxu0 0.0
    %667 = vmatpush.msra.mxu0 %v613
    %668 = vmatpush.msra.mxu0 %v586
    %669 = vmatmul.f32.gmra.mxu0 %v592
    %v670 = vpop.f32.mrf.mxu0
    %v671 = vadd.f32 0.0, %v670
    %672 = vmatmul.f32.gmra.mxu0 %v595
    %v673 = vpop.f32.mrf.mxu0
    %v674 = vadd.f32 0.0, %v673
    %675 = vmatmul.f32.gmra.mxu0 %v598
    %v676 = vpop.f32.mrf.mxu0
    %v677 = vadd.f32 0.0, %v676
    %678 = vmatmul.f32.gmra.mxu0 %v601
    %v679 = vpop.f32.mrf.mxu0
    %v680 = vadd.f32 0.0, %v679
    %681 = vmatmul.f32.gmra.mxu0 %v604
    %v682 = vpop.f32.mrf.mxu0
    %v683 = vadd.f32 0.0, %v682
    %684 = vmatmul.f32.gmra.mxu0 %v607
    %v685 = vpop.f32.mrf.mxu0
    %v686 = vadd.f32 0.0, %v685
    %687 = vdwg.mxu0
    %688 = vmatpush.msra.mxu0 0.0
    %689 = vmatpush.msra.mxu0 0.0
    %690 = vmatpush.msra.mxu0 0.0
    %691 = vmatpush.msra.mxu0 0.0
    %692 = vmatpush.msra.mxu0 0.0
    %693 = vmatpush.msra.mxu0 0.0
    %694 = vmatpush.msra.mxu0 0.0
    %695 = vmatpush.msra.mxu0 0.0
    %696 = vmatpush.msra.mxu0 0.0
    %697 = vmatpush.msra.mxu0 0.0
    %698 = vmatpush.msra.mxu0 0.0
    %699 = vmatpush.msra.mxu0 0.0
    %700 = vmatpush.msra.mxu0 0.0
    %701 = vmatpush.msra.mxu0 0.0
    %702 = vmatpush.msra.mxu0 %v616
    %703 = vmatpush.msra.mxu0 %v587
    %704 = vmatmul.f32.gmra.mxu0 %v592
    %v705 = vpop.f32.mrf.mxu0
    %v706 = vadd.f32 0.0, %v705
    %707 = vmatmul.f32.gmra.mxu0 %v595
    %v708 = vpop.f32.mrf.mxu0
    %v709 = vadd.f32 0.0, %v708
    %710 = vmatmul.f32.gmra.mxu0 %v598
    %v711 = vpop.f32.mrf.mxu0
    %v712 = vadd.f32 0.0, %v711
    %713 = vmatmul.f32.gmra.mxu0 %v601
    %v714 = vpop.f32.mrf.mxu0
    %v715 = vadd.f32 0.0, %v714
    %716 = vmatmul.f32.gmra.mxu0 %v604
    %v717 = vpop.f32.mrf.mxu0
    %v718 = vadd.f32 0.0, %v717
    %719 = vmatmul.f32.gmra.mxu0 %v607
    %v720 = vpop.f32.mrf.mxu0
    %v721 = vadd.f32 0.0, %v720
    %722 = vdwg.mxu0
    %v723 = vadd.f32 %v506, %v636
    %v724 = vadd.f32 %v507, %v671
    %v725 = vadd.f32 %v508, %v706
    %v726 = vadd.f32 %v509, %v639
    %v727 = vadd.f32 %v510, %v674
    %v728 = vadd.f32 %v511, %v709
    %v729 = vadd.f32 %v512, %v642
    %v730 = vadd.f32 %v513, %v677
    %v731 = vadd.f32 %v514, %v712
    %v732 = vadd.f32 %v515, %v645
    %v733 = vadd.f32 %v516, %v680
    %v734 = vadd.f32 %v517, %v715
    %v735 = vadd.f32 %v518, %v648
    %v736 = vadd.f32 %v519, %v683
    %v737 = vadd.f32 %v520, %v718
    %v738 = vadd.f32 %v521, %v651
    %v739 = vadd.f32 %v522, %v686
    %v740 = vadd.f32 %v523, %v721
    %v741 = vld [vmem:[%s4] sm:$0xff]
    %v742 = vld [vmem:[%s4 + $0x8] sm:$0xff]
    %v743 = vld [vmem:[%s4 + $0x10] sm:$0xff]
    %vm744 = vcmask 392192
    %v746 = vsel %vm744, %v741, 0
    %v749 = vsel %vm744, %v742, 0
    %v752 = vsel %vm744, %v743, 0
    %754 = vmatpush.msra.mxu0 0.0
    %755 = vmatpush.msra.mxu0 0.0
    %756 = vmatpush.msra.mxu0 0.0
    %757 = vmatpush.msra.mxu0 0.0
    %758 = vmatpush.msra.mxu0 0.0
    %759 = vmatpush.msra.mxu0 0.0
    %760 = vmatpush.msra.mxu0 0.0
    %761 = vmatpush.msra.mxu0 0.0
    %762 = vmatpush.msra.mxu0 0.0
    %763 = vmatpush.msra.mxu0 0.0
    %764 = vmatpush.msra.mxu0 %v738
    %765 = vmatpush.msra.mxu0 %v735
    %766 = vmatpush.msra.mxu0 %v732
    %767 = vmatpush.msra.mxu0 %v729
    %768 = vmatpush.msra.mxu0 %v726
    %769 = vmatpush.msra.mxu0 %v723
    %770 = vmatmul.f32.gmra.mxu0 %v746
    %v771 = vpop.f32.mrf.mxu0
    %v772 = vadd.f32 0.0, %v771
    %773 = vmatmul.f32.gmra.mxu0 %v749
    %v774 = vpop.f32.mrf.mxu0
    %v775 = vadd.f32 0.0, %v774
    %776 = vmatmul.f32.gmra.mxu0 %v752
    %v777 = vpop.f32.mrf.mxu0
    %v778 = vadd.f32 0.0, %v777
    %779 = vdwg.mxu0
    %780 = vmatpush.msra.mxu0 0.0
    %781 = vmatpush.msra.mxu0 0.0
    %782 = vmatpush.msra.mxu0 0.0
    %783 = vmatpush.msra.mxu0 0.0
    %784 = vmatpush.msra.mxu0 0.0
    %785 = vmatpush.msra.mxu0 0.0
    %786 = vmatpush.msra.mxu0 0.0
    %787 = vmatpush.msra.mxu0 0.0
    %788 = vmatpush.msra.mxu0 0.0
    %789 = vmatpush.msra.mxu0 0.0
    %790 = vmatpush.msra.mxu0 %v739
    %791 = vmatpush.msra.mxu0 %v736
    %792 = vmatpush.msra.mxu0 %v733
    %793 = vmatpush.msra.mxu0 %v730
    %794 = vmatpush.msra.mxu0 %v727
    %795 = vmatpush.msra.mxu0 %v724
    %796 = vmatmul.f32.gmra.mxu0 %v746
    %v797 = vpop.f32.mrf.mxu0
    %v798 = vadd.f32 0.0, %v797
    %799 = vmatmul.f32.gmra.mxu0 %v749
    %v800 = vpop.f32.mrf.mxu0
    %v801 = vadd.f32 0.0, %v800
    %802 = vmatmul.f32.gmra.mxu0 %v752
    %v803 = vpop.f32.mrf.mxu0
    %v804 = vadd.f32 0.0, %v803
    %805 = vdwg.mxu0
    %806 = vmatpush.msra.mxu0 0.0
    %807 = vmatpush.msra.mxu0 0.0
    %808 = vmatpush.msra.mxu0 0.0
    %809 = vmatpush.msra.mxu0 0.0
    %810 = vmatpush.msra.mxu0 0.0
    %811 = vmatpush.msra.mxu0 0.0
    %812 = vmatpush.msra.mxu0 0.0
    %813 = vmatpush.msra.mxu0 0.0
    %814 = vmatpush.msra.mxu0 0.0
    %815 = vmatpush.msra.mxu0 0.0
    %816 = vmatpush.msra.mxu0 %v740
    %817 = vmatpush.msra.mxu0 %v737
    %818 = vmatpush.msra.mxu0 %v734
    %819 = vmatpush.msra.mxu0 %v731
    %820 = vmatpush.msra.mxu0 %v728
    %821 = vmatpush.msra.mxu0 %v725
    %822 = vmatmul.f32.gmra.mxu0 %v746
    %v823 = vpop.f32.mrf.mxu0
    %v824 = vadd.f32 0.0, %v823
    %825 = vmatmul.f32.gmra.mxu0 %v749
    %v826 = vpop.f32.mrf.mxu0
    %v827 = vadd.f32 0.0, %v826
    %828 = vmatmul.f32.gmra.mxu0 %v752
    %v829 = vpop.f32.mrf.mxu0
    %v830 = vadd.f32 0.0, %v829
    %831 = vdwg.mxu0
    %s832 = scalar_lea.vmem %s4, 24
    %v833 = vld [vmem:[%s832] sm:$0xff]
    %v834 = vld [vmem:[%s832 + $0x8] sm:$0xff]
    %v835 = vld [vmem:[%s832 + $0x10] sm:$0xff]
    %v837 = vsel %vm744, %v833, 0
    %v840 = vsel %vm744, %v834, 0
    %v843 = vsel %vm744, %v835, 0
    %845 = vmatpush.msra.mxu0 0.0
    %846 = vmatpush.msra.mxu0 0.0
    %847 = vmatpush.msra.mxu0 0.0
    %848 = vmatpush.msra.mxu0 0.0
    %849 = vmatpush.msra.mxu0 0.0
    %850 = vmatpush.msra.mxu0 0.0
    %851 = vmatpush.msra.mxu0 0.0
    %852 = vmatpush.msra.mxu0 0.0
    %853 = vmatpush.msra.mxu0 0.0
    %854 = vmatpush.msra.mxu0 0.0
    %855 = vmatpush.msra.mxu0 %v738
    %856 = vmatpush.msra.mxu0 %v735
    %857 = vmatpush.msra.mxu0 %v732
    %858 = vmatpush.msra.mxu0 %v729
    %859 = vmatpush.msra.mxu0 %v726
    %860 = vmatpush.msra.mxu0 %v723
    %861 = vmatmul.f32.gmra.mxu0 %v837
    %v862 = vpop.f32.mrf.mxu0
    %v863 = vadd.f32 0.0, %v862
    %864 = vmatmul.f32.gmra.mxu0 %v840
    %v865 = vpop.f32.mrf.mxu0
    %v866 = vadd.f32 0.0, %v865
    %867 = vmatmul.f32.gmra.mxu0 %v843
    %v868 = vpop.f32.mrf.mxu0
    %v869 = vadd.f32 0.0, %v868
    %870 = vdwg.mxu0
    %871 = vmatpush.msra.mxu0 0.0
    %872 = vmatpush.msra.mxu0 0.0
    %873 = vmatpush.msra.mxu0 0.0
    %874 = vmatpush.msra.mxu0 0.0
    %875 = vmatpush.msra.mxu0 0.0
    %876 = vmatpush.msra.mxu0 0.0
    %877 = vmatpush.msra.mxu0 0.0
    %878 = vmatpush.msra.mxu0 0.0
    %879 = vmatpush.msra.mxu0 0.0
    %880 = vmatpush.msra.mxu0 0.0
    %881 = vmatpush.msra.mxu0 %v739
    %882 = vmatpush.msra.mxu0 %v736
    %883 = vmatpush.msra.mxu0 %v733
    %884 = vmatpush.msra.mxu0 %v730
    %885 = vmatpush.msra.mxu0 %v727
    %886 = vmatpush.msra.mxu0 %v724
    %887 = vmatmul.f32.gmra.mxu0 %v837
    %v888 = vpop.f32.mrf.mxu0
    %v889 = vadd.f32 0.0, %v888
    %890 = vmatmul.f32.gmra.mxu0 %v840
    %v891 = vpop.f32.mrf.mxu0
    %v892 = vadd.f32 0.0, %v891
    %893 = vmatmul.f32.gmra.mxu0 %v843
    %v894 = vpop.f32.mrf.mxu0
    %v895 = vadd.f32 0.0, %v894
    %896 = vdwg.mxu0
    %897 = vmatpush.msra.mxu0 0.0
    %898 = vmatpush.msra.mxu0 0.0
    %899 = vmatpush.msra.mxu0 0.0
    %900 = vmatpush.msra.mxu0 0.0
    %901 = vmatpush.msra.mxu0 0.0
    %902 = vmatpush.msra.mxu0 0.0
    %903 = vmatpush.msra.mxu0 0.0
    %904 = vmatpush.msra.mxu0 0.0
    %905 = vmatpush.msra.mxu0 0.0
    %906 = vmatpush.msra.mxu0 0.0
    %907 = vmatpush.msra.mxu0 %v740
    %908 = vmatpush.msra.mxu0 %v737
    %909 = vmatpush.msra.mxu0 %v734
    %910 = vmatpush.msra.mxu0 %v731
    %911 = vmatpush.msra.mxu0 %v728
    %912 = vmatpush.msra.mxu0 %v725
    %913 = vmatmul.f32.gmra.mxu0 %v837
    %v914 = vpop.f32.mrf.mxu0
    %v915 = vadd.f32 0.0, %v914
    %916 = vmatmul.f32.gmra.mxu0 %v840
    %v917 = vpop.f32.mrf.mxu0
    %v918 = vadd.f32 0.0, %v917
    %919 = vmatmul.f32.gmra.mxu0 %v843
    %v920 = vpop.f32.mrf.mxu0
    %v921 = vadd.f32 0.0, %v920
    %922 = vdwg.mxu0
    %v923 = vmax.f32 %v772, %v863
    %v924 = vmax.f32 %v798, %v889
    %v925 = vmax.f32 %v824, %v915
    %v926 = vmax.f32 %v775, %v866
    %v927 = vmax.f32 %v801, %v892
    %v928 = vmax.f32 %v827, %v918
    %v929 = vmax.f32 %v778, %v869
    %v930 = vmax.f32 %v804, %v895
    %v931 = vmax.f32 %v830, %v921
    %v932 = vld [vmem:[%s5] sm:$0xff]
    %v933 = vld [vmem:[%s5 + $0x8] sm:$0xff]
    %v934 = vld [vmem:[%s5 + $0x10] sm:$0xff]
    %v935 = vld [vmem:[%s5 + $0x18] sm:$0xff]
    %v936 = vld [vmem:[%s5 + $0x20] sm:$0xff]
    %v937 = vld [vmem:[%s5 + $0x28] sm:$0xff]
    %v938 = vld [vmem:[%s5 + $0x30] sm:$0xff]
    %v939 = vld [vmem:[%s5 + $0x38] sm:$0xff]
    %v940 = vld [vmem:[%s5 + $0x40] sm:$0xff]
    %v941 = vld [vmem:[%s5 + $0x48] sm:$0xff]
    %v942 = vld [vmem:[%s5 + $0x50] sm:$0xff]
    %v943 = vld [vmem:[%s5 + $0x58] sm:$0xff]
    %v944 = vld [vmem:[%s5 + $0x60] sm:$0xff]
    %v945 = vld [vmem:[%s5 + $0x68] sm:$0xff]
    %v946 = vld [vmem:[%s5 + $0x70] sm:$0xff]
    %v947 = vld [vmem:[%s5 + $0x78] sm:$0xff]
    %v948 = vld [vmem:[%s5 + $0x80] sm:$0xff]
    %v949 = vld [vmem:[%s5 + $0x88] sm:$0xff]
    %v950 = vld [vmem:[%s5 + $0x90] sm:$0xff]
    %v951 = vld [vmem:[%s5 + $0x98] sm:$0xff]
    %v952 = vld [vmem:[%s5 + $0xa0] sm:$0xff]
    %v953 = vld [vmem:[%s5 + $0xa8] sm:$0xff]
    %v954 = vld [vmem:[%s5 + $0xb0] sm:$0xff]
    %v955 = vld [vmem:[%s5 + $0xb8] sm:$0xff]
    %v956 = vld [vmem:[%s5 + $0xc0] sm:$0xff]
    %v957 = vld [vmem:[%s5 + $0xc8] sm:$0xff]
    %v958 = vld [vmem:[%s5 + $0xd0] sm:$0xff]
    %v959 = vld [vmem:[%s5 + $0xd8] sm:$0xff]
    %v960 = vld [vmem:[%s5 + $0xe0] sm:$0xff]
    %v961 = vld [vmem:[%s5 + $0xe8] sm:$0xff]
    %v962 = vld [vmem:[%s5 + $0xf0] sm:$0xff]
    %v963 = vld [vmem:[%s5 + $0xf8] sm:$0xff]
    %v964 = vld [vmem:[%s5 + $0x100] sm:$0xff]
    %v965 = vld [vmem:[%s5 + $0x108] sm:$0xff]
    %v966 = vld [vmem:[%s5 + $0x110] sm:$0xff]
    %v967 = vld [vmem:[%s5 + $0x118] sm:$0xff]
    %v968 = vld [vmem:[%s5 + $0x120] sm:$0xff]
    %v969 = vld [vmem:[%s5 + $0x128] sm:$0xff]
    %v970 = vld [vmem:[%s5 + $0x130] sm:$0xff]
    %v971 = vld [vmem:[%s5 + $0x138] sm:$0xff]
    %v972 = vld [vmem:[%s5 + $0x140] sm:$0xff]
    %v973 = vld [vmem:[%s5 + $0x148] sm:$0xff]
    %v974 = vld [vmem:[%s5 + $0x150] sm:$0xff]
    %v975 = vld [vmem:[%s5 + $0x158] sm:$0xff]
    %v976 = vld [vmem:[%s5 + $0x160] sm:$0xff]
    %v977 = vld [vmem:[%s5 + $0x168] sm:$0xff]
    %v978 = vld [vmem:[%s5 + $0x170] sm:$0xff]
    %v979 = vld [vmem:[%s5 + $0x178] sm:$0xff]
    %v980 = vld [vmem:[%s5 + $0x180] sm:$0xff]
    %v981 = vld [vmem:[%s5 + $0x188] sm:$0xff]
    %v982 = vld [vmem:[%s5 + $0x190] sm:$0xff]
    %v983 = vld [vmem:[%s5 + $0x198] sm:$0xff]
    %v984 = vld [vmem:[%s5 + $0x1a0] sm:$0xff]
    %v985 = vld [vmem:[%s5 + $0x1a8] sm:$0xff]
    %v986 = vld [vmem:[%s5 + $0x1b0] sm:$0xff]
    %v987 = vld [vmem:[%s5 + $0x1b8] sm:$0xff]
    %v988 = vld [vmem:[%s5 + $0x1c0] sm:$0xff]
    %v989 = vld [vmem:[%s5 + $0x1c8] sm:$0xff]
    %v990 = vld [vmem:[%s5 + $0x1d0] sm:$0xff]
    %v991 = vld [vmem:[%s5 + $0x1d8] sm:$0xff]
    %v992 = vld [vmem:[%s5 + $0x1e0] sm:$0xff]
    %v993 = vld [vmem:[%s5 + $0x1e8] sm:$0xff]
    %v994 = vld [vmem:[%s5 + $0x1f0] sm:$0xff]
    %v995 = vld [vmem:[%s5 + $0x1f8] sm:$0xff]
    %v996 = vld [vmem:[%s5 + $0x200] sm:$0xff]
    %v997 = vld [vmem:[%s5 + $0x208] sm:$0xff]
    %v998 = vld [vmem:[%s5 + $0x210] sm:$0xff]
    %v999 = vld [vmem:[%s5 + $0x218] sm:$0xff]
    %v1000 = vld [vmem:[%s5 + $0x220] sm:$0xff]
    %v1001 = vld [vmem:[%s5 + $0x228] sm:$0xff]
    %v1002 = vld [vmem:[%s5 + $0x230] sm:$0xff]
    %v1003 = vld [vmem:[%s5 + $0x238] sm:$0xff]
    %v1004 = vld [vmem:[%s5 + $0x240] sm:$0xff]
    %v1005 = vld [vmem:[%s5 + $0x248] sm:$0xff]
    %v1006 = vld [vmem:[%s5 + $0x250] sm:$0xff]
    %v1007 = vld [vmem:[%s5 + $0x258] sm:$0xff]
    %v1008 = vld [vmem:[%s5 + $0x260] sm:$0xff]
    %v1009 = vld [vmem:[%s5 + $0x268] sm:$0xff]
    %v1010 = vld [vmem:[%s5 + $0x270] sm:$0xff]
    %v1011 = vld [vmem:[%s5 + $0x278] sm:$0xff]
    %v1012 = vld [vmem:[%s5 + $0x280] sm:$0xff]
    %v1013 = vld [vmem:[%s5 + $0x288] sm:$0xff]
    %v1014 = vld [vmem:[%s5 + $0x290] sm:$0xff]
    %v1015 = vld [vmem:[%s5 + $0x298] sm:$0xff]
    %v1016 = vld [vmem:[%s5 + $0x2a0] sm:$0xff]
    %v1017 = vld [vmem:[%s5 + $0x2a8] sm:$0xff]
    %v1018 = vld [vmem:[%s5 + $0x2b0] sm:$0xff]
    %v1019 = vld [vmem:[%s5 + $0x2b8] sm:$0xff]
    %v1020 = vld [vmem:[%s5 + $0x2c0] sm:$0xff]
    %v1021 = vld [vmem:[%s5 + $0x2c8] sm:$0xff]
    %v1022 = vld [vmem:[%s5 + $0x2d0] sm:$0xff]
    %v1023 = vld [vmem:[%s5 + $0x2d8] sm:$0xff]
    %v1024 = vld [vmem:[%s5 + $0x2e0] sm:$0xff]
    %v1025 = vld [vmem:[%s5 + $0x2e8] sm:$0xff]
    %v1026 = vld [vmem:[%s5 + $0x2f0] sm:$0xff]
    %v1027 = vld [vmem:[%s5 + $0x2f8] sm:$0xff]
    %1028 = vmatpush.msra.mxu0 %v962
    %1029 = vmatpush.msra.mxu0 %v960
    %1030 = vmatpush.msra.mxu0 %v958
    %1031 = vmatpush.msra.mxu0 %v956
    %1032 = vmatpush.msra.mxu0 %v954
    %1033 = vmatpush.msra.mxu0 %v952
    %1034 = vmatpush.msra.mxu0 %v950
    %1035 = vmatpush.msra.mxu0 %v948
    %1036 = vmatpush.msra.mxu0 %v946
    %1037 = vmatpush.msra.mxu0 %v944
    %1038 = vmatpush.msra.mxu0 %v942
    %1039 = vmatpush.msra.mxu0 %v940
    %1040 = vmatpush.msra.mxu0 %v938
    %1041 = vmatpush.msra.mxu0 %v936
    %1042 = vmatpush.msra.mxu0 %v934
    %1043 = vmatpush.msra.mxu0 %v932
    %1044 = vmatmul.f32.gmra.mxu0 %v923
    %v1045 = vpop.f32.mrf.mxu0
    %v1046 = vadd.f32 0.0, %v1045
    %1047 = vmatmul.f32.gmra.mxu0 %v926
    %v1048 = vpop.f32.mrf.mxu0
    %v1049 = vadd.f32 0.0, %v1048
    %1050 = vmatmul.f32.gmra.mxu0 %v929
    %v1051 = vpop.f32.mrf.mxu0
    %v1052 = vadd.f32 0.0, %v1051
    %1053 = vdwg.mxu0
    %1054 = vmatpush.msra.mxu0 %v994
    %1055 = vmatpush.msra.mxu0 %v992
    %1056 = vmatpush.msra.mxu0 %v990
    %1057 = vmatpush.msra.mxu0 %v988
    %1058 = vmatpush.msra.mxu0 %v986
    %1059 = vmatpush.msra.mxu0 %v984
    %1060 = vmatpush.msra.mxu0 %v982
    %1061 = vmatpush.msra.mxu0 %v980
    %1062 = vmatpush.msra.mxu0 %v978
    %1063 = vmatpush.msra.mxu0 %v976
    %1064 = vmatpush.msra.mxu0 %v974
    %1065 = vmatpush.msra.mxu0 %v972
    %1066 = vmatpush.msra.mxu0 %v970
    %1067 = vmatpush.msra.mxu0 %v968
    %1068 = vmatpush.msra.mxu0 %v966
    %1069 = vmatpush.msra.mxu0 %v964
    %1070 = vmatmul.f32.gmra.mxu0 %v924
    %v1071 = vpop.f32.mrf.mxu0
    %v1072 = vadd.f32 %v1046, %v1071
    %1073 = vmatmul.f32.gmra.mxu0 %v927
    %v1074 = vpop.f32.mrf.mxu0
    %v1075 = vadd.f32 %v1049, %v1074
    %1076 = vmatmul.f32.gmra.mxu0 %v930
    %v1077 = vpop.f32.mrf.mxu0
    %v1078 = vadd.f32 %v1052, %v1077
    %1079 = vdwg.mxu0
    %1080 = vmatpush.msra.mxu0 %v1026
    %1081 = vmatpush.msra.mxu0 %v1024
    %1082 = vmatpush.msra.mxu0 %v1022
    %1083 = vmatpush.msra.mxu0 %v1020
    %1084 = vmatpush.msra.mxu0 %v1018
    %1085 = vmatpush.msra.mxu0 %v1016
    %1086 = vmatpush.msra.mxu0 %v1014
    %1087 = vmatpush.msra.mxu0 %v1012
    %1088 = vmatpush.msra.mxu0 %v1010
    %1089 = vmatpush.msra.mxu0 %v1008
    %1090 = vmatpush.msra.mxu0 %v1006
    %1091 = vmatpush.msra.mxu0 %v1004
    %1092 = vmatpush.msra.mxu0 %v1002
    %1093 = vmatpush.msra.mxu0 %v1000
    %1094 = vmatpush.msra.mxu0 %v998
    %1095 = vmatpush.msra.mxu0 %v996
    %1096 = vmatmul.f32.gmra.mxu0 %v925
    %v1097 = vpop.f32.mrf.mxu0
    %v1098 = vadd.f32 %v1072, %v1097
    %1099 = vmatmul.f32.gmra.mxu0 %v928
    %v1100 = vpop.f32.mrf.mxu0
    %v1101 = vadd.f32 %v1075, %v1100
    %1102 = vmatmul.f32.gmra.mxu0 %v931
    %v1103 = vpop.f32.mrf.mxu0
    %v1104 = vadd.f32 %v1078, %v1103
    %1105 = vdwg.mxu0
    %1106 = vmatpush.msra.mxu0 %v963
    %1107 = vmatpush.msra.mxu0 %v961
    %1108 = vmatpush.msra.mxu0 %v959
    %1109 = vmatpush.msra.mxu0 %v957
    %1110 = vmatpush.msra.mxu0 %v955
    %1111 = vmatpush.msra.mxu0 %v953
    %1112 = vmatpush.msra.mxu0 %v951
    %1113 = vmatpush.msra.mxu0 %v949
    %1114 = vmatpush.msra.mxu0 %v947
    %1115 = vmatpush.msra.mxu0 %v945
    %1116 = vmatpush.msra.mxu0 %v943
    %1117 = vmatpush.msra.mxu0 %v941
    %1118 = vmatpush.msra.mxu0 %v939
    %1119 = vmatpush.msra.mxu0 %v937
    %1120 = vmatpush.msra.mxu0 %v935
    %1121 = vmatpush.msra.mxu0 %v933
    %1122 = vmatmul.f32.gmra.mxu0 %v923
    %v1123 = vpop.f32.mrf.mxu0
    %v1124 = vadd.f32 0.0, %v1123
    %1125 = vmatmul.f32.gmra.mxu0 %v926
    %v1126 = vpop.f32.mrf.mxu0
    %v1127 = vadd.f32 0.0, %v1126
    %1128 = vmatmul.f32.gmra.mxu0 %v929
    %v1129 = vpop.f32.mrf.mxu0
    %v1130 = vadd.f32 0.0, %v1129
    %1131 = vdwg.mxu0
    %1132 = vmatpush.msra.mxu0 %v995
    %1133 = vmatpush.msra.mxu0 %v993
    %1134 = vmatpush.msra.mxu0 %v991
    %1135 = vmatpush.msra.mxu0 %v989
    %1136 = vmatpush.msra.mxu0 %v987
    %1137 = vmatpush.msra.mxu0 %v985
    %1138 = vmatpush.msra.mxu0 %v983
    %1139 = vmatpush.msra.mxu0 %v981
    %1140 = vmatpush.msra.mxu0 %v979
    %1141 = vmatpush.msra.mxu0 %v977
    %1142 = vmatpush.msra.mxu0 %v975
    %1143 = vmatpush.msra.mxu0 %v973
    %1144 = vmatpush.msra.mxu0 %v971
    %1145 = vmatpush.msra.mxu0 %v969
    %1146 = vmatpush.msra.mxu0 %v967
    %1147 = vmatpush.msra.mxu0 %v965
    %1148 = vmatmul.f32.gmra.mxu0 %v924
    %v1149 = vpop.f32.mrf.mxu0
    %v1150 = vadd.f32 %v1124, %v1149
    %1151 = vmatmul.f32.gmra.mxu0 %v927
    %v1152 = vpop.f32.mrf.mxu0
    %v1153 = vadd.f32 %v1127, %v1152
    %1154 = vmatmul.f32.gmra.mxu0 %v930
    %v1155 = vpop.f32.mrf.mxu0
    %v1156 = vadd.f32 %v1130, %v1155
    %1157 = vdwg.mxu0
    %1158 = vmatpush.msra.mxu0 %v1027
    %1159 = vmatpush.msra.mxu0 %v1025
    %1160 = vmatpush.msra.mxu0 %v1023
    %1161 = vmatpush.msra.mxu0 %v1021
    %1162 = vmatpush.msra.mxu0 %v1019
    %1163 = vmatpush.msra.mxu0 %v1017
    %1164 = vmatpush.msra.mxu0 %v1015
    %1165 = vmatpush.msra.mxu0 %v1013
    %1166 = vmatpush.msra.mxu0 %v1011
    %1167 = vmatpush.msra.mxu0 %v1009
    %1168 = vmatpush.msra.mxu0 %v1007
    %1169 = vmatpush.msra.mxu0 %v1005
    %1170 = vmatpush.msra.mxu0 %v1003
    %1171 = vmatpush.msra.mxu0 %v1001
    %1172 = vmatpush.msra.mxu0 %v999
    %1173 = vmatpush.msra.mxu0 %v997
    %1174 = vmatmul.f32.gmra.mxu0 %v925
    %v1175 = vpop.f32.mrf.mxu0
    %v1176 = vadd.f32 %v1150, %v1175
    %1177 = vmatmul.f32.gmra.mxu0 %v928
    %v1178 = vpop.f32.mrf.mxu0
    %v1179 = vadd.f32 %v1153, %v1178
    %1180 = vmatmul.f32.gmra.mxu0 %v931
    %v1181 = vpop.f32.mrf.mxu0
    %v1182 = vadd.f32 %v1156, %v1181
    %1183 = vdwg.mxu0
    %s1184 = scalar_lea.vmem %s5, 768
    %v1185 = vld [vmem:[%s1184] sm:$0xff]
    %v1186 = vld [vmem:[%s1184 + $0x8] sm:$0xff]
    %v1187 = vld [vmem:[%s1184 + $0x10] sm:$0xff]
    %v1188 = vld [vmem:[%s1184 + $0x18] sm:$0xff]
    %v1189 = vld [vmem:[%s1184 + $0x20] sm:$0xff]
    %v1190 = vld [vmem:[%s1184 + $0x28] sm:$0xff]
    %v1191 = vld [vmem:[%s1184 + $0x30] sm:$0xff]
    %v1192 = vld [vmem:[%s1184 + $0x38] sm:$0xff]
    %v1193 = vld [vmem:[%s1184 + $0x40] sm:$0xff]
    %v1194 = vld [vmem:[%s1184 + $0x48] sm:$0xff]
    %v1195 = vld [vmem:[%s1184 + $0x50] sm:$0xff]
    %v1196 = vld [vmem:[%s1184 + $0x58] sm:$0xff]
    %v1197 = vld [vmem:[%s1184 + $0x60] sm:$0xff]
    %v1198 = vld [vmem:[%s1184 + $0x68] sm:$0xff]
    %v1199 = vld [vmem:[%s1184 + $0x70] sm:$0xff]
    %v1200 = vld [vmem:[%s1184 + $0x78] sm:$0xff]
    %v1201 = vld [vmem:[%s1184 + $0x80] sm:$0xff]
    %v1202 = vld [vmem:[%s1184 + $0x88] sm:$0xff]
    %v1203 = vld [vmem:[%s1184 + $0x90] sm:$0xff]
    %v1204 = vld [vmem:[%s1184 + $0x98] sm:$0xff]
    %v1205 = vld [vmem:[%s1184 + $0xa0] sm:$0xff]
    %v1206 = vld [vmem:[%s1184 + $0xa8] sm:$0xff]
    %v1207 = vld [vmem:[%s1184 + $0xb0] sm:$0xff]
    %v1208 = vld [vmem:[%s1184 + $0xb8] sm:$0xff]
    %v1209 = vld [vmem:[%s1184 + $0xc0] sm:$0xff]
    %v1210 = vld [vmem:[%s1184 + $0xc8] sm:$0xff]
    %v1211 = vld [vmem:[%s1184 + $0xd0] sm:$0xff]
    %v1212 = vld [vmem:[%s1184 + $0xd8] sm:$0xff]
    %v1213 = vld [vmem:[%s1184 + $0xe0] sm:$0xff]
    %v1214 = vld [vmem:[%s1184 + $0xe8] sm:$0xff]
    %v1215 = vld [vmem:[%s1184 + $0xf0] sm:$0xff]
    %v1216 = vld [vmem:[%s1184 + $0xf8] sm:$0xff]
    %v1217 = vld [vmem:[%s1184 + $0x100] sm:$0xff]
    %v1218 = vld [vmem:[%s1184 + $0x108] sm:$0xff]
    %v1219 = vld [vmem:[%s1184 + $0x110] sm:$0xff]
    %v1220 = vld [vmem:[%s1184 + $0x118] sm:$0xff]
    %v1221 = vld [vmem:[%s1184 + $0x120] sm:$0xff]
    %v1222 = vld [vmem:[%s1184 + $0x128] sm:$0xff]
    %v1223 = vld [vmem:[%s1184 + $0x130] sm:$0xff]
    %v1224 = vld [vmem:[%s1184 + $0x138] sm:$0xff]
    %v1225 = vld [vmem:[%s1184 + $0x140] sm:$0xff]
    %v1226 = vld [vmem:[%s1184 + $0x148] sm:$0xff]
    %v1227 = vld [vmem:[%s1184 + $0x150] sm:$0xff]
    %v1228 = vld [vmem:[%s1184 + $0x158] sm:$0xff]
    %v1229 = vld [vmem:[%s1184 + $0x160] sm:$0xff]
    %v1230 = vld [vmem:[%s1184 + $0x168] sm:$0xff]
    %v1231 = vld [vmem:[%s1184 + $0x170] sm:$0xff]
    %v1232 = vld [vmem:[%s1184 + $0x178] sm:$0xff]
    %v1233 = vld [vmem:[%s1184 + $0x180] sm:$0xff]
    %v1234 = vld [vmem:[%s1184 + $0x188] sm:$0xff]
    %v1235 = vld [vmem:[%s1184 + $0x190] sm:$0xff]
    %v1236 = vld [vmem:[%s1184 + $0x198] sm:$0xff]
    %v1237 = vld [vmem:[%s1184 + $0x1a0] sm:$0xff]
    %v1238 = vld [vmem:[%s1184 + $0x1a8] sm:$0xff]
    %v1239 = vld [vmem:[%s1184 + $0x1b0] sm:$0xff]
    %v1240 = vld [vmem:[%s1184 + $0x1b8] sm:$0xff]
    %v1241 = vld [vmem:[%s1184 + $0x1c0] sm:$0xff]
    %v1242 = vld [vmem:[%s1184 + $0x1c8] sm:$0xff]
    %v1243 = vld [vmem:[%s1184 + $0x1d0] sm:$0xff]
    %v1244 = vld [vmem:[%s1184 + $0x1d8] sm:$0xff]
    %v1245 = vld [vmem:[%s1184 + $0x1e0] sm:$0xff]
    %v1246 = vld [vmem:[%s1184 + $0x1e8] sm:$0xff]
    %v1247 = vld [vmem:[%s1184 + $0x1f0] sm:$0xff]
    %v1248 = vld [vmem:[%s1184 + $0x1f8] sm:$0xff]
    %v1249 = vld [vmem:[%s1184 + $0x200] sm:$0xff]
    %v1250 = vld [vmem:[%s1184 + $0x208] sm:$0xff]
    %v1251 = vld [vmem:[%s1184 + $0x210] sm:$0xff]
    %v1252 = vld [vmem:[%s1184 + $0x218] sm:$0xff]
    %v1253 = vld [vmem:[%s1184 + $0x220] sm:$0xff]
    %v1254 = vld [vmem:[%s1184 + $0x228] sm:$0xff]
    %v1255 = vld [vmem:[%s1184 + $0x230] sm:$0xff]
    %v1256 = vld [vmem:[%s1184 + $0x238] sm:$0xff]
    %v1257 = vld [vmem:[%s1184 + $0x240] sm:$0xff]
    %v1258 = vld [vmem:[%s1184 + $0x248] sm:$0xff]
    %v1259 = vld [vmem:[%s1184 + $0x250] sm:$0xff]
    %v1260 = vld [vmem:[%s1184 + $0x258] sm:$0xff]
    %v1261 = vld [vmem:[%s1184 + $0x260] sm:$0xff]
    %v1262 = vld [vmem:[%s1184 + $0x268] sm:$0xff]
    %v1263 = vld [vmem:[%s1184 + $0x270] sm:$0xff]
    %v1264 = vld [vmem:[%s1184 + $0x278] sm:$0xff]
    %v1265 = vld [vmem:[%s1184 + $0x280] sm:$0xff]
    %v1266 = vld [vmem:[%s1184 + $0x288] sm:$0xff]
    %v1267 = vld [vmem:[%s1184 + $0x290] sm:$0xff]
    %v1268 = vld [vmem:[%s1184 + $0x298] sm:$0xff]
    %v1269 = vld [vmem:[%s1184 + $0x2a0] sm:$0xff]
    %v1270 = vld [vmem:[%s1184 + $0x2a8] sm:$0xff]
    %v1271 = vld [vmem:[%s1184 + $0x2b0] sm:$0xff]
    %v1272 = vld [vmem:[%s1184 + $0x2b8] sm:$0xff]
    %v1273 = vld [vmem:[%s1184 + $0x2c0] sm:$0xff]
    %v1274 = vld [vmem:[%s1184 + $0x2c8] sm:$0xff]
    %v1275 = vld [vmem:[%s1184 + $0x2d0] sm:$0xff]
    %v1276 = vld [vmem:[%s1184 + $0x2d8] sm:$0xff]
    %v1277 = vld [vmem:[%s1184 + $0x2e0] sm:$0xff]
    %v1278 = vld [vmem:[%s1184 + $0x2e8] sm:$0xff]
    %v1279 = vld [vmem:[%s1184 + $0x2f0] sm:$0xff]
    %v1280 = vld [vmem:[%s1184 + $0x2f8] sm:$0xff]
    %1281 = vmatpush.msra.mxu0 %v1215
    %1282 = vmatpush.msra.mxu0 %v1213
    %1283 = vmatpush.msra.mxu0 %v1211
    %1284 = vmatpush.msra.mxu0 %v1209
    %1285 = vmatpush.msra.mxu0 %v1207
    %1286 = vmatpush.msra.mxu0 %v1205
    %1287 = vmatpush.msra.mxu0 %v1203
    %1288 = vmatpush.msra.mxu0 %v1201
    %1289 = vmatpush.msra.mxu0 %v1199
    %1290 = vmatpush.msra.mxu0 %v1197
    %1291 = vmatpush.msra.mxu0 %v1195
    %1292 = vmatpush.msra.mxu0 %v1193
    %1293 = vmatpush.msra.mxu0 %v1191
    %1294 = vmatpush.msra.mxu0 %v1189
    %1295 = vmatpush.msra.mxu0 %v1187
    %1296 = vmatpush.msra.mxu0 %v1185
    %1297 = vmatmul.f32.gmra.mxu0 %v923
    %v1298 = vpop.f32.mrf.mxu0
    %v1299 = vadd.f32 0.0, %v1298
    %1300 = vmatmul.f32.gmra.mxu0 %v926
    %v1301 = vpop.f32.mrf.mxu0
    %v1302 = vadd.f32 0.0, %v1301
    %1303 = vmatmul.f32.gmra.mxu0 %v929
    %v1304 = vpop.f32.mrf.mxu0
    %v1305 = vadd.f32 0.0, %v1304
    %1306 = vdwg.mxu0
    %1307 = vmatpush.msra.mxu0 %v1247
    %1308 = vmatpush.msra.mxu0 %v1245
    %1309 = vmatpush.msra.mxu0 %v1243
    %1310 = vmatpush.msra.mxu0 %v1241
    %1311 = vmatpush.msra.mxu0 %v1239
    %1312 = vmatpush.msra.mxu0 %v1237
    %1313 = vmatpush.msra.mxu0 %v1235
    %1314 = vmatpush.msra.mxu0 %v1233
    %1315 = vmatpush.msra.mxu0 %v1231
    %1316 = vmatpush.msra.mxu0 %v1229
    %1317 = vmatpush.msra.mxu0 %v1227
    %1318 = vmatpush.msra.mxu0 %v1225
    %1319 = vmatpush.msra.mxu0 %v1223
    %1320 = vmatpush.msra.mxu0 %v1221
    %1321 = vmatpush.msra.mxu0 %v1219
    %1322 = vmatpush.msra.mxu0 %v1217
    %1323 = vmatmul.f32.gmra.mxu0 %v924
    %v1324 = vpop.f32.mrf.mxu0
    %v1325 = vadd.f32 %v1299, %v1324
    %1326 = vmatmul.f32.gmra.mxu0 %v927
    %v1327 = vpop.f32.mrf.mxu0
    %v1328 = vadd.f32 %v1302, %v1327
    %1329 = vmatmul.f32.gmra.mxu0 %v930
    %v1330 = vpop.f32.mrf.mxu0
    %v1331 = vadd.f32 %v1305, %v1330
    %1332 = vdwg.mxu0
    %1333 = vmatpush.msra.mxu0 %v1279
    %1334 = vmatpush.msra.mxu0 %v1277
    %1335 = vmatpush.msra.mxu0 %v1275
    %1336 = vmatpush.msra.mxu0 %v1273
    %1337 = vmatpush.msra.mxu0 %v1271
    %1338 = vmatpush.msra.mxu0 %v1269
    %1339 = vmatpush.msra.mxu0 %v1267
    %1340 = vmatpush.msra.mxu0 %v1265
    %1341 = vmatpush.msra.mxu0 %v1263
    %1342 = vmatpush.msra.mxu0 %v1261
    %1343 = vmatpush.msra.mxu0 %v1259
    %1344 = vmatpush.msra.mxu0 %v1257
    %1345 = vmatpush.msra.mxu0 %v1255
    %1346 = vmatpush.msra.mxu0 %v1253
    %1347 = vmatpush.msra.mxu0 %v1251
    %1348 = vmatpush.msra.mxu0 %v1249
    %1349 = vmatmul.f32.gmra.mxu0 %v925
    %v1350 = vpop.f32.mrf.mxu0
    %v1351 = vadd.f32 %v1325, %v1350
    %1352 = vmatmul.f32.gmra.mxu0 %v928
    %v1353 = vpop.f32.mrf.mxu0
    %v1354 = vadd.f32 %v1328, %v1353
    %1355 = vmatmul.f32.gmra.mxu0 %v931
    %v1356 = vpop.f32.mrf.mxu0
    %v1357 = vadd.f32 %v1331, %v1356
    %1358 = vdwg.mxu0
    %1359 = vmatpush.msra.mxu0 %v1216
    %1360 = vmatpush.msra.mxu0 %v1214
    %1361 = vmatpush.msra.mxu0 %v1212
    %1362 = vmatpush.msra.mxu0 %v1210
    %1363 = vmatpush.msra.mxu0 %v1208
    %1364 = vmatpush.msra.mxu0 %v1206
    %1365 = vmatpush.msra.mxu0 %v1204
    %1366 = vmatpush.msra.mxu0 %v1202
    %1367 = vmatpush.msra.mxu0 %v1200
    %1368 = vmatpush.msra.mxu0 %v1198
    %1369 = vmatpush.msra.mxu0 %v1196
    %1370 = vmatpush.msra.mxu0 %v1194
    %1371 = vmatpush.msra.mxu0 %v1192
    %1372 = vmatpush.msra.mxu0 %v1190
    %1373 = vmatpush.msra.mxu0 %v1188
    %1374 = vmatpush.msra.mxu0 %v1186
    %1375 = vmatmul.f32.gmra.mxu0 %v923
    %v1376 = vpop.f32.mrf.mxu0
    %v1377 = vadd.f32 0.0, %v1376
    %1378 = vmatmul.f32.gmra.mxu0 %v926
    %v1379 = vpop.f32.mrf.mxu0
    %v1380 = vadd.f32 0.0, %v1379
    %1381 = vmatmul.f32.gmra.mxu0 %v929
    %v1382 = vpop.f32.mrf.mxu0
    %v1383 = vadd.f32 0.0, %v1382
    %1384 = vdwg.mxu0
    %1385 = vmatpush.msra.mxu0 %v1248
    %1386 = vmatpush.msra.mxu0 %v1246
    %1387 = vmatpush.msra.mxu0 %v1244
    %1388 = vmatpush.msra.mxu0 %v1242
    %1389 = vmatpush.msra.mxu0 %v1240
    %1390 = vmatpush.msra.mxu0 %v1238
    %1391 = vmatpush.msra.mxu0 %v1236
    %1392 = vmatpush.msra.mxu0 %v1234
    %1393 = vmatpush.msra.mxu0 %v1232
    %1394 = vmatpush.msra.mxu0 %v1230
    %1395 = vmatpush.msra.mxu0 %v1228
    %1396 = vmatpush.msra.mxu0 %v1226
    %1397 = vmatpush.msra.mxu0 %v1224
    %1398 = vmatpush.msra.mxu0 %v1222
    %1399 = vmatpush.msra.mxu0 %v1220
    %1400 = vmatpush.msra.mxu0 %v1218
    %1401 = vmatmul.f32.gmra.mxu0 %v924
    %v1402 = vpop.f32.mrf.mxu0
    %v1403 = vadd.f32 %v1377, %v1402
    %1404 = vmatmul.f32.gmra.mxu0 %v927
    %v1405 = vpop.f32.mrf.mxu0
    %v1406 = vadd.f32 %v1380, %v1405
    %1407 = vmatmul.f32.gmra.mxu0 %v930
    %v1408 = vpop.f32.mrf.mxu0
    %v1409 = vadd.f32 %v1383, %v1408
    %1410 = vdwg.mxu0
    %1411 = vmatpush.msra.mxu0 %v1280
    %1412 = vmatpush.msra.mxu0 %v1278
    %1413 = vmatpush.msra.mxu0 %v1276
    %1414 = vmatpush.msra.mxu0 %v1274
    %1415 = vmatpush.msra.mxu0 %v1272
    %1416 = vmatpush.msra.mxu0 %v1270
    %1417 = vmatpush.msra.mxu0 %v1268
    %1418 = vmatpush.msra.mxu0 %v1266
    %1419 = vmatpush.msra.mxu0 %v1264
    %1420 = vmatpush.msra.mxu0 %v1262
    %1421 = vmatpush.msra.mxu0 %v1260
    %1422 = vmatpush.msra.mxu0 %v1258
    %1423 = vmatpush.msra.mxu0 %v1256
    %1424 = vmatpush.msra.mxu0 %v1254
    %1425 = vmatpush.msra.mxu0 %v1252
    %1426 = vmatpush.msra.mxu0 %v1250
    %1427 = vmatmul.f32.gmra.mxu0 %v925
    %v1428 = vpop.f32.mrf.mxu0
    %v1429 = vadd.f32 %v1403, %v1428
    %1430 = vmatmul.f32.gmra.mxu0 %v928
    %v1431 = vpop.f32.mrf.mxu0
    %v1432 = vadd.f32 %v1406, %v1431
    %1433 = vmatmul.f32.gmra.mxu0 %v931
    %v1434 = vpop.f32.mrf.mxu0
    %v1435 = vadd.f32 %v1409, %v1434
    %1436 = vdwg.mxu0
    %v1437 = vmax.f32 %v1098, %v1351
    %v1438 = vmax.f32 %v1176, %v1429
    %v1439 = vmax.f32 %v1101, %v1354
    %v1440 = vmax.f32 %v1179, %v1432
    %v1441 = vmax.f32 %v1104, %v1357
    %v1442 = vmax.f32 %v1182, %v1435
    %v1443 = vmax.f32 %v1437, 0.0
    %v1444 = vmax.f32 %v1438, 0.0
    %v1445 = vmax.f32 %v1439, 0.0
    %v1446 = vmax.f32 %v1440, 0.0
    %v1447 = vmax.f32 %v1441, 0.0
    %v1448 = vmax.f32 %v1442, 0.0
    %v1449 = vld [vmem:[%s8] sm:$0x3]
    %v1450 = vld [vmem:[%s6] sm:$0xff]
    %v1451 = vld [vmem:[%s6 + $0x8] sm:$0xff]
    %vm1452 = vcmask 195584
    %v1454 = vsel %vm1452, %v1450, 0
    %v1457 = vsel %vm1452, %v1451, 0
    %1459 = vmatpush.msra.mxu0 0.0
    %1460 = vmatpush.msra.mxu0 0.0
    %1461 = vmatpush.msra.mxu0 0.0
    %1462 = vmatpush.msra.mxu0 0.0
    %1463 = vmatpush.msra.mxu0 0.0
    %1464 = vmatpush.msra.mxu0 0.0
    %1465 = vmatpush.msra.mxu0 0.0
    %1466 = vmatpush.msra.mxu0 0.0
    %1467 = vmatpush.msra.mxu0 0.0
    %1468 = vmatpush.msra.mxu0 0.0
    %1469 = vmatpush.msra.mxu0 0.0
    %1470 = vmatpush.msra.mxu0 0.0
    %1471 = vmatpush.msra.mxu0 0.0
    %1472 = vmatpush.msra.mxu0 %v1447
    %1473 = vmatpush.msra.mxu0 %v1445
    %1474 = vmatpush.msra.mxu0 %v1443
    %1475 = vmatmul.f32.gmra.mxu0 %v1454
    %v1476 = vpop.f32.mrf.mxu0
    %v1477 = vadd.f32 0.0, %v1476
    %1478 = vmatmul.f32.gmra.mxu0 %v1457
    %v1479 = vpop.f32.mrf.mxu0
    %v1480 = vadd.f32 0.0, %v1479
    %1481 = vdwg.mxu0
    %1482 = vmatpush.msra.mxu0 0.0
    %1483 = vmatpush.msra.mxu0 0.0
    %1484 = vmatpush.msra.mxu0 0.0
    %1485 = vmatpush.msra.mxu0 0.0
    %1486 = vmatpush.msra.mxu0 0.0
    %1487 = vmatpush.msra.mxu0 0.0
    %1488 = vmatpush.msra.mxu0 0.0
    %1489 = vmatpush.msra.mxu0 0.0
    %1490 = vmatpush.msra.mxu0 0.0
    %1491 = vmatpush.msra.mxu0 0.0
    %1492 = vmatpush.msra.mxu0 0.0
    %1493 = vmatpush.msra.mxu0 0.0
    %1494 = vmatpush.msra.mxu0 0.0
    %1495 = vmatpush.msra.mxu0 %v1448
    %1496 = vmatpush.msra.mxu0 %v1446
    %1497 = vmatpush.msra.mxu0 %v1444
    %1498 = vmatmul.f32.gmra.mxu0 %v1454
    %v1499 = vpop.f32.mrf.mxu0
    %v1500 = vadd.f32 0.0, %v1499
    %1501 = vmatmul.f32.gmra.mxu0 %v1457
    %v1502 = vpop.f32.mrf.mxu0
    %v1503 = vadd.f32 0.0, %v1502
    %1504 = vdwg.mxu0
    %v1505 = vld [vmem:[%s7] sm:$0xff]
    %v1506 = vld [vmem:[%s7 + $0x8] sm:$0xff]
    %v1507 = vld [vmem:[%s7 + $0x10] sm:$0xff]
    %v1508 = vld [vmem:[%s7 + $0x18] sm:$0xff]
    %v1509 = vld [vmem:[%s7 + $0x20] sm:$0xff]
    %v1510 = vld [vmem:[%s7 + $0x28] sm:$0xff]
    %v1511 = vld [vmem:[%s7 + $0x30] sm:$0xff]
    %v1512 = vld [vmem:[%s7 + $0x38] sm:$0xff]
    %v1513 = vld [vmem:[%s7 + $0x40] sm:$0xff]
    %v1514 = vld [vmem:[%s7 + $0x48] sm:$0xff]
    %v1515 = vld [vmem:[%s7 + $0x50] sm:$0xff]
    %v1516 = vld [vmem:[%s7 + $0x58] sm:$0xff]
    %v1517 = vld [vmem:[%s7 + $0x60] sm:$0xff]
    %v1518 = vld [vmem:[%s7 + $0x68] sm:$0xff]
    %v1519 = vld [vmem:[%s7 + $0x70] sm:$0xff]
    %v1520 = vld [vmem:[%s7 + $0x78] sm:$0xff]
    %v1521 = vld [vmem:[%s7 + $0x80] sm:$0xff]
    %v1522 = vld [vmem:[%s7 + $0x88] sm:$0xff]
    %v1523 = vld [vmem:[%s7 + $0x90] sm:$0xff]
    %v1524 = vld [vmem:[%s7 + $0x98] sm:$0xff]
    %v1525 = vld [vmem:[%s7 + $0xa0] sm:$0xff]
    %v1526 = vld [vmem:[%s7 + $0xa8] sm:$0xff]
    %v1527 = vld [vmem:[%s7 + $0xb0] sm:$0xff]
    %v1528 = vld [vmem:[%s7 + $0xb8] sm:$0xff]
    %v1529 = vld [vmem:[%s7 + $0xc0] sm:$0xff]
    %v1530 = vld [vmem:[%s7 + $0xc8] sm:$0xff]
    %v1531 = vld [vmem:[%s7 + $0xd0] sm:$0xff]
    %v1532 = vld [vmem:[%s7 + $0xd8] sm:$0xff]
    %v1533 = vld [vmem:[%s7 + $0xe0] sm:$0xff]
    %v1534 = vld [vmem:[%s7 + $0xe8] sm:$0xff]
    %v1535 = vld [vmem:[%s7 + $0xf0] sm:$0xff]
    %v1536 = vld [vmem:[%s7 + $0xf8] sm:$0xff]
    %v1537 = vld [vmem:[%s7 + $0x100] sm:$0xff]
    %v1538 = vld [vmem:[%s7 + $0x108] sm:$0xff]
    %v1539 = vld [vmem:[%s7 + $0x110] sm:$0xff]
    %v1540 = vld [vmem:[%s7 + $0x118] sm:$0xff]
    %v1541 = vld [vmem:[%s7 + $0x120] sm:$0xff]
    %v1542 = vld [vmem:[%s7 + $0x128] sm:$0xff]
    %v1543 = vld [vmem:[%s7 + $0x130] sm:$0xff]
    %v1544 = vld [vmem:[%s7 + $0x138] sm:$0xff]
    %v1545 = vld [vmem:[%s7 + $0x140] sm:$0xff]
    %v1546 = vld [vmem:[%s7 + $0x148] sm:$0xff]
    %v1547 = vld [vmem:[%s7 + $0x150] sm:$0xff]
    %v1548 = vld [vmem:[%s7 + $0x158] sm:$0xff]
    %v1549 = vld [vmem:[%s7 + $0x160] sm:$0xff]
    %v1550 = vld [vmem:[%s7 + $0x168] sm:$0xff]
    %v1551 = vld [vmem:[%s7 + $0x170] sm:$0xff]
    %v1552 = vld [vmem:[%s7 + $0x178] sm:$0xff]
    %vm1553 = vcmask 523264
    %v1555 = vsel %vm1553, %v1500, 0
    %v1558 = vsel %vm1553, %v1503, 0
    %1560 = vmatpush.msra.mxu0 %v1535
    %1561 = vmatpush.msra.mxu0 %v1533
    %1562 = vmatpush.msra.mxu0 %v1531
    %1563 = vmatpush.msra.mxu0 %v1529
    %1564 = vmatpush.msra.mxu0 %v1527
    %1565 = vmatpush.msra.mxu0 %v1525
    %1566 = vmatpush.msra.mxu0 %v1523
    %1567 = vmatpush.msra.mxu0 %v1521
    %1568 = vmatpush.msra.mxu0 %v1519
    %1569 = vmatpush.msra.mxu0 %v1517
    %1570 = vmatpush.msra.mxu0 %v1515
    %1571 = vmatpush.msra.mxu0 %v1513
    %1572 = vmatpush.msra.mxu0 %v1511
    %1573 = vmatpush.msra.mxu0 %v1509
    %1574 = vmatpush.msra.mxu0 %v1507
    %1575 = vmatpush.msra.mxu0 %v1505
    %1576 = vmatmul.f32.gmra.mxu0 %v1477
    %v1577 = vpop.f32.mrf.mxu0
    %v1578 = vadd.f32 0.0, %v1577
    %1579 = vmatmul.f32.gmra.mxu0 %v1480
    %v1580 = vpop.f32.mrf.mxu0
    %v1581 = vadd.f32 0.0, %v1580
    %1582 = vdwg.mxu0
    %1583 = vmatpush.msra.mxu0 0.0
    %1584 = vmatpush.msra.mxu0 0.0
    %1585 = vmatpush.msra.mxu0 0.0
    %1586 = vmatpush.msra.mxu0 0.0
    %1587 = vmatpush.msra.mxu0 0.0
    %1588 = vmatpush.msra.mxu0 0.0
    %1589 = vmatpush.msra.mxu0 0.0
    %1590 = vmatpush.msra.mxu0 0.0
    %1591 = vmatpush.msra.mxu0 %v1551
    %1592 = vmatpush.msra.mxu0 %v1549
    %1593 = vmatpush.msra.mxu0 %v1547
    %1594 = vmatpush.msra.mxu0 %v1545
    %1595 = vmatpush.msra.mxu0 %v1543
    %1596 = vmatpush.msra.mxu0 %v1541
    %1597 = vmatpush.msra.mxu0 %v1539
    %1598 = vmatpush.msra.mxu0 %v1537
    %1599 = vmatmul.f32.gmra.mxu0 %v1555
    %v1600 = vpop.f32.mrf.mxu0
    %v1601 = vadd.f32 %v1578, %v1600
    %1602 = vmatmul.f32.gmra.mxu0 %v1558
    %v1603 = vpop.f32.mrf.mxu0
    %v1604 = vadd.f32 %v1581, %v1603
    %1605 = vdwg.mxu0
    %1606 = vmatpush.msra.mxu0 %v1536
    %1607 = vmatpush.msra.mxu0 %v1534
    %1608 = vmatpush.msra.mxu0 %v1532
    %1609 = vmatpush.msra.mxu0 %v1530
    %1610 = vmatpush.msra.mxu0 %v1528
    %1611 = vmatpush.msra.mxu0 %v1526
    %1612 = vmatpush.msra.mxu0 %v1524
    %1613 = vmatpush.msra.mxu0 %v1522
    %1614 = vmatpush.msra.mxu0 %v1520
    %1615 = vmatpush.msra.mxu0 %v1518
    %1616 = vmatpush.msra.mxu0 %v1516
    %1617 = vmatpush.msra.mxu0 %v1514
    %1618 = vmatpush.msra.mxu0 %v1512
    %1619 = vmatpush.msra.mxu0 %v1510
    %1620 = vmatpush.msra.mxu0 %v1508
    %1621 = vmatpush.msra.mxu0 %v1506
    %1622 = vmatmul.f32.gmra.mxu0 %v1477
    %v1623 = vpop.f32.mrf.mxu0
    %v1624 = vadd.f32 0.0, %v1623
    %1625 = vmatmul.f32.gmra.mxu0 %v1480
    %v1626 = vpop.f32.mrf.mxu0
    %v1627 = vadd.f32 0.0, %v1626
    %1628 = vdwg.mxu0
    %1629 = vmatpush.msra.mxu0 0.0
    %1630 = vmatpush.msra.mxu0 0.0
    %1631 = vmatpush.msra.mxu0 0.0
    %1632 = vmatpush.msra.mxu0 0.0
    %1633 = vmatpush.msra.mxu0 0.0
    %1634 = vmatpush.msra.mxu0 0.0
    %1635 = vmatpush.msra.mxu0 0.0
    %1636 = vmatpush.msra.mxu0 0.0
    %1637 = vmatpush.msra.mxu0 %v1552
    %1638 = vmatpush.msra.mxu0 %v1550
    %1639 = vmatpush.msra.mxu0 %v1548
    %1640 = vmatpush.msra.mxu0 %v1546
    %1641 = vmatpush.msra.mxu0 %v1544
    %1642 = vmatpush.msra.mxu0 %v1542
    %1643 = vmatpush.msra.mxu0 %v1540
    %1644 = vmatpush.msra.mxu0 %v1538
    %1645 = vmatmul.f32.gmra.mxu0 %v1555
    %v1646 = vpop.f32.mrf.mxu0
    %v1647 = vadd.f32 %v1624, %v1646
    %1648 = vmatmul.f32.gmra.mxu0 %v1558
    %v1649 = vpop.f32.mrf.mxu0
    %v1650 = vadd.f32 %v1627, %v1649
    %1651 = vdwg.mxu0
    %v1653 = vperm.slane %v1449, 0
    %v1654 = vperm.slane %v1449, 1
    %v1657 = vadd.f32 %v1653, %v1601
    %v1658 = vadd.f32 %v1654, %v1647
    %v1659 = vadd.f32 %v1653, %v1604
    %v1660 = vadd.f32 %v1654, %v1650
    %s1661 = scalar_lea.vmem %s6, 16
    %v1662 = vld [vmem:[%s1661] sm:$0xff]
    %v1663 = vld [vmem:[%s1661 + $0x8] sm:$0xff]
    %v1665 = vsel %vm1452, %v1662, 0
    %v1668 = vsel %vm1452, %v1663, 0
    %1670 = vmatpush.msra.mxu0 0.0
    %1671 = vmatpush.msra.mxu0 0.0
    %1672 = vmatpush.msra.mxu0 0.0
    %1673 = vmatpush.msra.mxu0 0.0
    %1674 = vmatpush.msra.mxu0 0.0
    %1675 = vmatpush.msra.mxu0 0.0
    %1676 = vmatpush.msra.mxu0 0.0
    %1677 = vmatpush.msra.mxu0 0.0
    %1678 = vmatpush.msra.mxu0 0.0
    %1679 = vmatpush.msra.mxu0 0.0
    %1680 = vmatpush.msra.mxu0 0.0
    %1681 = vmatpush.msra.mxu0 0.0
    %1682 = vmatpush.msra.mxu0 0.0
    %1683 = vmatpush.msra.mxu0 %v1447
    %1684 = vmatpush.msra.mxu0 %v1445
    %1685 = vmatpush.msra.mxu0 %v1443
    %1686 = vmatmul.f32.gmra.mxu0 %v1665
    %v1687 = vpop.f32.mrf.mxu0
    %v1688 = vadd.f32 0.0, %v1687
    %1689 = vmatmul.f32.gmra.mxu0 %v1668
    %v1690 = vpop.f32.mrf.mxu0
    %v1691 = vadd.f32 0.0, %v1690
    %1692 = vdwg.mxu0
    %1693 = vmatpush.msra.mxu0 0.0
    %1694 = vmatpush.msra.mxu0 0.0
    %1695 = vmatpush.msra.mxu0 0.0
    %1696 = vmatpush.msra.mxu0 0.0
    %1697 = vmatpush.msra.mxu0 0.0
    %1698 = vmatpush.msra.mxu0 0.0
    %1699 = vmatpush.msra.mxu0 0.0
    %1700 = vmatpush.msra.mxu0 0.0
    %1701 = vmatpush.msra.mxu0 0.0
    %1702 = vmatpush.msra.mxu0 0.0
    %1703 = vmatpush.msra.mxu0 0.0
    %1704 = vmatpush.msra.mxu0 0.0
    %1705 = vmatpush.msra.mxu0 0.0
    %1706 = vmatpush.msra.mxu0 %v1448
    %1707 = vmatpush.msra.mxu0 %v1446
    %1708 = vmatpush.msra.mxu0 %v1444
    %1709 = vmatmul.f32.gmra.mxu0 %v1665
    %v1710 = vpop.f32.mrf.mxu0
    %v1711 = vadd.f32 0.0, %v1710
    %1712 = vmatmul.f32.gmra.mxu0 %v1668
    %v1713 = vpop.f32.mrf.mxu0
    %v1714 = vadd.f32 0.0, %v1713
    %1715 = vdwg.mxu0
    %s1716 = scalar_lea.vmem %s7, 384
    %v1717 = vld [vmem:[%s1716] sm:$0xff]
    %v1718 = vld [vmem:[%s1716 + $0x8] sm:$0xff]
    %v1719 = vld [vmem:[%s1716 + $0x10] sm:$0xff]
    %v1720 = vld [vmem:[%s1716 + $0x18] sm:$0xff]
    %v1721 = vld [vmem:[%s1716 + $0x20] sm:$0xff]
    %v1722 = vld [vmem:[%s1716 + $0x28] sm:$0xff]
    %v1723 = vld [vmem:[%s1716 + $0x30] sm:$0xff]
    %v1724 = vld [vmem:[%s1716 + $0x38] sm:$0xff]
    %v1725 = vld [vmem:[%s1716 + $0x40] sm:$0xff]
    %v1726 = vld [vmem:[%s1716 + $0x48] sm:$0xff]
    %v1727 = vld [vmem:[%s1716 + $0x50] sm:$0xff]
    %v1728 = vld [vmem:[%s1716 + $0x58] sm:$0xff]
    %v1729 = vld [vmem:[%s1716 + $0x60] sm:$0xff]
    %v1730 = vld [vmem:[%s1716 + $0x68] sm:$0xff]
    %v1731 = vld [vmem:[%s1716 + $0x70] sm:$0xff]
    %v1732 = vld [vmem:[%s1716 + $0x78] sm:$0xff]
    %v1733 = vld [vmem:[%s1716 + $0x80] sm:$0xff]
    %v1734 = vld [vmem:[%s1716 + $0x88] sm:$0xff]
    %v1735 = vld [vmem:[%s1716 + $0x90] sm:$0xff]
    %v1736 = vld [vmem:[%s1716 + $0x98] sm:$0xff]
    %v1737 = vld [vmem:[%s1716 + $0xa0] sm:$0xff]
    %v1738 = vld [vmem:[%s1716 + $0xa8] sm:$0xff]
    %v1739 = vld [vmem:[%s1716 + $0xb0] sm:$0xff]
    %v1740 = vld [vmem:[%s1716 + $0xb8] sm:$0xff]
    %v1741 = vld [vmem:[%s1716 + $0xc0] sm:$0xff]
    %v1742 = vld [vmem:[%s1716 + $0xc8] sm:$0xff]
    %v1743 = vld [vmem:[%s1716 + $0xd0] sm:$0xff]
    %v1744 = vld [vmem:[%s1716 + $0xd8] sm:$0xff]
    %v1745 = vld [vmem:[%s1716 + $0xe0] sm:$0xff]
    %v1746 = vld [vmem:[%s1716 + $0xe8] sm:$0xff]
    %v1747 = vld [vmem:[%s1716 + $0xf0] sm:$0xff]
    %v1748 = vld [vmem:[%s1716 + $0xf8] sm:$0xff]
    %v1749 = vld [vmem:[%s1716 + $0x100] sm:$0xff]
    %v1750 = vld [vmem:[%s1716 + $0x108] sm:$0xff]
    %v1751 = vld [vmem:[%s1716 + $0x110] sm:$0xff]
    %v1752 = vld [vmem:[%s1716 + $0x118] sm:$0xff]
    %v1753 = vld [vmem:[%s1716 + $0x120] sm:$0xff]
    %v1754 = vld [vmem:[%s1716 + $0x128] sm:$0xff]
    %v1755 = vld [vmem:[%s1716 + $0x130] sm:$0xff]
    %v1756 = vld [vmem:[%s1716 + $0x138] sm:$0xff]
    %v1757 = vld [vmem:[%s1716 + $0x140] sm:$0xff]
    %v1758 = vld [vmem:[%s1716 + $0x148] sm:$0xff]
    %v1759 = vld [vmem:[%s1716 + $0x150] sm:$0xff]
    %v1760 = vld [vmem:[%s1716 + $0x158] sm:$0xff]
    %v1761 = vld [vmem:[%s1716 + $0x160] sm:$0xff]
    %v1762 = vld [vmem:[%s1716 + $0x168] sm:$0xff]
    %v1763 = vld [vmem:[%s1716 + $0x170] sm:$0xff]
    %v1764 = vld [vmem:[%s1716 + $0x178] sm:$0xff]
    %v1766 = vsel %vm1553, %v1711, 0
    %v1769 = vsel %vm1553, %v1714, 0
    %1771 = vmatpush.msra.mxu0 %v1747
    %1772 = vmatpush.msra.mxu0 %v1745
    %1773 = vmatpush.msra.mxu0 %v1743
    %1774 = vmatpush.msra.mxu0 %v1741
    %1775 = vmatpush.msra.mxu0 %v1739
    %1776 = vmatpush.msra.mxu0 %v1737
    %1777 = vmatpush.msra.mxu0 %v1735
    %1778 = vmatpush.msra.mxu0 %v1733
    %1779 = vmatpush.msra.mxu0 %v1731
    %1780 = vmatpush.msra.mxu0 %v1729
    %1781 = vmatpush.msra.mxu0 %v1727
    %1782 = vmatpush.msra.mxu0 %v1725
    %1783 = vmatpush.msra.mxu0 %v1723
    %1784 = vmatpush.msra.mxu0 %v1721
    %1785 = vmatpush.msra.mxu0 %v1719
    %1786 = vmatpush.msra.mxu0 %v1717
    %1787 = vmatmul.f32.gmra.mxu0 %v1688
    %v1788 = vpop.f32.mrf.mxu0
    %v1789 = vadd.f32 0.0, %v1788
    %1790 = vmatmul.f32.gmra.mxu0 %v1691
    %v1791 = vpop.f32.mrf.mxu0
    %v1792 = vadd.f32 0.0, %v1791
    %1793 = vdwg.mxu0
    %1794 = vmatpush.msra.mxu0 0.0
    %1795 = vmatpush.msra.mxu0 0.0
    %1796 = vmatpush.msra.mxu0 0.0
    %1797 = vmatpush.msra.mxu0 0.0
    %1798 = vmatpush.msra.mxu0 0.0
    %1799 = vmatpush.msra.mxu0 0.0
    %1800 = vmatpush.msra.mxu0 0.0
    %1801 = vmatpush.msra.mxu0 0.0
    %1802 = vmatpush.msra.mxu0 %v1763
    %1803 = vmatpush.msra.mxu0 %v1761
    %1804 = vmatpush.msra.mxu0 %v1759
    %1805 = vmatpush.msra.mxu0 %v1757
    %1806 = vmatpush.msra.mxu0 %v1755
    %1807 = vmatpush.msra.mxu0 %v1753
    %1808 = vmatpush.msra.mxu0 %v1751
    %1809 = vmatpush.msra.mxu0 %v1749
    %1810 = vmatmul.f32.gmra.mxu0 %v1766
    %v1811 = vpop.f32.mrf.mxu0
    %v1812 = vadd.f32 %v1789, %v1811
    %1813 = vmatmul.f32.gmra.mxu0 %v1769
    %v1814 = vpop.f32.mrf.mxu0
    %v1815 = vadd.f32 %v1792, %v1814
    %1816 = vdwg.mxu0
    %1817 = vmatpush.msra.mxu0 %v1748
    %1818 = vmatpush.msra.mxu0 %v1746
    %1819 = vmatpush.msra.mxu0 %v1744
    %1820 = vmatpush.msra.mxu0 %v1742
    %1821 = vmatpush.msra.mxu0 %v1740
    %1822 = vmatpush.msra.mxu0 %v1738
    %1823 = vmatpush.msra.mxu0 %v1736
    %1824 = vmatpush.msra.mxu0 %v1734
    %1825 = vmatpush.msra.mxu0 %v1732
    %1826 = vmatpush.msra.mxu0 %v1730
    %1827 = vmatpush.msra.mxu0 %v1728
    %1828 = vmatpush.msra.mxu0 %v1726
    %1829 = vmatpush.msra.mxu0 %v1724
    %1830 = vmatpush.msra.mxu0 %v1722
    %1831 = vmatpush.msra.mxu0 %v1720
    %1832 = vmatpush.msra.mxu0 %v1718
    %1833 = vmatmul.f32.gmra.mxu0 %v1688
    %v1834 = vpop.f32.mrf.mxu0
    %v1835 = vadd.f32 0.0, %v1834
    %1836 = vmatmul.f32.gmra.mxu0 %v1691
    %v1837 = vpop.f32.mrf.mxu0
    %v1838 = vadd.f32 0.0, %v1837
    %1839 = vdwg.mxu0
    %1840 = vmatpush.msra.mxu0 0.0
    %1841 = vmatpush.msra.mxu0 0.0
    %1842 = vmatpush.msra.mxu0 0.0
    %1843 = vmatpush.msra.mxu0 0.0
    %1844 = vmatpush.msra.mxu0 0.0
    %1845 = vmatpush.msra.mxu0 0.0
    %1846 = vmatpush.msra.mxu0 0.0
    %1847 = vmatpush.msra.mxu0 0.0
    %1848 = vmatpush.msra.mxu0 %v1764
    %1849 = vmatpush.msra.mxu0 %v1762
    %1850 = vmatpush.msra.mxu0 %v1760
    %1851 = vmatpush.msra.mxu0 %v1758
    %1852 = vmatpush.msra.mxu0 %v1756
    %1853 = vmatpush.msra.mxu0 %v1754
    %1854 = vmatpush.msra.mxu0 %v1752
    %1855 = vmatpush.msra.mxu0 %v1750
    %1856 = vmatmul.f32.gmra.mxu0 %v1766
    %v1857 = vpop.f32.mrf.mxu0
    %v1858 = vadd.f32 %v1835, %v1857
    %1859 = vmatmul.f32.gmra.mxu0 %v1769
    %v1860 = vpop.f32.mrf.mxu0
    %v1861 = vadd.f32 %v1838, %v1860
    %1862 = vdwg.mxu0
    %v1863 = vadd.f32 %v1657, %v1812
    %v1864 = vadd.f32 %v1658, %v1858
    %v1865 = vadd.f32 %v1659, %v1815
    %v1866 = vadd.f32 %v1660, %v1861
    %s1867 = scalar_lea.vmem %s6, 32
    %v1868 = vld [vmem:[%s1867] sm:$0xff]
    %v1869 = vld [vmem:[%s1867 + $0x8] sm:$0xff]
    %v1871 = vsel %vm1452, %v1868, 0
    %v1874 = vsel %vm1452, %v1869, 0
    %1876 = vmatpush.msra.mxu0 0.0
    %1877 = vmatpush.msra.mxu0 0.0
    %1878 = vmatpush.msra.mxu0 0.0
    %1879 = vmatpush.msra.mxu0 0.0
    %1880 = vmatpush.msra.mxu0 0.0
    %1881 = vmatpush.msra.mxu0 0.0
    %1882 = vmatpush.msra.mxu0 0.0
    %1883 = vmatpush.msra.mxu0 0.0
    %1884 = vmatpush.msra.mxu0 0.0
    %1885 = vmatpush.msra.mxu0 0.0
    %1886 = vmatpush.msra.mxu0 0.0
    %1887 = vmatpush.msra.mxu0 0.0
    %1888 = vmatpush.msra.mxu0 0.0
    %1889 = vmatpush.msra.mxu0 %v1447
    %1890 = vmatpush.msra.mxu0 %v1445
    %1891 = vmatpush.msra.mxu0 %v1443
    %1892 = vmatmul.f32.gmra.mxu0 %v1871
    %v1893 = vpop.f32.mrf.mxu0
    %v1894 = vadd.f32 0.0, %v1893
    %1895 = vmatmul.f32.gmra.mxu0 %v1874
    %v1896 = vpop.f32.mrf.mxu0
    %v1897 = vadd.f32 0.0, %v1896
    %1898 = vdwg.mxu0
    %1899 = vmatpush.msra.mxu0 0.0
    %1900 = vmatpush.msra.mxu0 0.0
    %1901 = vmatpush.msra.mxu0 0.0
    %1902 = vmatpush.msra.mxu0 0.0
    %1903 = vmatpush.msra.mxu0 0.0
    %1904 = vmatpush.msra.mxu0 0.0
    %1905 = vmatpush.msra.mxu0 0.0
    %1906 = vmatpush.msra.mxu0 0.0
    %1907 = vmatpush.msra.mxu0 0.0
    %1908 = vmatpush.msra.mxu0 0.0
    %1909 = vmatpush.msra.mxu0 0.0
    %1910 = vmatpush.msra.mxu0 0.0
    %1911 = vmatpush.msra.mxu0 0.0
    %1912 = vmatpush.msra.mxu0 %v1448
    %1913 = vmatpush.msra.mxu0 %v1446
    %1914 = vmatpush.msra.mxu0 %v1444
    %1915 = vmatmul.f32.gmra.mxu0 %v1871
    %v1916 = vpop.f32.mrf.mxu0
    %v1917 = vadd.f32 0.0, %v1916
    %1918 = vmatmul.f32.gmra.mxu0 %v1874
    %v1919 = vpop.f32.mrf.mxu0
    %v1920 = vadd.f32 0.0, %v1919
    %1921 = vdwg.mxu0
    %s1922 = scalar_lea.vmem %s7, 768
    %v1923 = vld [vmem:[%s1922] sm:$0xff]
    %v1924 = vld [vmem:[%s1922 + $0x8] sm:$0xff]
    %v1925 = vld [vmem:[%s1922 + $0x10] sm:$0xff]
    %v1926 = vld [vmem:[%s1922 + $0x18] sm:$0xff]
    %v1927 = vld [vmem:[%s1922 + $0x20] sm:$0xff]
    %v1928 = vld [vmem:[%s1922 + $0x28] sm:$0xff]
    %v1929 = vld [vmem:[%s1922 + $0x30] sm:$0xff]
    %v1930 = vld [vmem:[%s1922 + $0x38] sm:$0xff]
    %v1931 = vld [vmem:[%s1922 + $0x40] sm:$0xff]
    %v1932 = vld [vmem:[%s1922 + $0x48] sm:$0xff]
    %v1933 = vld [vmem:[%s1922 + $0x50] sm:$0xff]
    %v1934 = vld [vmem:[%s1922 + $0x58] sm:$0xff]
    %v1935 = vld [vmem:[%s1922 + $0x60] sm:$0xff]
    %v1936 = vld [vmem:[%s1922 + $0x68] sm:$0xff]
    %v1937 = vld [vmem:[%s1922 + $0x70] sm:$0xff]
    %v1938 = vld [vmem:[%s1922 + $0x78] sm:$0xff]
    %v1939 = vld [vmem:[%s1922 + $0x80] sm:$0xff]
    %v1940 = vld [vmem:[%s1922 + $0x88] sm:$0xff]
    %v1941 = vld [vmem:[%s1922 + $0x90] sm:$0xff]
    %v1942 = vld [vmem:[%s1922 + $0x98] sm:$0xff]
    %v1943 = vld [vmem:[%s1922 + $0xa0] sm:$0xff]
    %v1944 = vld [vmem:[%s1922 + $0xa8] sm:$0xff]
    %v1945 = vld [vmem:[%s1922 + $0xb0] sm:$0xff]
    %v1946 = vld [vmem:[%s1922 + $0xb8] sm:$0xff]
    %v1947 = vld [vmem:[%s1922 + $0xc0] sm:$0xff]
    %v1948 = vld [vmem:[%s1922 + $0xc8] sm:$0xff]
    %v1949 = vld [vmem:[%s1922 + $0xd0] sm:$0xff]
    %v1950 = vld [vmem:[%s1922 + $0xd8] sm:$0xff]
    %v1951 = vld [vmem:[%s1922 + $0xe0] sm:$0xff]
    %v1952 = vld [vmem:[%s1922 + $0xe8] sm:$0xff]
    %v1953 = vld [vmem:[%s1922 + $0xf0] sm:$0xff]
    %v1954 = vld [vmem:[%s1922 + $0xf8] sm:$0xff]
    %v1955 = vld [vmem:[%s1922 + $0x100] sm:$0xff]
    %v1956 = vld [vmem:[%s1922 + $0x108] sm:$0xff]
    %v1957 = vld [vmem:[%s1922 + $0x110] sm:$0xff]
    %v1958 = vld [vmem:[%s1922 + $0x118] sm:$0xff]
    %v1959 = vld [vmem:[%s1922 + $0x120] sm:$0xff]
    %v1960 = vld [vmem:[%s1922 + $0x128] sm:$0xff]
    %v1961 = vld [vmem:[%s1922 + $0x130] sm:$0xff]
    %v1962 = vld [vmem:[%s1922 + $0x138] sm:$0xff]
    %v1963 = vld [vmem:[%s1922 + $0x140] sm:$0xff]
    %v1964 = vld [vmem:[%s1922 + $0x148] sm:$0xff]
    %v1965 = vld [vmem:[%s1922 + $0x150] sm:$0xff]
    %v1966 = vld [vmem:[%s1922 + $0x158] sm:$0xff]
    %v1967 = vld [vmem:[%s1922 + $0x160] sm:$0xff]
    %v1968 = vld [vmem:[%s1922 + $0x168] sm:$0xff]
    %v1969 = vld [vmem:[%s1922 + $0x170] sm:$0xff]
    %v1970 = vld [vmem:[%s1922 + $0x178] sm:$0xff]
    %v1972 = vsel %vm1553, %v1917, 0
    %v1975 = vsel %vm1553, %v1920, 0
    %1977 = vmatpush.msra.mxu0 %v1953
    %1978 = vmatpush.msra.mxu0 %v1951
    %1979 = vmatpush.msra.mxu0 %v1949
    %1980 = vmatpush.msra.mxu0 %v1947
    %1981 = vmatpush.msra.mxu0 %v1945
    %1982 = vmatpush.msra.mxu0 %v1943
    %1983 = vmatpush.msra.mxu0 %v1941
    %1984 = vmatpush.msra.mxu0 %v1939
    %1985 = vmatpush.msra.mxu0 %v1937
    %1986 = vmatpush.msra.mxu0 %v1935
    %1987 = vmatpush.msra.mxu0 %v1933
    %1988 = vmatpush.msra.mxu0 %v1931
    %1989 = vmatpush.msra.mxu0 %v1929
    %1990 = vmatpush.msra.mxu0 %v1927
    %1991 = vmatpush.msra.mxu0 %v1925
    %1992 = vmatpush.msra.mxu0 %v1923
    %1993 = vmatmul.f32.gmra.mxu0 %v1894
    %v1994 = vpop.f32.mrf.mxu0
    %v1995 = vadd.f32 0.0, %v1994
    %1996 = vmatmul.f32.gmra.mxu0 %v1897
    %v1997 = vpop.f32.mrf.mxu0
    %v1998 = vadd.f32 0.0, %v1997
    %1999 = vdwg.mxu0
    %2000 = vmatpush.msra.mxu0 0.0
    %2001 = vmatpush.msra.mxu0 0.0
    %2002 = vmatpush.msra.mxu0 0.0
    %2003 = vmatpush.msra.mxu0 0.0
    %2004 = vmatpush.msra.mxu0 0.0
    %2005 = vmatpush.msra.mxu0 0.0
    %2006 = vmatpush.msra.mxu0 0.0
    %2007 = vmatpush.msra.mxu0 0.0
    %2008 = vmatpush.msra.mxu0 %v1969
    %2009 = vmatpush.msra.mxu0 %v1967
    %2010 = vmatpush.msra.mxu0 %v1965
    %2011 = vmatpush.msra.mxu0 %v1963
    %2012 = vmatpush.msra.mxu0 %v1961
    %2013 = vmatpush.msra.mxu0 %v1959
    %2014 = vmatpush.msra.mxu0 %v1957
    %2015 = vmatpush.msra.mxu0 %v1955
    %2016 = vmatmul.f32.gmra.mxu0 %v1972
    %v2017 = vpop.f32.mrf.mxu0
    %v2018 = vadd.f32 %v1995, %v2017
    %2019 = vmatmul.f32.gmra.mxu0 %v1975
    %v2020 = vpop.f32.mrf.mxu0
    %v2021 = vadd.f32 %v1998, %v2020
    %2022 = vdwg.mxu0
    %2023 = vmatpush.msra.mxu0 %v1954
    %2024 = vmatpush.msra.mxu0 %v1952
    %2025 = vmatpush.msra.mxu0 %v1950
    %2026 = vmatpush.msra.mxu0 %v1948
    %2027 = vmatpush.msra.mxu0 %v1946
    %2028 = vmatpush.msra.mxu0 %v1944
    %2029 = vmatpush.msra.mxu0 %v1942
    %2030 = vmatpush.msra.mxu0 %v1940
    %2031 = vmatpush.msra.mxu0 %v1938
    %2032 = vmatpush.msra.mxu0 %v1936
    %2033 = vmatpush.msra.mxu0 %v1934
    %2034 = vmatpush.msra.mxu0 %v1932
    %2035 = vmatpush.msra.mxu0 %v1930
    %2036 = vmatpush.msra.mxu0 %v1928
    %2037 = vmatpush.msra.mxu0 %v1926
    %2038 = vmatpush.msra.mxu0 %v1924
    %2039 = vmatmul.f32.gmra.mxu0 %v1894
    %v2040 = vpop.f32.mrf.mxu0
    %v2041 = vadd.f32 0.0, %v2040
    %2042 = vmatmul.f32.gmra.mxu0 %v1897
    %v2043 = vpop.f32.mrf.mxu0
    %v2044 = vadd.f32 0.0, %v2043
    %2045 = vdwg.mxu0
    %2046 = vmatpush.msra.mxu0 0.0
    %2047 = vmatpush.msra.mxu0 0.0
    %2048 = vmatpush.msra.mxu0 0.0
    %2049 = vmatpush.msra.mxu0 0.0
    %2050 = vmatpush.msra.mxu0 0.0
    %2051 = vmatpush.msra.mxu0 0.0
    %2052 = vmatpush.msra.mxu0 0.0
    %2053 = vmatpush.msra.mxu0 0.0
    %2054 = vmatpush.msra.mxu0 %v1970
    %2055 = vmatpush.msra.mxu0 %v1968
    %2056 = vmatpush.msra.mxu0 %v1966
    %2057 = vmatpush.msra.mxu0 %v1964
    %2058 = vmatpush.msra.mxu0 %v1962
    %2059 = vmatpush.msra.mxu0 %v1960
    %2060 = vmatpush.msra.mxu0 %v1958
    %2061 = vmatpush.msra.mxu0 %v1956
    %2062 = vmatmul.f32.gmra.mxu0 %v1972
    %v2063 = vpop.f32.mrf.mxu0
    %v2064 = vadd.f32 %v2041, %v2063
    %2065 = vmatmul.f32.gmra.mxu0 %v1975
    %v2066 = vpop.f32.mrf.mxu0
    %v2067 = vadd.f32 %v2044, %v2066
    %2068 = vdwg.mxu0
    %v2069 = vadd.f32 %v1863, %v2018
    %v2070 = vadd.f32 %v1864, %v2064
    %v2071 = vadd.f32 %v1865, %v2021
    %v2072 = vadd.f32 %v1866, %v2067
    %v2073 = vld [vmem:[%s9] sm:$0xff]
    %vm2074 = vcmask 130048
    %v2076 = vsel %vm2074, %v2073, 0
    %2078 = vmatpush.msra.mxu0 0.0
    %2079 = vmatpush.msra.mxu0 0.0
    %2080 = vmatpush.msra.mxu0 0.0
    %2081 = vmatpush.msra.mxu0 0.0
    %2082 = vmatpush.msra.mxu0 0.0
    %2083 = vmatpush.msra.mxu0 0.0
    %2084 = vmatpush.msra.mxu0 0.0
    %2085 = vmatpush.msra.mxu0 0.0
    %2086 = vmatpush.msra.mxu0 0.0
    %2087 = vmatpush.msra.mxu0 0.0
    %2088 = vmatpush.msra.mxu0 0.0
    %2089 = vmatpush.msra.mxu0 0.0
    %2090 = vmatpush.msra.mxu0 0.0
    %2091 = vmatpush.msra.mxu0 0.0
    %2092 = vmatpush.msra.mxu0 %v2071
    %2093 = vmatpush.msra.mxu0 %v2069
    %2094 = vmatmul.f32.gmra.mxu0 %v2076
    %v2095 = vpop.f32.mrf.mxu0
    %v2096 = vadd.f32 0.0, %v2095
    %2097 = vdwg.mxu0
    %2098 = vmatpush.msra.mxu0 0.0
    %2099 = vmatpush.msra.mxu0 0.0
    %2100 = vmatpush.msra.mxu0 0.0
    %2101 = vmatpush.msra.mxu0 0.0
    %2102 = vmatpush.msra.mxu0 0.0
    %2103 = vmatpush.msra.mxu0 0.0
    %2104 = vmatpush.msra.mxu0 0.0
    %2105 = vmatpush.msra.mxu0 0.0
    %2106 = vmatpush.msra.mxu0 0.0
    %2107 = vmatpush.msra.mxu0 0.0
    %2108 = vmatpush.msra.mxu0 0.0
    %2109 = vmatpush.msra.mxu0 0.0
    %2110 = vmatpush.msra.mxu0 0.0
    %2111 = vmatpush.msra.mxu0 0.0
    %2112 = vmatpush.msra.mxu0 %v2072
    %2113 = vmatpush.msra.mxu0 %v2070
    %2114 = vmatmul.f32.gmra.mxu0 %v2076
    %v2115 = vpop.f32.mrf.mxu0
    %v2116 = vadd.f32 0.0, %v2115
    %2117 = vdwg.mxu0
    %s2118 = scalar_lea.vmem %s9, 8
    %v2119 = vld [vmem:[%s2118] sm:$0xff]
    %v2121 = vsel %vm2074, %v2119, 0
    %2123 = vmatpush.msra.mxu0 0.0
    %2124 = vmatpush.msra.mxu0 0.0
    %2125 = vmatpush.msra.mxu0 0.0
    %2126 = vmatpush.msra.mxu0 0.0
    %2127 = vmatpush.msra.mxu0 0.0
    %2128 = vmatpush.msra.mxu0 0.0
    %2129 = vmatpush.msra.mxu0 0.0
    %2130 = vmatpush.msra.mxu0 0.0
    %2131 = vmatpush.msra.mxu0 0.0
    %2132 = vmatpush.msra.mxu0 0.0
    %2133 = vmatpush.msra.mxu0 0.0
    %2134 = vmatpush.msra.mxu0 0.0
    %2135 = vmatpush.msra.mxu0 0.0
    %2136 = vmatpush.msra.mxu0 0.0
    %2137 = vmatpush.msra.mxu0 %v2071
    %2138 = vmatpush.msra.mxu0 %v2069
    %2139 = vmatmul.f32.gmra.mxu0 %v2121
    %v2140 = vpop.f32.mrf.mxu0
    %v2141 = vadd.f32 0.0, %v2140
    %2142 = vdwg.mxu0
    %2143 = vmatpush.msra.mxu0 0.0
    %2144 = vmatpush.msra.mxu0 0.0
    %2145 = vmatpush.msra.mxu0 0.0
    %2146 = vmatpush.msra.mxu0 0.0
    %2147 = vmatpush.msra.mxu0 0.0
    %2148 = vmatpush.msra.mxu0 0.0
    %2149 = vmatpush.msra.mxu0 0.0
    %2150 = vmatpush.msra.mxu0 0.0
    %2151 = vmatpush.msra.mxu0 0.0
    %2152 = vmatpush.msra.mxu0 0.0
    %2153 = vmatpush.msra.mxu0 0.0
    %2154 = vmatpush.msra.mxu0 0.0
    %2155 = vmatpush.msra.mxu0 0.0
    %2156 = vmatpush.msra.mxu0 0.0
    %2157 = vmatpush.msra.mxu0 %v2072
    %2158 = vmatpush.msra.mxu0 %v2070
    %2159 = vmatmul.f32.gmra.mxu0 %v2121
    %v2160 = vpop.f32.mrf.mxu0
    %v2161 = vadd.f32 0.0, %v2160
    %2162 = vdwg.mxu0
    %v2163 = vmax.f32 %v2096, %v2141
    %v2164 = vmax.f32 %v2116, %v2161
    %v2165 = vld [vmem:[%s10] sm:$0xff]
    %v2166 = vld [vmem:[%s10 + $0x8] sm:$0xff]
    %v2167 = vld [vmem:[%s10 + $0x10] sm:$0xff]
    %v2168 = vld [vmem:[%s10 + $0x18] sm:$0xff]
    %v2169 = vld [vmem:[%s10 + $0x20] sm:$0xff]
    %v2170 = vld [vmem:[%s10 + $0x28] sm:$0xff]
    %v2171 = vld [vmem:[%s10 + $0x30] sm:$0xff]
    %v2172 = vld [vmem:[%s10 + $0x38] sm:$0xff]
    %v2173 = vld [vmem:[%s10 + $0x40] sm:$0xff]
    %v2174 = vld [vmem:[%s10 + $0x48] sm:$0xff]
    %v2175 = vld [vmem:[%s10 + $0x50] sm:$0xff]
    %v2176 = vld [vmem:[%s10 + $0x58] sm:$0xff]
    %v2177 = vld [vmem:[%s10 + $0x60] sm:$0xff]
    %v2178 = vld [vmem:[%s10 + $0x68] sm:$0xff]
    %v2179 = vld [vmem:[%s10 + $0x70] sm:$0xff]
    %v2180 = vld [vmem:[%s10 + $0x78] sm:$0xff]
    %v2181 = vld [vmem:[%s10 + $0x80] sm:$0xff]
    %v2182 = vld [vmem:[%s10 + $0x88] sm:$0xff]
    %v2183 = vld [vmem:[%s10 + $0x90] sm:$0xff]
    %v2184 = vld [vmem:[%s10 + $0x98] sm:$0xff]
    %v2185 = vld [vmem:[%s10 + $0xa0] sm:$0xff]
    %v2186 = vld [vmem:[%s10 + $0xa8] sm:$0xff]
    %v2187 = vld [vmem:[%s10 + $0xb0] sm:$0xff]
    %v2188 = vld [vmem:[%s10 + $0xb8] sm:$0xff]
    %v2189 = vld [vmem:[%s10 + $0xc0] sm:$0xff]
    %v2190 = vld [vmem:[%s10 + $0xc8] sm:$0xff]
    %v2191 = vld [vmem:[%s10 + $0xd0] sm:$0xff]
    %v2192 = vld [vmem:[%s10 + $0xd8] sm:$0xff]
    %v2193 = vld [vmem:[%s10 + $0xe0] sm:$0xff]
    %v2194 = vld [vmem:[%s10 + $0xe8] sm:$0xff]
    %v2195 = vld [vmem:[%s10 + $0xf0] sm:$0xff]
    %v2196 = vld [vmem:[%s10 + $0xf8] sm:$0xff]
    %2197 = vmatpush.msra.mxu0 %v2180
    %2198 = vmatpush.msra.mxu0 %v2179
    %2199 = vmatpush.msra.mxu0 %v2178
    %2200 = vmatpush.msra.mxu0 %v2177
    %2201 = vmatpush.msra.mxu0 %v2176
    %2202 = vmatpush.msra.mxu0 %v2175
    %2203 = vmatpush.msra.mxu0 %v2174
    %2204 = vmatpush.msra.mxu0 %v2173
    %2205 = vmatpush.msra.mxu0 %v2172
    %2206 = vmatpush.msra.mxu0 %v2171
    %2207 = vmatpush.msra.mxu0 %v2170
    %2208 = vmatpush.msra.mxu0 %v2169
    %2209 = vmatpush.msra.mxu0 %v2168
    %2210 = vmatpush.msra.mxu0 %v2167
    %2211 = vmatpush.msra.mxu0 %v2166
    %2212 = vmatpush.msra.mxu0 %v2165
    %2213 = vmatmul.f32.gmra.mxu0 %v2163
    %v2214 = vpop.f32.mrf.mxu0
    %v2215 = vadd.f32 0.0, %v2214
    %2216 = vdwg.mxu0
    %2217 = vmatpush.msra.mxu0 %v2196
    %2218 = vmatpush.msra.mxu0 %v2195
    %2219 = vmatpush.msra.mxu0 %v2194
    %2220 = vmatpush.msra.mxu0 %v2193
    %2221 = vmatpush.msra.mxu0 %v2192
    %2222 = vmatpush.msra.mxu0 %v2191
    %2223 = vmatpush.msra.mxu0 %v2190
    %2224 = vmatpush.msra.mxu0 %v2189
    %2225 = vmatpush.msra.mxu0 %v2188
    %2226 = vmatpush.msra.mxu0 %v2187
    %2227 = vmatpush.msra.mxu0 %v2186
    %2228 = vmatpush.msra.mxu0 %v2185
    %2229 = vmatpush.msra.mxu0 %v2184
    %2230 = vmatpush.msra.mxu0 %v2183
    %2231 = vmatpush.msra.mxu0 %v2182
    %2232 = vmatpush.msra.mxu0 %v2181
    %2233 = vmatmul.f32.gmra.mxu0 %v2164
    %v2234 = vpop.f32.mrf.mxu0
    %v2235 = vadd.f32 %v2215, %v2234
    %2236 = vdwg.mxu0
    %s2237 = scalar_lea.vmem %s10, 256
    %v2238 = vld [vmem:[%s2237] sm:$0xff]
    %v2239 = vld [vmem:[%s2237 + $0x8] sm:$0xff]
    %v2240 = vld [vmem:[%s2237 + $0x10] sm:$0xff]
    %v2241 = vld [vmem:[%s2237 + $0x18] sm:$0xff]
    %v2242 = vld [vmem:[%s2237 + $0x20] sm:$0xff]
    %v2243 = vld [vmem:[%s2237 + $0x28] sm:$0xff]
    %v2244 = vld [vmem:[%s2237 + $0x30] sm:$0xff]
    %v2245 = vld [vmem:[%s2237 + $0x38] sm:$0xff]
    %v2246 = vld [vmem:[%s2237 + $0x40] sm:$0xff]
    %v2247 = vld [vmem:[%s2237 + $0x48] sm:$0xff]
    %v2248 = vld [vmem:[%s2237 + $0x50] sm:$0xff]
    %v2249 = vld [vmem:[%s2237 + $0x58] sm:$0xff]
    %v2250 = vld [vmem:[%s2237 + $0x60] sm:$0xff]
    %v2251 = vld [vmem:[%s2237 + $0x68] sm:$0xff]
    %v2252 = vld [vmem:[%s2237 + $0x70] sm:$0xff]
    %v2253 = vld [vmem:[%s2237 + $0x78] sm:$0xff]
    %v2254 = vld [vmem:[%s2237 + $0x80] sm:$0xff]
    %v2255 = vld [vmem:[%s2237 + $0x88] sm:$0xff]
    %v2256 = vld [vmem:[%s2237 + $0x90] sm:$0xff]
    %v2257 = vld [vmem:[%s2237 + $0x98] sm:$0xff]
    %v2258 = vld [vmem:[%s2237 + $0xa0] sm:$0xff]
    %v2259 = vld [vmem:[%s2237 + $0xa8] sm:$0xff]
    %v2260 = vld [vmem:[%s2237 + $0xb0] sm:$0xff]
    %v2261 = vld [vmem:[%s2237 + $0xb8] sm:$0xff]
    %v2262 = vld [vmem:[%s2237 + $0xc0] sm:$0xff]
    %v2263 = vld [vmem:[%s2237 + $0xc8] sm:$0xff]
    %v2264 = vld [vmem:[%s2237 + $0xd0] sm:$0xff]
    %v2265 = vld [vmem:[%s2237 + $0xd8] sm:$0xff]
    %v2266 = vld [vmem:[%s2237 + $0xe0] sm:$0xff]
    %v2267 = vld [vmem:[%s2237 + $0xe8] sm:$0xff]
    %v2268 = vld [vmem:[%s2237 + $0xf0] sm:$0xff]
    %v2269 = vld [vmem:[%s2237 + $0xf8] sm:$0xff]
    %2270 = vmatpush.msra.mxu0 %v2253
    %2271 = vmatpush.msra.mxu0 %v2252
    %2272 = vmatpush.msra.mxu0 %v2251
    %2273 = vmatpush.msra.mxu0 %v2250
    %2274 = vmatpush.msra.mxu0 %v2249
    %2275 = vmatpush.msra.mxu0 %v2248
    %2276 = vmatpush.msra.mxu0 %v2247
    %2277 = vmatpush.msra.mxu0 %v2246
    %2278 = vmatpush.msra.mxu0 %v2245
    %2279 = vmatpush.msra.mxu0 %v2244
    %2280 = vmatpush.msra.mxu0 %v2243
    %2281 = vmatpush.msra.mxu0 %v2242
    %2282 = vmatpush.msra.mxu0 %v2241
    %2283 = vmatpush.msra.mxu0 %v2240
    %2284 = vmatpush.msra.mxu0 %v2239
    %2285 = vmatpush.msra.mxu0 %v2238
    %2286 = vmatmul.f32.gmra.mxu0 %v2163
    %v2287 = vpop.f32.mrf.mxu0
    %v2288 = vadd.f32 0.0, %v2287
    %2289 = vdwg.mxu0
    %2290 = vmatpush.msra.mxu0 %v2269
    %2291 = vmatpush.msra.mxu0 %v2268
    %2292 = vmatpush.msra.mxu0 %v2267
    %2293 = vmatpush.msra.mxu0 %v2266
    %2294 = vmatpush.msra.mxu0 %v2265
    %2295 = vmatpush.msra.mxu0 %v2264
    %2296 = vmatpush.msra.mxu0 %v2263
    %2297 = vmatpush.msra.mxu0 %v2262
    %2298 = vmatpush.msra.mxu0 %v2261
    %2299 = vmatpush.msra.mxu0 %v2260
    %2300 = vmatpush.msra.mxu0 %v2259
    %2301 = vmatpush.msra.mxu0 %v2258
    %2302 = vmatpush.msra.mxu0 %v2257
    %2303 = vmatpush.msra.mxu0 %v2256
    %2304 = vmatpush.msra.mxu0 %v2255
    %2305 = vmatpush.msra.mxu0 %v2254
    %2306 = vmatmul.f32.gmra.mxu0 %v2164
    %v2307 = vpop.f32.mrf.mxu0
    %v2308 = vadd.f32 %v2288, %v2307
    %2309 = vdwg.mxu0
    %v2310 = vmax.f32 %v2235, %v2308
    %v2311 = vmax.f32 %v2310, 0.0
    %v2312 = vld [vmem:[%s11] sm:$0xf]
    %vm2313 = vcmask 64512
    %v2315 = vsel %vm2313, %v2312, 0
    %2317 = vmatpush.msra.mxu0 0.0
    %2318 = vmatpush.msra.mxu0 0.0
    %2319 = vmatpush.msra.mxu0 0.0
    %2320 = vmatpush.msra.mxu0 0.0
    %2321 = vmatpush.msra.mxu0 0.0
    %2322 = vmatpush.msra.mxu0 0.0
    %2323 = vmatpush.msra.mxu0 0.0
    %2324 = vmatpush.msra.mxu0 0.0
    %2325 = vmatpush.msra.mxu0 0.0
    %2326 = vmatpush.msra.mxu0 0.0
    %2327 = vmatpush.msra.mxu0 0.0
    %2328 = vmatpush.msra.mxu0 0.0
    %2329 = vmatpush.msra.mxu0 0.0
    %2330 = vmatpush.msra.mxu0 0.0
    %2331 = vmatpush.msra.mxu0 0.0
    %2332 = vmatpush.msra.mxu0 %v2311
    %2333 = vmatmul.f32.gmra.mxu0 %v2315
    %v2334 = vpop.f32.mrf.mxu0
    %v2335 = vadd.f32 0.0, %v2334
    %2336 = vdwg.mxu0
    %s2337 = scalar_lea.vmem %s11, 4
    %v2338 = vld [vmem:[%s2337] sm:$0xf]
    %v2340 = vsel %vm2313, %v2338, 0
    %2342 = vmatpush.msra.mxu0 0.0
    %2343 = vmatpush.msra.mxu0 0.0
    %2344 = vmatpush.msra.mxu0 0.0
    %2345 = vmatpush.msra.mxu0 0.0
    %2346 = vmatpush.msra.mxu0 0.0
    %2347 = vmatpush.msra.mxu0 0.0
    %2348 = vmatpush.msra.mxu0 0.0
    %2349 = vmatpush.msra.mxu0 0.0
    %2350 = vmatpush.msra.mxu0 0.0
    %2351 = vmatpush.msra.mxu0 0.0
    %2352 = vmatpush.msra.mxu0 0.0
    %2353 = vmatpush.msra.mxu0 0.0
    %2354 = vmatpush.msra.mxu0 0.0
    %2355 = vmatpush.msra.mxu0 0.0
    %2356 = vmatpush.msra.mxu0 0.0
    %2357 = vmatpush.msra.mxu0 %v2311
    %2358 = vmatmul.f32.gmra.mxu0 %v2340
    %v2359 = vpop.f32.mrf.mxu0
    %v2360 = vadd.f32 0.0, %v2359
    %2361 = vdwg.mxu0
    %v2362 = vld [vmem:[%s12] sm:$0xff]
    %v2363 = vld [vmem:[%s12 + $0x8] sm:$0xff]
    %v2364 = vld [vmem:[%s12 + $0x10] sm:$0xff]
    %v2365 = vld [vmem:[%s12 + $0x18] sm:$0xff]
    %v2366 = vld [vmem:[%s12 + $0x20] sm:$0xff]
    %v2367 = vld [vmem:[%s12 + $0x28] sm:$0xff]
    %v2368 = vld [vmem:[%s12 + $0x30] sm:$0xff]
    %v2369 = vld [vmem:[%s12 + $0x38] sm:$0xff]
    %v2370 = vld [vmem:[%s12 + $0x40] sm:$0xff]
    %v2371 = vld [vmem:[%s12 + $0x48] sm:$0xff]
    %v2372 = vld [vmem:[%s12 + $0x50] sm:$0xff]
    %v2373 = vld [vmem:[%s12 + $0x58] sm:$0xff]
    %v2374 = vld [vmem:[%s12 + $0x60] sm:$0xff]
    %v2375 = vld [vmem:[%s12 + $0x68] sm:$0xff]
    %v2376 = vld [vmem:[%s12 + $0x70] sm:$0xff]
    %v2377 = vld [vmem:[%s12 + $0x78] sm:$0xff]
    %v2378 = vld [vmem:[%s12 + $0x80] sm:$0xff]
    %v2379 = vld [vmem:[%s12 + $0x88] sm:$0xff]
    %v2380 = vld [vmem:[%s12 + $0x90] sm:$0xff]
    %v2381 = vld [vmem:[%s12 + $0x98] sm:$0xff]
    %v2382 = vld [vmem:[%s12 + $0xa0] sm:$0xff]
    %v2383 = vld [vmem:[%s12 + $0xa8] sm:$0xff]
    %v2384 = vld [vmem:[%s12 + $0xb0] sm:$0xff]
    %v2385 = vld [vmem:[%s12 + $0xb8] sm:$0xff]
    %v2386 = vld [vmem:[%s12 + $0xc0] sm:$0xff]
    %v2387 = vld [vmem:[%s12 + $0xc8] sm:$0xff]
    %v2388 = vld [vmem:[%s12 + $0xd0] sm:$0xff]
    %v2389 = vld [vmem:[%s12 + $0xd8] sm:$0xff]
    %v2390 = vld [vmem:[%s12 + $0xe0] sm:$0xff]
    %v2391 = vld [vmem:[%s12 + $0xe8] sm:$0xff]
    %v2392 = vld [vmem:[%s12 + $0xf0] sm:$0xff]
    %v2393 = vld [vmem:[%s12 + $0xf8] sm:$0xff]
    %v2394 = vld [vmem:[%s13] sm:$0x1]
    %v2396 = vperm.slane %v2394, 0
    %2398 = vmatpush.msra.mxu0 %v2377
    %2399 = vmatpush.msra.mxu0 %v2376
    %2400 = vmatpush.msra.mxu0 %v2375
    %2401 = vmatpush.msra.mxu0 %v2374
    %2402 = vmatpush.msra.mxu0 %v2373
    %2403 = vmatpush.msra.mxu0 %v2372
    %2404 = vmatpush.msra.mxu0 %v2371
    %2405 = vmatpush.msra.mxu0 %v2370
    %2406 = vmatpush.msra.mxu0 %v2369
    %2407 = vmatpush.msra.mxu0 %v2368
    %2408 = vmatpush.msra.mxu0 %v2367
    %2409 = vmatpush.msra.mxu0 %v2366
    %2410 = vmatpush.msra.mxu0 %v2365
    %2411 = vmatpush.msra.mxu0 %v2364
    %2412 = vmatpush.msra.mxu0 %v2363
    %2413 = vmatpush.msra.mxu0 %v2362
    %2414 = vmatmul.f32.gmra.mxu0 %v2335
    %v2415 = vpop.f32.mrf.mxu0
    %v2416 = vadd.f32 %v2396, %v2415
    %2417 = vdwg.mxu0
    %2418 = vmatpush.msra.mxu0 %v2393
    %2419 = vmatpush.msra.mxu0 %v2392
    %2420 = vmatpush.msra.mxu0 %v2391
    %2421 = vmatpush.msra.mxu0 %v2390
    %2422 = vmatpush.msra.mxu0 %v2389
    %2423 = vmatpush.msra.mxu0 %v2388
    %2424 = vmatpush.msra.mxu0 %v2387
    %2425 = vmatpush.msra.mxu0 %v2386
    %2426 = vmatpush.msra.mxu0 %v2385
    %2427 = vmatpush.msra.mxu0 %v2384
    %2428 = vmatpush.msra.mxu0 %v2383
    %2429 = vmatpush.msra.mxu0 %v2382
    %2430 = vmatpush.msra.mxu0 %v2381
    %2431 = vmatpush.msra.mxu0 %v2380
    %2432 = vmatpush.msra.mxu0 %v2379
    %2433 = vmatpush.msra.mxu0 %v2378
    %2434 = vmatmul.f32.gmra.mxu0 %v2360
    %v2435 = vpop.f32.mrf.mxu0
    %v2436 = vadd.f32 %v2416, %v2435
    %2437 = vdwg.mxu0
    %v2438 = vmax.f32 %v2436, 0.0
    %v2439 = vld [vmem:[%s14] sm:$0xff]
    %v2440 = vld [vmem:[%s14 + $0x8] sm:$0xff]
    %v2441 = vld [vmem:[%s14 + $0x10] sm:$0xff]
    %v2442 = vld [vmem:[%s14 + $0x18] sm:$0xff]
    %v2443 = vld [vmem:[%s14 + $0x20] sm:$0xff]
    %v2444 = vld [vmem:[%s14 + $0x28] sm:$0xff]
    %v2445 = vld [vmem:[%s14 + $0x30] sm:$0xff]
    %v2446 = vld [vmem:[%s14 + $0x38] sm:$0xff]
    %v2447 = vld [vmem:[%s14 + $0x40] sm:$0xff]
    %v2448 = vld [vmem:[%s14 + $0x48] sm:$0xff]
    %v2449 = vld [vmem:[%s14 + $0x50] sm:$0xff]
    %v2450 = vld [vmem:[%s14 + $0x58] sm:$0xff]
    %v2451 = vld [vmem:[%s14 + $0x60] sm:$0xff]
    %v2452 = vld [vmem:[%s14 + $0x68] sm:$0xff]
    %v2453 = vld [vmem:[%s14 + $0x70] sm:$0xff]
    %v2454 = vld [vmem:[%s14 + $0x78] sm:$0xff]
    %v2455 = vld [vmem:[%s15] sm:$0x1]
    %v2457 = vperm.slane %v2455, 0
    %2459 = vmatpush.msra.mxu0 %v2454
    %2460 = vmatpush.msra.mxu0 %v2453
    %2461 = vmatpush.msra.mxu0 %v2452
    %2462 = vmatpush.msra.mxu0 %v2451
    %2463 = vmatpush.msra.mxu0 %v2450
    %2464 = vmatpush.msra.mxu0 %v2449
    %2465 = vmatpush.msra.mxu0 %v2448
    %2466 = vmatpush.msra.mxu0 %v2447
    %2467 = vmatpush.msra.mxu0 %v2446
    %2468 = vmatpush.msra.mxu0 %v2445
    %2469 = vmatpush.msra.mxu0 %v2444
    %2470 = vmatpush.msra.mxu0 %v2443
    %2471 = vmatpush.msra.mxu0 %v2442
    %2472 = vmatpush.msra.mxu0 %v2441
    %2473 = vmatpush.msra.mxu0 %v2440
    %2474 = vmatpush.msra.mxu0 %v2439
    %2475 = vmatmul.f32.gmra.mxu0 %v2438
    %v2476 = vpop.f32.mrf.mxu0
    %v2477 = vadd.f32 %v2457, %v2476
    %2478 = vdwg.mxu0
    %v2479 = vmax.f32 %v2477, 0.0
    %v2480 = vld [vmem:[%s16] sm:$0xff]
    %v2481 = vld [vmem:[%s16 + $0x8] sm:$0xff]
    %v2482 = vld [vmem:[%s16 + $0x10] sm:$0xff]
    %v2483 = vld [vmem:[%s16 + $0x18] sm:$0xff]
    %v2484 = vld [vmem:[%s16 + $0x20] sm:$0xff]
    %v2485 = vld [vmem:[%s16 + $0x28] sm:$0xff]
    %v2486 = vld [vmem:[%s16 + $0x30] sm:$0xff]
    %v2487 = vld [vmem:[%s16 + $0x38] sm:$0xff]
    %v2488 = vld [vmem:[%s16 + $0x40] sm:$0xff]
    %v2489 = vld [vmem:[%s16 + $0x48] sm:$0xff]
    %v2490 = vld [vmem:[%s16 + $0x50] sm:$0xff]
    %v2491 = vld [vmem:[%s16 + $0x58] sm:$0xff]
    %v2492 = vld [vmem:[%s16 + $0x60] sm:$0xff]
    %v2493 = vld [vmem:[%s16 + $0x68] sm:$0xff]
    %v2494 = vld [vmem:[%s16 + $0x70] sm:$0xff]
    %v2495 = vld [vmem:[%s16 + $0x78] sm:$0xff]
    %v2496 = vld [vmem:[%s17] sm:$0x1]
    %v2498 = vperm.slane %v2496, 0
    %2500 = vmatpush.msra.mxu0 %v2495
    %2501 = vmatpush.msra.mxu0 %v2494
    %2502 = vmatpush.msra.mxu0 %v2493
    %2503 = vmatpush.msra.mxu0 %v2492
    %2504 = vmatpush.msra.mxu0 %v2491
    %2505 = vmatpush.msra.mxu0 %v2490
    %2506 = vmatpush.msra.mxu0 %v2489
    %2507 = vmatpush.msra.mxu0 %v2488
    %2508 = vmatpush.msra.mxu0 %v2487
    %2509 = vmatpush.msra.mxu0 %v2486
    %2510 = vmatpush.msra.mxu0 %v2485
    %2511 = vmatpush.msra.mxu0 %v2484
    %2512 = vmatpush.msra.mxu0 %v2483
    %2513 = vmatpush.msra.mxu0 %v2482
    %2514 = vmatpush.msra.mxu0 %v2481
    %2515 = vmatpush.msra.mxu0 %v2480
    %2516 = vmatmul.f32.gmra.mxu0 %v2479
    %v2517 = vpop.f32.mrf.mxu0
    %v2518 = vadd.f32 %v2498, %v2517
    %2519 = vdwg.mxu0
    %2520 = vst [vmem:[%s22] sm:$0xf] %v2518
    %v2522 = vrot.slane %v2479, 2
    %v2524 = vld [vmem:[%s18] sm:$0xff]
    %v2525 = vld [vmem:[%s18 + $0x8] sm:$0xff]
    %v2526 = vld [vmem:[%s18 + $0x10] sm:$0xff]
    %v2527 = vld [vmem:[%s18 + $0x18] sm:$0xff]
    %v2528 = vld [vmem:[%s18 + $0x20] sm:$0xff]
    %v2529 = vld [vmem:[%s18 + $0x28] sm:$0xff]
    %v2530 = vld [vmem:[%s18 + $0x30] sm:$0xff]
    %v2531 = vld [vmem:[%s18 + $0x38] sm:$0xff]
    %v2532 = vld [vmem:[%s18 + $0x40] sm:$0xff]
    %v2533 = vld [vmem:[%s18 + $0x48] sm:$0xff]
    %v2534 = vld [vmem:[%s18 + $0x50] sm:$0xff]
    %v2535 = vld [vmem:[%s18 + $0x58] sm:$0xff]
    %v2536 = vld [vmem:[%s18 + $0x60] sm:$0xff]
    %v2537 = vld [vmem:[%s18 + $0x68] sm:$0xff]
    %v2538 = vld [vmem:[%s18 + $0x70] sm:$0xff]
    %v2539 = vld [vmem:[%s18 + $0x78] sm:$0xff]
    %v2540 = vld [vmem:[%s18 + $0x80] sm:$0xff]
    %v2541 = vld [vmem:[%s18 + $0x88] sm:$0xff]
    %v2542 = vld [vmem:[%s18 + $0x90] sm:$0xff]
    %v2543 = vld [vmem:[%s18 + $0x98] sm:$0xff]
    %v2544 = vld [vmem:[%s18 + $0xa0] sm:$0xff]
    %v2545 = vld [vmem:[%s18 + $0xa8] sm:$0xff]
    %v2546 = vld [vmem:[%s18 + $0xb0] sm:$0xff]
    %v2547 = vld [vmem:[%s18 + $0xb8] sm:$0xff]
    %v2548 = vld [vmem:[%s18 + $0xc0] sm:$0xff]
    %v2549 = vld [vmem:[%s18 + $0xc8] sm:$0xff]
    %v2550 = vld [vmem:[%s18 + $0xd0] sm:$0xff]
    %v2551 = vld [vmem:[%s18 + $0xd8] sm:$0xff]
    %v2552 = vld [vmem:[%s18 + $0xe0] sm:$0xff]
    %v2553 = vld [vmem:[%s18 + $0xe8] sm:$0xff]
    %v2554 = vld [vmem:[%s18 + $0xf0] sm:$0xff]
    %v2555 = vld [vmem:[%s18 + $0xf8] sm:$0xff]
    %v2556 = vld [vmem:[%s19] sm:$0x1]
    %v2558 = vperm.slane %v2556, 0
    %2560 = vmatpush.msra.mxu0 %v2539
    %2561 = vmatpush.msra.mxu0 %v2538
    %2562 = vmatpush.msra.mxu0 %v2537
    %2563 = vmatpush.msra.mxu0 %v2536
    %2564 = vmatpush.msra.mxu0 %v2535
    %2565 = vmatpush.msra.mxu0 %v2534
    %2566 = vmatpush.msra.mxu0 %v2533
    %2567 = vmatpush.msra.mxu0 %v2532
    %2568 = vmatpush.msra.mxu0 %v2531
    %2569 = vmatpush.msra.mxu0 %v2530
    %2570 = vmatpush.msra.mxu0 %v2529
    %2571 = vmatpush.msra.mxu0 %v2528
    %2572 = vmatpush.msra.mxu0 %v2527
    %2573 = vmatpush.msra.mxu0 %v2526
    %2574 = vmatpush.msra.mxu0 %v2525
    %2575 = vmatpush.msra.mxu0 %v2524
    %2576 = vmatmul.f32.gmra.mxu0 %v2479
    %v2577 = vpop.f32.mrf.mxu0
    %v2578 = vadd.f32 %v2558, %v2577
    %2579 = vdwg.mxu0
    %2580 = vmatpush.msra.mxu0 %v2555
    %2581 = vmatpush.msra.mxu0 %v2554
    %2582 = vmatpush.msra.mxu0 %v2553
    %2583 = vmatpush.msra.mxu0 %v2552
    %2584 = vmatpush.msra.mxu0 %v2551
    %2585 = vmatpush.msra.mxu0 %v2550
    %2586 = vmatpush.msra.mxu0 %v2549
    %2587 = vmatpush.msra.mxu0 %v2548
    %2588 = vmatpush.msra.mxu0 %v2547
    %2589 = vmatpush.msra.mxu0 %v2546
    %2590 = vmatpush.msra.mxu0 %v2545
    %2591 = vmatpush.msra.mxu0 %v2544
    %2592 = vmatpush.msra.mxu0 %v2543
    %2593 = vmatpush.msra.mxu0 %v2542
    %2594 = vmatpush.msra.mxu0 %v2541
    %2595 = vmatpush.msra.mxu0 %v2540
    %2596 = vmatmul.f32.gmra.mxu0 %v2522
    %v2597 = vpop.f32.mrf.mxu0
    %v2598 = vadd.f32 %v2578, %v2597
    %2599 = vdwg.mxu0
    %v2600 = vmax.f32 %v2598, 0.0
    %v2601 = vld [vmem:[%s20] sm:$0xff]
    %v2602 = vld [vmem:[%s20 + $0x8] sm:$0xff]
    %v2603 = vld [vmem:[%s20 + $0x10] sm:$0xff]
    %v2604 = vld [vmem:[%s20 + $0x18] sm:$0xff]
    %v2605 = vld [vmem:[%s20 + $0x20] sm:$0xff]
    %v2606 = vld [vmem:[%s20 + $0x28] sm:$0xff]
    %v2607 = vld [vmem:[%s20 + $0x30] sm:$0xff]
    %v2608 = vld [vmem:[%s20 + $0x38] sm:$0xff]
    %v2609 = vld [vmem:[%s20 + $0x40] sm:$0xff]
    %v2610 = vld [vmem:[%s20 + $0x48] sm:$0xff]
    %v2611 = vld [vmem:[%s20 + $0x50] sm:$0xff]
    %v2612 = vld [vmem:[%s20 + $0x58] sm:$0xff]
    %v2613 = vld [vmem:[%s20 + $0x60] sm:$0xff]
    %v2614 = vld [vmem:[%s20 + $0x68] sm:$0xff]
    %v2615 = vld [vmem:[%s20 + $0x70] sm:$0xff]
    %v2616 = vld [vmem:[%s20 + $0x78] sm:$0xff]
    %v2617 = vld [vmem:[%s21] sm:$0x1]
    %v2619 = vperm.slane %v2617, 0
    %2621 = vmatpush.msra.mxu0 %v2616
    %2622 = vmatpush.msra.mxu0 %v2615
    %2623 = vmatpush.msra.mxu0 %v2614
    %2624 = vmatpush.msra.mxu0 %v2613
    %2625 = vmatpush.msra.mxu0 %v2612
    %2626 = vmatpush.msra.mxu0 %v2611
    %2627 = vmatpush.msra.mxu0 %v2610
    %2628 = vmatpush.msra.mxu0 %v2609
    %2629 = vmatpush.msra.mxu0 %v2608
    %2630 = vmatpush.msra.mxu0 %v2607
    %2631 = vmatpush.msra.mxu0 %v2606
    %2632 = vmatpush.msra.mxu0 %v2605
    %2633 = vmatpush.msra.mxu0 %v2604
    %2634 = vmatpush.msra.mxu0 %v2603
    %2635 = vmatpush.msra.mxu0 %v2602
    %2636 = vmatpush.msra.mxu0 %v2601
    %2637 = vmatmul.f32.gmra.mxu0 %v2600
    %v2638 = vpop.f32.mrf.mxu0
    %v2639 = vadd.f32 %v2619, %v2638
    %2640 = vdwg.mxu0
    %2641 = vst [vmem:[#allocation2] sm:$0x3] %v2639
    // Predicated region
    $region90: #{cnn_aux_forward.1} parent=1 // pred_check
      _
    $region91: #{cnn_aux_forward.1} parent=1 // pred_check_branch
      %2643 = sbr.rel (0) target = $region93
    $region92: #{cnn_aux_forward.1} parent=1 // pred_region
      _
    $region93: #{cnn_aux_forward.1} parent=1 // pred_fallthru
      _
    // Predicated region
    $region94: #{cnn_aux_forward.1} parent=1 // pred_check
      _
    $region95: #{cnn_aux_forward.1} parent=1 // pred_check_branch
      %2645 = sbr.rel (0) target = $region97
    $region96: #{cnn_aux_forward.1} parent=1 // pred_region
      %2647 = vsyncadd [#allocation3], 0
      %s2649 = sshll.u32 [#allocation2], 4
      %s2650 = int_to_ptr.vmem [resolvable:$true] %s2649
      %s2651 = sshll.u32 %s23, 4
      %s2652 = int_to_ptr.hbm [resolvable:$true] %s2651
      %2654 = dma.vmem_to_hbm [thread:$0]  %s2650, 32, %s2652, [#allocation3]
    $region97: #{cnn_aux_forward.1} parent=1 // pred_fallthru
      _
    // Predicated region
    $region98: #{cnn_aux_forward.1} parent=1 // pred_check
      _
    $region99: #{cnn_aux_forward.1} parent=1 // pred_check_branch
      %2656 = sbr.rel (0) target = $region101
    $region100: #{cnn_aux_forward.1} parent=1 // pred_region
      _
    $region101: #{cnn_aux_forward.1} parent=1 // pred_fallthru
      _
    // Predicated region
    $region102: #{cnn_aux_forward.1} parent=1 // pred_check
      _
    $region103: #{cnn_aux_forward.1} parent=1 // pred_check_branch
      %2658 = sbr.rel (0) target = $region105
    $region104: #{cnn_aux_forward.1} parent=1 // pred_region
      %2660 = dma.done [#allocation3], 32
    $region105: #{cnn_aux_forward.1} parent=1 // pred_fallthru
      _
    %2661 = vsyncpa [#allocation3], 1

</llo_original>
